<compile_context>
chip_gen: v7x
topology: tpu7x:2x2x1
jax: 0.10.0
libtpu: 0.0.40
codegen_flags: <defaults>
</compile_context>

<pallas_src>
import math

import jax
import jax.numpy as jnp
from jax.experimental import pallas as pl
from jax.experimental.pallas import tpu as pltpu

# ----- problem sizes (small, consistent with the module's forward) -----
B, T, S = 2, 8, 8          # batch, target seq, source (memory) seq
D, H, DF = 32, 4, 64       # d_model, heads, ffn hidden
DK = D // H                # 8   logical per-head dim
LP = 128                   # lane-padded feature width (one vreg lane row)
DKP = LP // H              # 32  per-head dim zero-padded so heads tile 128 lanes
HDKP = H * DKP             # 128 head-concat width (== LP)
NL = 2                     # number of decoder layers (N)
EPS = 1e-6                 # LayerNorm eps (matches the PyTorch module)


# ----- static layouts of the two packed parameter slabs -----
def _w_layout():
    """Row offsets of each [128, 128] weight block inside the bf16 weight slab."""
    off, r = {}, 0
    for l in range(NL):
        for s in range(2):                       # 0: self-attn, 1: cross-attn
            for name in ("wq", "wk", "wv", "wo"):
                off[(name, l, s)] = r
                r += LP
        for name in ("w1", "w2"):
            off[(name, l)] = r
            r += LP
    return off, r


W_OFF, W_ROWS = _w_layout()                      # W_ROWS == 2560


def _vec_layout():
    """Row offsets of every small vector (bias / norm param) in the f32 table."""
    off, r = {}, 0

    def add(name, n):
        nonlocal r
        off[name] = r
        r += n

    add("bq", NL * 2); add("bk", NL * 2); add("bv", NL * 2); add("bo", NL * 2)
    add("b1", NL); add("b2", NL)
    add("na", NL * 3); add("nb", NL * 3)
    add("fa", 1); add("fb", 1)
    return off, ((r + 7) // 8) * 8               # pad rows to a multiple of 8


VEC_OFF, VEC_ROWS = _vec_layout()


# ---------------------------------------------------------------------------
# head split / merge: 32-aligned lane slices + leading-axis stack (head-major)
# ---------------------------------------------------------------------------
def _split_heads(a):       # [rows, H*DKP] -> [H, rows, DKP]
    return jnp.stack([a[:, h * DKP:(h + 1) * DKP] for h in range(H)], axis=0)


def _merge_heads(a):       # [H, rows, DKP] -> [rows, H*DKP]
    return jnp.concatenate([a[h] for h in range(H)], axis=-1)


# ---------------------------------------------------------------------------
# Pallas kernel: one grid point per batch element; weights stay VMEM-resident.
# ---------------------------------------------------------------------------
def _decoder_kernel(act_ref, w_ref, vec_ref, out_ref):
    f32, bf16 = jnp.float32, jnp.bfloat16

    def vrow(name, idx=0):
        return vec_ref[VEC_OFF[name] + idx, :]            # [LP] f32 (zero padded)

    def wblk(name, l, s=None):
        r = W_OFF[(name, l) if s is None else (name, l, s)]
        return w_ref[r:r + LP, :]                         # [LP, LP] bf16

    blk = act_ref[0]                                      # [T+S, LP] f32
    x = blk[:T]                                           # residual stream (f32)
    mem_bf = blk[T:].astype(bf16)                         # cross-attn K/V source

    lane = jax.lax.broadcasted_iota(jnp.int32, (1, LP), 1)
    feat = lane < D                                       # real-feature lane mask
    rows_i = jax.lax.broadcasted_iota(jnp.int32, (T, T), 0)
    cols_i = jax.lax.broadcasted_iota(jnp.int32, (T, T), 1)
    causal_keep = (rows_i >= cols_i)[None]                # [1, T, T]

    def layernorm(v, a, b):
        # Matches torch LayerNorm above: mean over D, *unbiased* std,
        # normalize by (std + eps) (NOT sqrt(var + eps)). Pad lanes of v are 0,
        # and a/b are 0 on pad lanes, so padded features stay exactly 0.
        mean = jnp.sum(v, axis=-1, keepdims=True) * (1.0 / D)
        diff = jnp.where(feat, v - mean, 0.0)
        var = jnp.sum(diff * diff, axis=-1, keepdims=True) * (1.0 / (D - 1))
        return a * diff / (jnp.sqrt(var) + EPS) + b

    def attend(q_in, kv_in, l, s, keep):
        # Three [LP,LP] bf16 matmuls (1/sqrt(dk) folded into the Q block), then
        # head-batched score / context einsums (no per-head matmul loop), then
        # one 128-lane-dense output projection.
        q = jnp.dot(q_in, wblk("wq", l, s), preferred_element_type=f32) + vrow("bq", l * 2 + s)
        k = jnp.dot(kv_in, wblk("wk", l, s), preferred_element_type=f32) + vrow("bk", l * 2 + s)
        v = jnp.dot(kv_in, wblk("wv", l, s), preferred_element_type=f32) + vrow("bv", l * 2 + s)
        qh = _split_heads(q.astype(bf16))                 # [H, T,    DKP]
        kh = _split_heads(k.astype(bf16))                 # [H, n_kv, DKP]
        vh = _split_heads(v.astype(bf16))                 # [H, n_kv, DKP]
        sc = jnp.einsum("hqd,hkd->hqk", qh, kh, preferred_element_type=f32)
        if keep is not None:
            sc = jnp.where(keep, sc, -1e9)
        sc = sc - jnp.max(sc, axis=-1, keepdims=True)
        p = jnp.exp(sc)
        p = p * pl.reciprocal(jnp.sum(p, axis=-1, keepdims=True), approx=True)
        ctx = jnp.einsum("hqk,hkd->hqd", p.astype(bf16), vh, preferred_element_type=f32)
        ctx2 = _merge_heads(ctx).astype(bf16)             # [T, HDKP=128]
        return jnp.dot(ctx2, wblk("wo", l, s), preferred_element_type=f32) + vrow("bo", l * 2 + s)

    for l in range(NL):
        # sublayer 0: masked self-attention (pre-norm residual)
        xn = layernorm(x, vrow("na", l * 3 + 0), vrow("nb", l * 3 + 0)).astype(bf16)
        x = x + attend(xn, xn, l, 0, causal_keep)
        # sublayer 1: source (cross) attention (src_mask is all-ones)
        xn = layernorm(x, vrow("na", l * 3 + 1), vrow("nb", l * 3 + 1)).astype(bf16)
        x = x + attend(xn, mem_bf, l, 1, None)
        # sublayer 2: position-wise FFN
        xn = layernorm(x, vrow("na", l * 3 + 2), vrow("nb", l * 3 + 2)).astype(bf16)
        hid = jnp.maximum(
            jnp.dot(xn, wblk("w1", l), preferred_element_type=f32) + vrow("b1", l), 0.0)
        x = x + jnp.dot(hid.astype(bf16), wblk("w2", l),
                        preferred_element_type=f32) + vrow("b2", l)

    # final LayerNorm of the Decoder module (lane-dense [T, 128] store)
    out_ref[0] = layernorm(x, vrow("fa"), vrow("fb"))


# ---------------------------------------------------------------------------
# Wrapper: pack params into two lane-dense slabs, pad/concat activations.
# ---------------------------------------------------------------------------
def pack_params(params):
    (wqkv, bqkv, wout, bout, w1, b1, w2, b2, na, nb, fa, fb) = params
    scale = 1.0 / math.sqrt(DK)
    f32 = jnp.float32

    def head_pad_mat(w_hddk):          # [H, D, DK] -> [D, H*DKP] head-padded cols
        w = jnp.transpose(w_hddk, (1, 0, 2))
        w = jnp.pad(w, ((0, 0), (0, 0), (0, DKP - DK)))
        return w.reshape(D, HDKP)

    def head_pad_vec(b_hdk):           # [H, DK] -> [H*DKP]
        return jnp.pad(b_hdk, ((0, 0), (0, DKP - DK))).reshape(HDKP)

    # bf16 weight slab: every block is a full [128, 128] tile (zero padded).
    wslab = jnp.zeros((W_ROWS, LP), f32)
    for l in range(NL):
        for s in range(2):
            for c, name in enumerate(("wq", "wk", "wv")):
                blkw = head_pad_mat(wqkv[l, s, c])
                if c == 0:                       # fold 1/sqrt(dk) into Q block
                    blkw = blkw * scale
                r = W_OFF[(name, l, s)]
                wslab = wslab.at[r:r + D, :].set(blkw)
            wo = jnp.pad(wout[l, s], ((0, 0), (0, DKP - DK), (0, 0))).reshape(HDKP, D)
            r = W_OFF[("wo", l, s)]
            wslab = wslab.at[r:r + HDKP, :D].set(wo)
        wslab = wslab.at[W_OFF[("w1", l)]:W_OFF[("w1", l)] + D, :DF].set(w1[l])
        wslab = wslab.at[W_OFF[("w2", l)]:W_OFF[("w2", l)] + DF, :D].set(w2[l])
    wslab = wslab.astype(jnp.bfloat16)

    # f32 bias / norm table (one 128-lane row per vector, zero padded).
    vecs = jnp.zeros((VEC_ROWS, LP), f32)
    for l in range(NL):
        for s in range(2):
            i = l * 2 + s
            vecs = vecs.at[VEC_OFF["bq"] + i, :].set(head_pad_vec(bqkv[l, s, 0]) * scale)
            vecs = vecs.at[VEC_OFF["bk"] + i, :].set(head_pad_vec(bqkv[l, s, 1]))
            vecs = vecs.at[VEC_OFF["bv"] + i, :].set(head_pad_vec(bqkv[l, s, 2]))
            vecs = vecs.at[VEC_OFF["bo"] + i, :D].set(bout[l, s])
        vecs = vecs.at[VEC_OFF["b1"] + l, :DF].set(b1[l])
        vecs = vecs.at[VEC_OFF["b2"] + l, :D].set(b2[l])
        for j in range(3):
            vecs = vecs.at[VEC_OFF["na"] + l * 3 + j, :D].set(na[l, j])
            vecs = vecs.at[VEC_OFF["nb"] + l * 3 + j, :D].set(nb[l, j])
    vecs = vecs.at[VEC_OFF["fa"], :D].set(fa)
    vecs = vecs.at[VEC_OFF["fb"], :D].set(fb)
    return wslab, vecs


@jax.jit
def decoder_pallas(x, memory, packed):
    wslab, vecs = packed
    xp = jnp.pad(x, ((0, 0), (0, 0), (0, LP - D)))        # [B, T, LP]
    mp = jnp.pad(memory, ((0, 0), (0, 0), (0, LP - D)))   # [B, S, LP]
    act = jnp.concatenate([xp, mp], axis=1)               # [B, T+S, LP]  (1 DMA)
    out = pl.pallas_call(
        _decoder_kernel,
        out_shape=jax.ShapeDtypeStruct((B, T, LP), jnp.float32),
        grid=(B,),
        in_specs=[
            pl.BlockSpec((1, T + S, LP), lambda b: (b, 0, 0)),   # activations
            pl.BlockSpec((W_ROWS, LP), lambda b: (0, 0)),        # bf16 weight slab
            pl.BlockSpec((VEC_ROWS, LP), lambda b: (0, 0)),      # f32 bias/norm table
        ],
        out_specs=pl.BlockSpec((1, T, LP), lambda b: (b, 0, 0)),
        compiler_params=pltpu.CompilerParams(
            dimension_semantics=("parallel",)),                  # v7x: 2 TCs split batches
    )(act, wslab, vecs)
    return out[:, :, :D]


# ---------------------------------------------------------------------------
# Independent pure-JAX reference (mirrors the PyTorch Decoder math directly:
# explicit 0/1 masks, per-head unfused f32 projections, exact softmax division).
# ---------------------------------------------------------------------------
def decoder_reference(x, memory, src_mask, tgt_mask, params):
    (wqkv, bqkv, wout, bout, w1, b1, w2, b2, na, nb, fa, fb) = params

    def layernorm(v, a, b):
        mean = jnp.mean(v, axis=-1, keepdims=True)
        std = jnp.sqrt(jnp.sum((v - mean) ** 2, axis=-1, keepdims=True) / (D - 1))
        return a * (v - mean) / (std + EPS) + b

    def mha(q_in, kv_in, mask, wq, bq, wo, bo):
        out = jnp.zeros(q_in.shape[:2] + (D,), jnp.float32)
        for h in range(H):
            q = q_in @ wq[0, h] + bq[0, h]
            k = kv_in @ wq[1, h] + bq[1, h]
            v = kv_in @ wq[2, h] + bq[2, h]
            s = jnp.einsum('bqd,bkd->bqk', q, k) / math.sqrt(DK)
            s = jnp.where(mask == 0.0, -1e9, s)
            p = jax.nn.softmax(s, axis=-1)
            o = jnp.einsum('bqk,bkd->bqd', p, v)
            out = out + jnp.einsum('btd,de->bte', o, wo[h])
        return out + bo

    for i in range(NL):
        xn = layernorm(x, na[i, 0], nb[i, 0])
        x = x + mha(xn, xn, tgt_mask, wqkv[i, 0], bqkv[i, 0], wout[i, 0], bout[i, 0])
        xn = layernorm(x, na[i, 1], nb[i, 1])
        x = x + mha(xn, memory, src_mask, wqkv[i, 1], bqkv[i, 1], wout[i, 1], bout[i, 1])
        xn = layernorm(x, na[i, 2], nb[i, 2])
        hid = jnp.maximum(jnp.einsum('btd,de->bte', xn, w1[i]) + b1[i], 0.0)
        x = x + jnp.einsum('btd,de->bte', hid, w2[i]) + b2[i]
    return layernorm(x, fa, fb)


# ---------------------------------------------------------------------------
# Deterministic parameter / input construction and a single run.
# ---------------------------------------------------------------------------
def make_params(key):
    ks = jax.random.split(key, 8)
    f32 = jnp.float32
    wqkv = jax.random.normal(ks[0], (NL, 2, 3, H, D, DK), f32) * 0.1
    bqkv = jax.random.normal(ks[1], (NL, 2, 3, H, DK), f32) * 0.01
    wout = jax.random.normal(ks[2], (NL, 2, H, DK, D), f32) * 0.1
    bout = jax.random.normal(ks[3], (NL, 2, D), f32) * 0.01
    w1 = jax.random.normal(ks[4], (NL, D, DF), f32) * 0.1
    b1 = jax.random.normal(ks[5], (NL, DF), f32) * 0.01
    w2 = jax.random.normal(ks[6], (NL, DF, D), f32) * 0.1
    b2 = jax.random.normal(ks[7], (NL, D), f32) * 0.01
    na = jnp.ones((NL, 3, D), f32)   # sublayer LayerNorm a_2
    nb = jnp.zeros((NL, 3, D), f32)  # sublayer LayerNorm b_2
    fa = jnp.ones((D,), f32)         # final LayerNorm a_2
    fb = jnp.zeros((D,), f32)        # final LayerNorm b_2
    return (wqkv, bqkv, wout, bout, w1, b1, w2, b2, na, nb, fa, fb)


if __name__ == "__main__":
    key = jax.random.PRNGKey(0)
    kx, km, kp = jax.random.split(key, 3)

    x = jax.random.normal(kx, (B, T, D), jnp.float32)
    memory = jax.random.normal(km, (B, S, D), jnp.float32)
    params = make_params(kp)

    packed = pack_params(params)
    out = jax.block_until_ready(decoder_pallas(x, memory, packed))

    # Reference uses explicit masks (causal target, all-ones source), so the
    # in-kernel mask generation is validated against the module's semantics.
    src_mask = jnp.ones((B, T, S), jnp.float32)
    tgt_mask = jnp.broadcast_to(jnp.tril(jnp.ones((T, T), jnp.float32)),
                                (B, T, T))
    ref = jax.block_until_ready(
        decoder_reference(x, memory, src_mask, tgt_mask, params))

    assert out.shape == (B, T, D) and out.dtype == jnp.float32
    err = float(jnp.max(jnp.abs(out - ref)))
    # bf16 MXU operands (per perf review) vs the pure-f32 reference: ~0.4%
    # relative error per matmul accumulated over 7 matmuls/layer x 2 layers,
    # plus the approx-reciprocal softmax denominator -> observed max-abs error
    # is O(1e-2). A 1e-1 budget still catches any structural error (mask,
    # layout, weight packing), which would be O(1).
    assert err < 1e-1, f"Pallas output mismatch vs reference: {err}"
    print("KERNEL_OK")
</pallas_src>

<mosaic_0001>
module attributes {stable_mosaic.version = 11 : i64} {
  func.func @_decoder_kernel(%arg0: i32, %arg1: memref<1x16x128xf32, #tpu.memory_space<vmem>>, %arg2: memref<2560x128xbf16, #tpu.memory_space<vmem>>, %arg3: memref<40x128xf32, #tpu.memory_space<vmem>>, %arg4: memref<1x8x128xf32, #tpu.memory_space<vmem>>) attributes {dimension_semantics = [#tpu.dimension_semantics<parallel>], iteration_bounds = array<i64: 2>, scalar_prefetch = 0 : i64, scratch_operands = 0 : i64, tpu.core_type = #tpu.core_type<tc>, window_params = [{transform_indices = @transform_0, window_bounds = array<i64: 1, 16, 128>}, {pipeline_mode = #tpu.pipeline_mode<synchronous>, transform_indices = @transform_1, window_bounds = array<i64: 2560, 128>}, {pipeline_mode = #tpu.pipeline_mode<synchronous>, transform_indices = @transform_2, window_bounds = array<i64: 40, 128>}, {transform_indices = @transform_3, window_bounds = array<i64: 1, 8, 128>}]} {
    %c0 = arith.constant 0 : index
    %c0_0 = arith.constant 0 : index
    %c0_1 = arith.constant 0 : index
    %0 = vector.load %arg1[%c0, %c0_0, %c0_1] : memref<1x16x128xf32, #tpu.memory_space<vmem>>, vector<1x16x128xf32>
    %1 = vector.shape_cast %0 : vector<1x16x128xf32> to vector<16x128xf32>
    %2 = vector.extract_strided_slice %1 {offsets = [0, 0], sizes = [8, 128], strides = [1, 1]} : vector<16x128xf32> to vector<8x128xf32>
    %3 = vector.extract_strided_slice %1 {offsets = [8, 0], sizes = [8, 128], strides = [1, 1]} : vector<16x128xf32> to vector<8x128xf32>
    %4 = arith.truncf %3 : vector<8x128xf32> to vector<8x128xbf16>
    %5 = tpu.iota {dimensions = array<i32: 1>} : vector<1x128xi32>
    %c32_i32 = arith.constant 32 : i32
    %6 = vector.broadcast %c32_i32 : i32 to vector<1x128xi32>
    %7 = arith.cmpi slt, %5, %6 : vector<1x128xi32>
    %8 = tpu.iota {dimensions = array<i32: 0>} : vector<8x8xi32>
    %9 = tpu.iota {dimensions = array<i32: 1>} : vector<8x8xi32>
    %10 = arith.cmpi sge, %8, %9 : vector<8x8xi32>
    %11 = vector.shape_cast %10 : vector<8x8xi1> to vector<1x8x8xi1>
    %c20 = arith.constant 20 : index
    %c0_2 = arith.constant 0 : index
    %12 = vector.load %arg3[%c20, %c0_2] : memref<40x128xf32, #tpu.memory_space<vmem>>, vector<1x128xf32>
    %13 = vector.shape_cast %12 : vector<1x128xf32> to vector<128xf32>
    %c26 = arith.constant 26 : index
    %c0_3 = arith.constant 0 : index
    %14 = vector.load %arg3[%c26, %c0_3] : memref<40x128xf32, #tpu.memory_space<vmem>>, vector<1x128xf32>
    %15 = vector.shape_cast %14 : vector<1x128xf32> to vector<128xf32>
    %cst = arith.constant dense<0.000000e+00> : vector<8xf32>
    %16 = vector.multi_reduction <add>, %2, %cst [1] : vector<8x128xf32> to vector<8xf32>
    %17 = vector.shape_cast %16 : vector<8xf32> to vector<8x1xf32>
    %cst_4 = arith.constant 3.125000e-02 : f32
    %18 = vector.broadcast %cst_4 : f32 to vector<8x1xf32>
    %19 = arith.mulf %17, %18 : vector<8x1xf32>
    %20 = vector.broadcast %19 : vector<8x1xf32> to vector<8x128xf32>
    %21 = arith.subf %2, %20 : vector<8x128xf32>
    %cst_5 = arith.constant 0.000000e+00 : f32
    %22 = vector.shape_cast %7 : vector<1x128xi1> to vector<1x128xi1>
    %23 = vector.broadcast %22 : vector<1x128xi1> to vector<8x128xi1>
    %24 = vector.broadcast %cst_5 : f32 to vector<8x128xf32>
    %25 = arith.select %23, %21, %24 : vector<8x128xi1>, vector<8x128xf32>
    %26 = arith.mulf %25, %25 : vector<8x128xf32>
    %cst_6 = arith.constant dense<0.000000e+00> : vector<8xf32>
    %27 = vector.multi_reduction <add>, %26, %cst_6 [1] : vector<8x128xf32> to vector<8xf32>
    %28 = vector.shape_cast %27 : vector<8xf32> to vector<8x1xf32>
    %cst_7 = arith.constant 0.0322580636 : f32
    %29 = vector.broadcast %cst_7 : f32 to vector<8x1xf32>
    %30 = arith.mulf %28, %29 : vector<8x1xf32>
    %31 = vector.shape_cast %13 : vector<128xf32> to vector<1x128xf32>
    %32 = vector.broadcast %31 : vector<1x128xf32> to vector<8x128xf32>
    %33 = arith.mulf %32, %25 : vector<8x128xf32>
    %34 = math.sqrt %30 : vector<8x1xf32>
    %cst_8 = arith.constant 9.99999997E-7 : f32
    %35 = vector.broadcast %cst_8 : f32 to vector<8x1xf32>
    %36 = arith.addf %34, %35 : vector<8x1xf32>
    %37 = vector.broadcast %36 : vector<8x1xf32> to vector<8x128xf32>
    %38 = arith.divf %33, %37 : vector<8x128xf32>
    %39 = vector.shape_cast %15 : vector<128xf32> to vector<1x128xf32>
    %40 = vector.broadcast %39 : vector<1x128xf32> to vector<8x128xf32>
    %41 = arith.addf %38, %40 : vector<8x128xf32>
    %42 = arith.truncf %41 : vector<8x128xf32> to vector<8x128xbf16>
    %c0_9 = arith.constant 0 : index
    %c0_10 = arith.constant 0 : index
    %43 = vector.load %arg2[%c0_9, %c0_10] : memref<2560x128xbf16, #tpu.memory_space<vmem>>, vector<128x128xbf16>
    %cst_11 = arith.constant dense<0.000000e+00> : vector<8x128xf32>
    %44 = tpu.matmul %42, %43, %cst_11 {dimension_numbers = #tpu.dot_dimension_numbers<[1], [0], [0], [1], [0, 0, 1, 1], [], []>} : vector<8x128xbf16>, vector<128x128xbf16>, vector<8x128xf32> -> vector<8x128xf32>
    %c0_12 = arith.constant 0 : index
    %c0_13 = arith.constant 0 : index
    %45 = vector.load %arg3[%c0_12, %c0_13] : memref<40x128xf32, #tpu.memory_space<vmem>>, vector<1x128xf32>
    %46 = vector.shape_cast %45 : vector<1x128xf32> to vector<128xf32>
    %47 = vector.shape_cast %46 : vector<128xf32> to vector<1x128xf32>
    %48 = vector.broadcast %47 : vector<1x128xf32> to vector<8x128xf32>
    %49 = arith.addf %44, %48 : vector<8x128xf32>
    %c128 = arith.constant 128 : index
    %c0_14 = arith.constant 0 : index
    %50 = vector.load %arg2[%c128, %c0_14] : memref<2560x128xbf16, #tpu.memory_space<vmem>>, vector<128x128xbf16>
    %cst_15 = arith.constant dense<0.000000e+00> : vector<8x128xf32>
    %51 = tpu.matmul %42, %50, %cst_15 {dimension_numbers = #tpu.dot_dimension_numbers<[1], [0], [0], [1], [0, 0, 1, 1], [], []>} : vector<8x128xbf16>, vector<128x128xbf16>, vector<8x128xf32> -> vector<8x128xf32>
    %c4 = arith.constant 4 : index
    %c0_16 = arith.constant 0 : index
    %52 = vector.load %arg3[%c4, %c0_16] : memref<40x128xf32, #tpu.memory_space<vmem>>, vector<1x128xf32>
    %53 = vector.shape_cast %52 : vector<1x128xf32> to vector<128xf32>
    %54 = vector.shape_cast %53 : vector<128xf32> to vector<1x128xf32>
    %55 = vector.broadcast %54 : vector<1x128xf32> to vector<8x128xf32>
    %56 = arith.addf %51, %55 : vector<8x128xf32>
    %c256 = arith.constant 256 : index
    %c0_17 = arith.constant 0 : index
    %57 = vector.load %arg2[%c256, %c0_17] : memref<2560x128xbf16, #tpu.memory_space<vmem>>, vector<128x128xbf16>
    %cst_18 = arith.constant dense<0.000000e+00> : vector<8x128xf32>
    %58 = tpu.matmul %42, %57, %cst_18 {dimension_numbers = #tpu.dot_dimension_numbers<[1], [0], [0], [1], [0, 0, 1, 1], [], []>} : vector<8x128xbf16>, vector<128x128xbf16>, vector<8x128xf32> -> vector<8x128xf32>
    %c8 = arith.constant 8 : index
    %c0_19 = arith.constant 0 : index
    %59 = vector.load %arg3[%c8, %c0_19] : memref<40x128xf32, #tpu.memory_space<vmem>>, vector<1x128xf32>
    %60 = vector.shape_cast %59 : vector<1x128xf32> to vector<128xf32>
    %61 = vector.shape_cast %60 : vector<128xf32> to vector<1x128xf32>
    %62 = vector.broadcast %61 : vector<1x128xf32> to vector<8x128xf32>
    %63 = arith.addf %58, %62 : vector<8x128xf32>
    %64 = arith.truncf %49 : vector<8x128xf32> to vector<8x128xbf16>
    %65 = vector.extract_strided_slice %64 {offsets = [0, 0], sizes = [8, 32], strides = [1, 1]} : vector<8x128xbf16> to vector<8x32xbf16>
    %66 = vector.extract_strided_slice %64 {offsets = [0, 32], sizes = [8, 32], strides = [1, 1]} : vector<8x128xbf16> to vector<8x32xbf16>
    %67 = vector.extract_strided_slice %64 {offsets = [0, 64], sizes = [8, 32], strides = [1, 1]} : vector<8x128xbf16> to vector<8x32xbf16>
    %68 = vector.extract_strided_slice %64 {offsets = [0, 96], sizes = [8, 32], strides = [1, 1]} : vector<8x128xbf16> to vector<8x32xbf16>
    %69 = vector.shape_cast %65 : vector<8x32xbf16> to vector<1x8x32xbf16>
    %70 = vector.shape_cast %66 : vector<8x32xbf16> to vector<1x8x32xbf16>
    %71 = vector.shape_cast %67 : vector<8x32xbf16> to vector<1x8x32xbf16>
    %72 = vector.shape_cast %68 : vector<8x32xbf16> to vector<1x8x32xbf16>
    %73 = tpu.concatenate %69, %70, %71, %72 in 0 : vector<1x8x32xbf16>, vector<1x8x32xbf16>, vector<1x8x32xbf16>, vector<1x8x32xbf16> -> vector<4x8x32xbf16>
    %74 = arith.truncf %56 : vector<8x128xf32> to vector<8x128xbf16>
    %75 = vector.extract_strided_slice %74 {offsets = [0, 0], sizes = [8, 32], strides = [1, 1]} : vector<8x128xbf16> to vector<8x32xbf16>
    %76 = vector.extract_strided_slice %74 {offsets = [0, 32], sizes = [8, 32], strides = [1, 1]} : vector<8x128xbf16> to vector<8x32xbf16>
    %77 = vector.extract_strided_slice %74 {offsets = [0, 64], sizes = [8, 32], strides = [1, 1]} : vector<8x128xbf16> to vector<8x32xbf16>
    %78 = vector.extract_strided_slice %74 {offsets = [0, 96], sizes = [8, 32], strides = [1, 1]} : vector<8x128xbf16> to vector<8x32xbf16>
    %79 = vector.shape_cast %75 : vector<8x32xbf16> to vector<1x8x32xbf16>
    %80 = vector.shape_cast %76 : vector<8x32xbf16> to vector<1x8x32xbf16>
    %81 = vector.shape_cast %77 : vector<8x32xbf16> to vector<1x8x32xbf16>
    %82 = vector.shape_cast %78 : vector<8x32xbf16> to vector<1x8x32xbf16>
    %83 = tpu.concatenate %79, %80, %81, %82 in 0 : vector<1x8x32xbf16>, vector<1x8x32xbf16>, vector<1x8x32xbf16>, vector<1x8x32xbf16> -> vector<4x8x32xbf16>
    %84 = arith.truncf %63 : vector<8x128xf32> to vector<8x128xbf16>
    %85 = vector.extract_strided_slice %84 {offsets = [0, 0], sizes = [8, 32], strides = [1, 1]} : vector<8x128xbf16> to vector<8x32xbf16>
    %86 = vector.extract_strided_slice %84 {offsets = [0, 32], sizes = [8, 32], strides = [1, 1]} : vector<8x128xbf16> to vector<8x32xbf16>
    %87 = vector.extract_strided_slice %84 {offsets = [0, 64], sizes = [8, 32], strides = [1, 1]} : vector<8x128xbf16> to vector<8x32xbf16>
    %88 = vector.extract_strided_slice %84 {offsets = [0, 96], sizes = [8, 32], strides = [1, 1]} : vector<8x128xbf16> to vector<8x32xbf16>
    %89 = vector.shape_cast %85 : vector<8x32xbf16> to vector<1x8x32xbf16>
    %90 = vector.shape_cast %86 : vector<8x32xbf16> to vector<1x8x32xbf16>
    %91 = vector.shape_cast %87 : vector<8x32xbf16> to vector<1x8x32xbf16>
    %92 = vector.shape_cast %88 : vector<8x32xbf16> to vector<1x8x32xbf16>
    %93 = tpu.concatenate %89, %90, %91, %92 in 0 : vector<1x8x32xbf16>, vector<1x8x32xbf16>, vector<1x8x32xbf16>, vector<1x8x32xbf16> -> vector<4x8x32xbf16>
    "tpu.trace_start"() <{level = 10 : i32, message = "hqd,hkd->hqk"}> : () -> ()
    %cst_20 = arith.constant dense<0.000000e+00> : vector<4x8x8xf32>
    %94 = tpu.matmul %73, %83, %cst_20 {dimension_numbers = #tpu.dot_dimension_numbers<[2], [2], [1], [1], [0, 0, 0, 1, 1, 1], [0], [0]>} : vector<4x8x32xbf16>, vector<4x8x32xbf16>, vector<4x8x8xf32> -> vector<4x8x8xf32>
    %cst_21 = arith.constant -1.000000e+09 : f32
    "tpu.trace_stop"() : () -> ()
    %95 = vector.shape_cast %11 : vector<1x8x8xi1> to vector<1x8x8xi1>
    %96 = vector.broadcast %95 : vector<1x8x8xi1> to vector<4x8x8xi1>
    %97 = vector.broadcast %cst_21 : f32 to vector<4x8x8xf32>
    %98 = arith.select %96, %94, %97 : vector<4x8x8xi1>, vector<4x8x8xf32>
    %cst_22 = arith.constant dense<0xFF800000> : vector<4x8xf32>
    %99 = vector.multi_reduction <maximumf>, %98, %cst_22 [2] : vector<4x8x8xf32> to vector<4x8xf32>
    %100 = vector.shape_cast %99 : vector<4x8xf32> to vector<4x8x1xf32>
    %101 = vector.broadcast %100 : vector<4x8x1xf32> to vector<4x8x8xf32>
    %102 = arith.subf %98, %101 : vector<4x8x8xf32>
    %103 = math.exp %102 : vector<4x8x8xf32>
    %cst_23 = arith.constant dense<0.000000e+00> : vector<4x8xf32>
    %104 = vector.multi_reduction <add>, %103, %cst_23 [2] : vector<4x8x8xf32> to vector<4x8xf32>
    %105 = vector.shape_cast %104 : vector<4x8xf32> to vector<4x8x1xf32>
    %106 = tpu.reciprocal %105 {approx = true} : vector<4x8x1xf32> -> vector<4x8x1xf32>
    %107 = vector.broadcast %106 : vector<4x8x1xf32> to vector<4x8x8xf32>
    %108 = arith.mulf %103, %107 : vector<4x8x8xf32>
    %109 = arith.truncf %108 : vector<4x8x8xf32> to vector<4x8x8xbf16>
    "tpu.trace_start"() <{level = 10 : i32, message = "hqk,hkd->hqd"}> : () -> ()
    %cst_24 = arith.constant dense<0.000000e+00> : vector<4x8x32xf32>
    %110 = tpu.matmul %109, %93, %cst_24 {dimension_numbers = #tpu.dot_dimension_numbers<[2], [1], [1], [2], [0, 0, 0, 1, 1, 2], [0], [0]>} : vector<4x8x8xbf16>, vector<4x8x32xbf16>, vector<4x8x32xf32> -> vector<4x8x32xf32>
    "tpu.trace_stop"() : () -> ()
    %111 = vector.extract_strided_slice %110 {offsets = [0, 0, 0], sizes = [1, 8, 32], strides = [1, 1, 1]} : vector<4x8x32xf32> to vector<1x8x32xf32>
    %112 = vector.shape_cast %111 : vector<1x8x32xf32> to vector<8x32xf32>
    %113 = vector.extract_strided_slice %110 {offsets = [1, 0, 0], sizes = [1, 8, 32], strides = [1, 1, 1]} : vector<4x8x32xf32> to vector<1x8x32xf32>
    %114 = vector.shape_cast %113 : vector<1x8x32xf32> to vector<8x32xf32>
    %115 = vector.extract_strided_slice %110 {offsets = [2, 0, 0], sizes = [1, 8, 32], strides = [1, 1, 1]} : vector<4x8x32xf32> to vector<1x8x32xf32>
    %116 = vector.shape_cast %115 : vector<1x8x32xf32> to vector<8x32xf32>
    %117 = vector.extract_strided_slice %110 {offsets = [3, 0, 0], sizes = [1, 8, 32], strides = [1, 1, 1]} : vector<4x8x32xf32> to vector<1x8x32xf32>
    %118 = vector.shape_cast %117 : vector<1x8x32xf32> to vector<8x32xf32>
    %119 = tpu.concatenate %112, %114, %116, %118 in 1 : vector<8x32xf32>, vector<8x32xf32>, vector<8x32xf32>, vector<8x32xf32> -> vector<8x128xf32>
    %120 = arith.truncf %119 : vector<8x128xf32> to vector<8x128xbf16>
    %c384 = arith.constant 384 : index
    %c0_25 = arith.constant 0 : index
    %121 = vector.load %arg2[%c384, %c0_25] : memref<2560x128xbf16, #tpu.memory_space<vmem>>, vector<128x128xbf16>
    %cst_26 = arith.constant dense<0.000000e+00> : vector<8x128xf32>
    %122 = tpu.matmul %120, %121, %cst_26 {dimension_numbers = #tpu.dot_dimension_numbers<[1], [0], [0], [1], [0, 0, 1, 1], [], []>} : vector<8x128xbf16>, vector<128x128xbf16>, vector<8x128xf32> -> vector<8x128xf32>
    %c12 = arith.constant 12 : index
    %c0_27 = arith.constant 0 : index
    %123 = vector.load %arg3[%c12, %c0_27] : memref<40x128xf32, #tpu.memory_space<vmem>>, vector<1x128xf32>
    %124 = vector.shape_cast %123 : vector<1x128xf32> to vector<128xf32>
    %125 = vector.shape_cast %124 : vector<128xf32> to vector<1x128xf32>
    %126 = vector.broadcast %125 : vector<1x128xf32> to vector<8x128xf32>
    %127 = arith.addf %122, %126 : vector<8x128xf32>
    %128 = arith.addf %2, %127 : vector<8x128xf32>
    %c21 = arith.constant 21 : index
    %c0_28 = arith.constant 0 : index
    %129 = vector.load %arg3[%c21, %c0_28] : memref<40x128xf32, #tpu.memory_space<vmem>>, vector<1x128xf32>
    %130 = vector.shape_cast %129 : vector<1x128xf32> to vector<128xf32>
    %c27 = arith.constant 27 : index
    %c0_29 = arith.constant 0 : index
    %131 = vector.load %arg3[%c27, %c0_29] : memref<40x128xf32, #tpu.memory_space<vmem>>, vector<1x128xf32>
    %132 = vector.shape_cast %131 : vector<1x128xf32> to vector<128xf32>
    %cst_30 = arith.constant dense<0.000000e+00> : vector<8xf32>
    %133 = vector.multi_reduction <add>, %128, %cst_30 [1] : vector<8x128xf32> to vector<8xf32>
    %134 = vector.shape_cast %133 : vector<8xf32> to vector<8x1xf32>
    %cst_31 = arith.constant 3.125000e-02 : f32
    %135 = vector.broadcast %cst_31 : f32 to vector<8x1xf32>
    %136 = arith.mulf %134, %135 : vector<8x1xf32>
    %137 = vector.broadcast %136 : vector<8x1xf32> to vector<8x128xf32>
    %138 = arith.subf %128, %137 : vector<8x128xf32>
    %cst_32 = arith.constant 0.000000e+00 : f32
    %139 = vector.shape_cast %7 : vector<1x128xi1> to vector<1x128xi1>
    %140 = vector.broadcast %139 : vector<1x128xi1> to vector<8x128xi1>
    %141 = vector.broadcast %cst_32 : f32 to vector<8x128xf32>
    %142 = arith.select %140, %138, %141 : vector<8x128xi1>, vector<8x128xf32>
    %143 = arith.mulf %142, %142 : vector<8x128xf32>
    %cst_33 = arith.constant dense<0.000000e+00> : vector<8xf32>
    %144 = vector.multi_reduction <add>, %143, %cst_33 [1] : vector<8x128xf32> to vector<8xf32>
    %145 = vector.shape_cast %144 : vector<8xf32> to vector<8x1xf32>
    %cst_34 = arith.constant 0.0322580636 : f32
    %146 = vector.broadcast %cst_34 : f32 to vector<8x1xf32>
    %147 = arith.mulf %145, %146 : vector<8x1xf32>
    %148 = vector.shape_cast %130 : vector<128xf32> to vector<1x128xf32>
    %149 = vector.broadcast %148 : vector<1x128xf32> to vector<8x128xf32>
    %150 = arith.mulf %149, %142 : vector<8x128xf32>
    %151 = math.sqrt %147 : vector<8x1xf32>
    %cst_35 = arith.constant 9.99999997E-7 : f32
    %152 = vector.broadcast %cst_35 : f32 to vector<8x1xf32>
    %153 = arith.addf %151, %152 : vector<8x1xf32>
    %154 = vector.broadcast %153 : vector<8x1xf32> to vector<8x128xf32>
    %155 = arith.divf %150, %154 : vector<8x128xf32>
    %156 = vector.shape_cast %132 : vector<128xf32> to vector<1x128xf32>
    %157 = vector.broadcast %156 : vector<1x128xf32> to vector<8x128xf32>
    %158 = arith.addf %155, %157 : vector<8x128xf32>
    %159 = arith.truncf %158 : vector<8x128xf32> to vector<8x128xbf16>
    %c512 = arith.constant 512 : index
    %c0_36 = arith.constant 0 : index
    %160 = vector.load %arg2[%c512, %c0_36] : memref<2560x128xbf16, #tpu.memory_space<vmem>>, vector<128x128xbf16>
    %cst_37 = arith.constant dense<0.000000e+00> : vector<8x128xf32>
    %161 = tpu.matmul %159, %160, %cst_37 {dimension_numbers = #tpu.dot_dimension_numbers<[1], [0], [0], [1], [0, 0, 1, 1], [], []>} : vector<8x128xbf16>, vector<128x128xbf16>, vector<8x128xf32> -> vector<8x128xf32>
    %c1 = arith.constant 1 : index
    %c0_38 = arith.constant 0 : index
    %162 = vector.load %arg3[%c1, %c0_38] : memref<40x128xf32, #tpu.memory_space<vmem>>, vector<1x128xf32>
    %163 = vector.shape_cast %162 : vector<1x128xf32> to vector<128xf32>
    %164 = vector.shape_cast %163 : vector<128xf32> to vector<1x128xf32>
    %165 = vector.broadcast %164 : vector<1x128xf32> to vector<8x128xf32>
    %166 = arith.addf %161, %165 : vector<8x128xf32>
    %c640 = arith.constant 640 : index
    %c0_39 = arith.constant 0 : index
    %167 = vector.load %arg2[%c640, %c0_39] : memref<2560x128xbf16, #tpu.memory_space<vmem>>, vector<128x128xbf16>
    %cst_40 = arith.constant dense<0.000000e+00> : vector<8x128xf32>
    %168 = tpu.matmul %4, %167, %cst_40 {dimension_numbers = #tpu.dot_dimension_numbers<[1], [0], [0], [1], [0, 0, 1, 1], [], []>} : vector<8x128xbf16>, vector<128x128xbf16>, vector<8x128xf32> -> vector<8x128xf32>
    %c5 = arith.constant 5 : index
    %c0_41 = arith.constant 0 : index
    %169 = vector.load %arg3[%c5, %c0_41] : memref<40x128xf32, #tpu.memory_space<vmem>>, vector<1x128xf32>
    %170 = vector.shape_cast %169 : vector<1x128xf32> to vector<128xf32>
    %171 = vector.shape_cast %170 : vector<128xf32> to vector<1x128xf32>
    %172 = vector.broadcast %171 : vector<1x128xf32> to vector<8x128xf32>
    %173 = arith.addf %168, %172 : vector<8x128xf32>
    %c768 = arith.constant 768 : index
    %c0_42 = arith.constant 0 : index
    %174 = vector.load %arg2[%c768, %c0_42] : memref<2560x128xbf16, #tpu.memory_space<vmem>>, vector<128x128xbf16>
    %cst_43 = arith.constant dense<0.000000e+00> : vector<8x128xf32>
    %175 = tpu.matmul %4, %174, %cst_43 {dimension_numbers = #tpu.dot_dimension_numbers<[1], [0], [0], [1], [0, 0, 1, 1], [], []>} : vector<8x128xbf16>, vector<128x128xbf16>, vector<8x128xf32> -> vector<8x128xf32>
    %c9 = arith.constant 9 : index
    %c0_44 = arith.constant 0 : index
    %176 = vector.load %arg3[%c9, %c0_44] : memref<40x128xf32, #tpu.memory_space<vmem>>, vector<1x128xf32>
    %177 = vector.shape_cast %176 : vector<1x128xf32> to vector<128xf32>
    %178 = vector.shape_cast %177 : vector<128xf32> to vector<1x128xf32>
    %179 = vector.broadcast %178 : vector<1x128xf32> to vector<8x128xf32>
    %180 = arith.addf %175, %179 : vector<8x128xf32>
    %181 = arith.truncf %166 : vector<8x128xf32> to vector<8x128xbf16>
    %182 = vector.extract_strided_slice %181 {offsets = [0, 0], sizes = [8, 32], strides = [1, 1]} : vector<8x128xbf16> to vector<8x32xbf16>
    %183 = vector.extract_strided_slice %181 {offsets = [0, 32], sizes = [8, 32], strides = [1, 1]} : vector<8x128xbf16> to vector<8x32xbf16>
    %184 = vector.extract_strided_slice %181 {offsets = [0, 64], sizes = [8, 32], strides = [1, 1]} : vector<8x128xbf16> to vector<8x32xbf16>
    %185 = vector.extract_strided_slice %181 {offsets = [0, 96], sizes = [8, 32], strides = [1, 1]} : vector<8x128xbf16> to vector<8x32xbf16>
    %186 = vector.shape_cast %182 : vector<8x32xbf16> to vector<1x8x32xbf16>
    %187 = vector.shape_cast %183 : vector<8x32xbf16> to vector<1x8x32xbf16>
    %188 = vector.shape_cast %184 : vector<8x32xbf16> to vector<1x8x32xbf16>
    %189 = vector.shape_cast %185 : vector<8x32xbf16> to vector<1x8x32xbf16>
    %190 = tpu.concatenate %186, %187, %188, %189 in 0 : vector<1x8x32xbf16>, vector<1x8x32xbf16>, vector<1x8x32xbf16>, vector<1x8x32xbf16> -> vector<4x8x32xbf16>
    %191 = arith.truncf %173 : vector<8x128xf32> to vector<8x128xbf16>
    %192 = vector.extract_strided_slice %191 {offsets = [0, 0], sizes = [8, 32], strides = [1, 1]} : vector<8x128xbf16> to vector<8x32xbf16>
    %193 = vector.extract_strided_slice %191 {offsets = [0, 32], sizes = [8, 32], strides = [1, 1]} : vector<8x128xbf16> to vector<8x32xbf16>
    %194 = vector.extract_strided_slice %191 {offsets = [0, 64], sizes = [8, 32], strides = [1, 1]} : vector<8x128xbf16> to vector<8x32xbf16>
    %195 = vector.extract_strided_slice %191 {offsets = [0, 96], sizes = [8, 32], strides = [1, 1]} : vector<8x128xbf16> to vector<8x32xbf16>
    %196 = vector.shape_cast %192 : vector<8x32xbf16> to vector<1x8x32xbf16>
    %197 = vector.shape_cast %193 : vector<8x32xbf16> to vector<1x8x32xbf16>
    %198 = vector.shape_cast %194 : vector<8x32xbf16> to vector<1x8x32xbf16>
    %199 = vector.shape_cast %195 : vector<8x32xbf16> to vector<1x8x32xbf16>
    %200 = tpu.concatenate %196, %197, %198, %199 in 0 : vector<1x8x32xbf16>, vector<1x8x32xbf16>, vector<1x8x32xbf16>, vector<1x8x32xbf16> -> vector<4x8x32xbf16>
    %201 = arith.truncf %180 : vector<8x128xf32> to vector<8x128xbf16>
    %202 = vector.extract_strided_slice %201 {offsets = [0, 0], sizes = [8, 32], strides = [1, 1]} : vector<8x128xbf16> to vector<8x32xbf16>
    %203 = vector.extract_strided_slice %201 {offsets = [0, 32], sizes = [8, 32], strides = [1, 1]} : vector<8x128xbf16> to vector<8x32xbf16>
    %204 = vector.extract_strided_slice %201 {offsets = [0, 64], sizes = [8, 32], strides = [1, 1]} : vector<8x128xbf16> to vector<8x32xbf16>
    %205 = vector.extract_strided_slice %201 {offsets = [0, 96], sizes = [8, 32], strides = [1, 1]} : vector<8x128xbf16> to vector<8x32xbf16>
    %206 = vector.shape_cast %202 : vector<8x32xbf16> to vector<1x8x32xbf16>
    %207 = vector.shape_cast %203 : vector<8x32xbf16> to vector<1x8x32xbf16>
    %208 = vector.shape_cast %204 : vector<8x32xbf16> to vector<1x8x32xbf16>
    %209 = vector.shape_cast %205 : vector<8x32xbf16> to vector<1x8x32xbf16>
    %210 = tpu.concatenate %206, %207, %208, %209 in 0 : vector<1x8x32xbf16>, vector<1x8x32xbf16>, vector<1x8x32xbf16>, vector<1x8x32xbf16> -> vector<4x8x32xbf16>
    "tpu.trace_start"() <{level = 10 : i32, message = "hqd,hkd->hqk"}> : () -> ()
    %cst_45 = arith.constant dense<0.000000e+00> : vector<4x8x8xf32>
    %211 = tpu.matmul %190, %200, %cst_45 {dimension_numbers = #tpu.dot_dimension_numbers<[2], [2], [1], [1], [0, 0, 0, 1, 1, 1], [0], [0]>} : vector<4x8x32xbf16>, vector<4x8x32xbf16>, vector<4x8x8xf32> -> vector<4x8x8xf32>
    "tpu.trace_stop"() : () -> ()
    %cst_46 = arith.constant dense<0xFF800000> : vector<4x8xf32>
    %212 = vector.multi_reduction <maximumf>, %211, %cst_46 [2] : vector<4x8x8xf32> to vector<4x8xf32>
    %213 = vector.shape_cast %212 : vector<4x8xf32> to vector<4x8x1xf32>
    %214 = vector.broadcast %213 : vector<4x8x1xf32> to vector<4x8x8xf32>
    %215 = arith.subf %211, %214 : vector<4x8x8xf32>
    %216 = math.exp %215 : vector<4x8x8xf32>
    %cst_47 = arith.constant dense<0.000000e+00> : vector<4x8xf32>
    %217 = vector.multi_reduction <add>, %216, %cst_47 [2] : vector<4x8x8xf32> to vector<4x8xf32>
    %218 = vector.shape_cast %217 : vector<4x8xf32> to vector<4x8x1xf32>
    %219 = tpu.reciprocal %218 {approx = true} : vector<4x8x1xf32> -> vector<4x8x1xf32>
    %220 = vector.broadcast %219 : vector<4x8x1xf32> to vector<4x8x8xf32>
    %221 = arith.mulf %216, %220 : vector<4x8x8xf32>
    %222 = arith.truncf %221 : vector<4x8x8xf32> to vector<4x8x8xbf16>
    "tpu.trace_start"() <{level = 10 : i32, message = "hqk,hkd->hqd"}> : () -> ()
    %cst_48 = arith.constant dense<0.000000e+00> : vector<4x8x32xf32>
    %223 = tpu.matmul %222, %210, %cst_48 {dimension_numbers = #tpu.dot_dimension_numbers<[2], [1], [1], [2], [0, 0, 0, 1, 1, 2], [0], [0]>} : vector<4x8x8xbf16>, vector<4x8x32xbf16>, vector<4x8x32xf32> -> vector<4x8x32xf32>
    "tpu.trace_stop"() : () -> ()
    %224 = vector.extract_strided_slice %223 {offsets = [0, 0, 0], sizes = [1, 8, 32], strides = [1, 1, 1]} : vector<4x8x32xf32> to vector<1x8x32xf32>
    %225 = vector.shape_cast %224 : vector<1x8x32xf32> to vector<8x32xf32>
    %226 = vector.extract_strided_slice %223 {offsets = [1, 0, 0], sizes = [1, 8, 32], strides = [1, 1, 1]} : vector<4x8x32xf32> to vector<1x8x32xf32>
    %227 = vector.shape_cast %226 : vector<1x8x32xf32> to vector<8x32xf32>
    %228 = vector.extract_strided_slice %223 {offsets = [2, 0, 0], sizes = [1, 8, 32], strides = [1, 1, 1]} : vector<4x8x32xf32> to vector<1x8x32xf32>
    %229 = vector.shape_cast %228 : vector<1x8x32xf32> to vector<8x32xf32>
    %230 = vector.extract_strided_slice %223 {offsets = [3, 0, 0], sizes = [1, 8, 32], strides = [1, 1, 1]} : vector<4x8x32xf32> to vector<1x8x32xf32>
    %231 = vector.shape_cast %230 : vector<1x8x32xf32> to vector<8x32xf32>
    %232 = tpu.concatenate %225, %227, %229, %231 in 1 : vector<8x32xf32>, vector<8x32xf32>, vector<8x32xf32>, vector<8x32xf32> -> vector<8x128xf32>
    %233 = arith.truncf %232 : vector<8x128xf32> to vector<8x128xbf16>
    %c896 = arith.constant 896 : index
    %c0_49 = arith.constant 0 : index
    %234 = vector.load %arg2[%c896, %c0_49] : memref<2560x128xbf16, #tpu.memory_space<vmem>>, vector<128x128xbf16>
    %cst_50 = arith.constant dense<0.000000e+00> : vector<8x128xf32>
    %235 = tpu.matmul %233, %234, %cst_50 {dimension_numbers = #tpu.dot_dimension_numbers<[1], [0], [0], [1], [0, 0, 1, 1], [], []>} : vector<8x128xbf16>, vector<128x128xbf16>, vector<8x128xf32> -> vector<8x128xf32>
    %c13 = arith.constant 13 : index
    %c0_51 = arith.constant 0 : index
    %236 = vector.load %arg3[%c13, %c0_51] : memref<40x128xf32, #tpu.memory_space<vmem>>, vector<1x128xf32>
    %237 = vector.shape_cast %236 : vector<1x128xf32> to vector<128xf32>
    %238 = vector.shape_cast %237 : vector<128xf32> to vector<1x128xf32>
    %239 = vector.broadcast %238 : vector<1x128xf32> to vector<8x128xf32>
    %240 = arith.addf %235, %239 : vector<8x128xf32>
    %241 = arith.addf %128, %240 : vector<8x128xf32>
    %c22 = arith.constant 22 : index
    %c0_52 = arith.constant 0 : index
    %242 = vector.load %arg3[%c22, %c0_52] : memref<40x128xf32, #tpu.memory_space<vmem>>, vector<1x128xf32>
    %243 = vector.shape_cast %242 : vector<1x128xf32> to vector<128xf32>
    %c28 = arith.constant 28 : index
    %c0_53 = arith.constant 0 : index
    %244 = vector.load %arg3[%c28, %c0_53] : memref<40x128xf32, #tpu.memory_space<vmem>>, vector<1x128xf32>
    %245 = vector.shape_cast %244 : vector<1x128xf32> to vector<128xf32>
    %cst_54 = arith.constant dense<0.000000e+00> : vector<8xf32>
    %246 = vector.multi_reduction <add>, %241, %cst_54 [1] : vector<8x128xf32> to vector<8xf32>
    %247 = vector.shape_cast %246 : vector<8xf32> to vector<8x1xf32>
    %cst_55 = arith.constant 3.125000e-02 : f32
    %248 = vector.broadcast %cst_55 : f32 to vector<8x1xf32>
    %249 = arith.mulf %247, %248 : vector<8x1xf32>
    %250 = vector.broadcast %249 : vector<8x1xf32> to vector<8x128xf32>
    %251 = arith.subf %241, %250 : vector<8x128xf32>
    %cst_56 = arith.constant 0.000000e+00 : f32
    %252 = vector.shape_cast %7 : vector<1x128xi1> to vector<1x128xi1>
    %253 = vector.broadcast %252 : vector<1x128xi1> to vector<8x128xi1>
    %254 = vector.broadcast %cst_56 : f32 to vector<8x128xf32>
    %255 = arith.select %253, %251, %254 : vector<8x128xi1>, vector<8x128xf32>
    %256 = arith.mulf %255, %255 : vector<8x128xf32>
    %cst_57 = arith.constant dense<0.000000e+00> : vector<8xf32>
    %257 = vector.multi_reduction <add>, %256, %cst_57 [1] : vector<8x128xf32> to vector<8xf32>
    %258 = vector.shape_cast %257 : vector<8xf32> to vector<8x1xf32>
    %cst_58 = arith.constant 0.0322580636 : f32
    %259 = vector.broadcast %cst_58 : f32 to vector<8x1xf32>
    %260 = arith.mulf %258, %259 : vector<8x1xf32>
    %261 = vector.shape_cast %243 : vector<128xf32> to vector<1x128xf32>
    %262 = vector.broadcast %261 : vector<1x128xf32> to vector<8x128xf32>
    %263 = arith.mulf %262, %255 : vector<8x128xf32>
    %264 = math.sqrt %260 : vector<8x1xf32>
    %cst_59 = arith.constant 9.99999997E-7 : f32
    %265 = vector.broadcast %cst_59 : f32 to vector<8x1xf32>
    %266 = arith.addf %264, %265 : vector<8x1xf32>
    %267 = vector.broadcast %266 : vector<8x1xf32> to vector<8x128xf32>
    %268 = arith.divf %263, %267 : vector<8x128xf32>
    %269 = vector.shape_cast %245 : vector<128xf32> to vector<1x128xf32>
    %270 = vector.broadcast %269 : vector<1x128xf32> to vector<8x128xf32>
    %271 = arith.addf %268, %270 : vector<8x128xf32>
    %272 = arith.truncf %271 : vector<8x128xf32> to vector<8x128xbf16>
    %c1024 = arith.constant 1024 : index
    %c0_60 = arith.constant 0 : index
    %273 = vector.load %arg2[%c1024, %c0_60] : memref<2560x128xbf16, #tpu.memory_space<vmem>>, vector<128x128xbf16>
    %cst_61 = arith.constant dense<0.000000e+00> : vector<8x128xf32>
    %274 = tpu.matmul %272, %273, %cst_61 {dimension_numbers = #tpu.dot_dimension_numbers<[1], [0], [0], [1], [0, 0, 1, 1], [], []>} : vector<8x128xbf16>, vector<128x128xbf16>, vector<8x128xf32> -> vector<8x128xf32>
    %c16 = arith.constant 16 : index
    %c0_62 = arith.constant 0 : index
    %275 = vector.load %arg3[%c16, %c0_62] : memref<40x128xf32, #tpu.memory_space<vmem>>, vector<1x128xf32>
    %276 = vector.shape_cast %275 : vector<1x128xf32> to vector<128xf32>
    %277 = vector.shape_cast %276 : vector<128xf32> to vector<1x128xf32>
    %278 = vector.broadcast %277 : vector<1x128xf32> to vector<8x128xf32>
    %279 = arith.addf %274, %278 : vector<8x128xf32>
    %cst_63 = arith.constant 0.000000e+00 : f32
    %280 = vector.broadcast %cst_63 : f32 to vector<8x128xf32>
    %281 = arith.maximumf %279, %280 : vector<8x128xf32>
    %282 = arith.truncf %281 : vector<8x128xf32> to vector<8x128xbf16>
    %c1152 = arith.constant 1152 : index
    %c0_64 = arith.constant 0 : index
    %283 = vector.load %arg2[%c1152, %c0_64] : memref<2560x128xbf16, #tpu.memory_space<vmem>>, vector<128x128xbf16>
    %cst_65 = arith.constant dense<0.000000e+00> : vector<8x128xf32>
    %284 = tpu.matmul %282, %283, %cst_65 {dimension_numbers = #tpu.dot_dimension_numbers<[1], [0], [0], [1], [0, 0, 1, 1], [], []>} : vector<8x128xbf16>, vector<128x128xbf16>, vector<8x128xf32> -> vector<8x128xf32>
    %285 = arith.addf %241, %284 : vector<8x128xf32>
    %c18 = arith.constant 18 : index
    %c0_66 = arith.constant 0 : index
    %286 = vector.load %arg3[%c18, %c0_66] : memref<40x128xf32, #tpu.memory_space<vmem>>, vector<1x128xf32>
    %287 = vector.shape_cast %286 : vector<1x128xf32> to vector<128xf32>
    %288 = vector.shape_cast %287 : vector<128xf32> to vector<1x128xf32>
    %289 = vector.broadcast %288 : vector<1x128xf32> to vector<8x128xf32>
    %290 = arith.addf %285, %289 : vector<8x128xf32>
    %c23 = arith.constant 23 : index
    %c0_67 = arith.constant 0 : index
    %291 = vector.load %arg3[%c23, %c0_67] : memref<40x128xf32, #tpu.memory_space<vmem>>, vector<1x128xf32>
    %292 = vector.shape_cast %291 : vector<1x128xf32> to vector<128xf32>
    %c29 = arith.constant 29 : index
    %c0_68 = arith.constant 0 : index
    %293 = vector.load %arg3[%c29, %c0_68] : memref<40x128xf32, #tpu.memory_space<vmem>>, vector<1x128xf32>
    %294 = vector.shape_cast %293 : vector<1x128xf32> to vector<128xf32>
    %cst_69 = arith.constant dense<0.000000e+00> : vector<8xf32>
    %295 = vector.multi_reduction <add>, %290, %cst_69 [1] : vector<8x128xf32> to vector<8xf32>
    %296 = vector.shape_cast %295 : vector<8xf32> to vector<8x1xf32>
    %cst_70 = arith.constant 3.125000e-02 : f32
    %297 = vector.broadcast %cst_70 : f32 to vector<8x1xf32>
    %298 = arith.mulf %296, %297 : vector<8x1xf32>
    %299 = vector.broadcast %298 : vector<8x1xf32> to vector<8x128xf32>
    %300 = arith.subf %290, %299 : vector<8x128xf32>
    %cst_71 = arith.constant 0.000000e+00 : f32
    %301 = vector.shape_cast %7 : vector<1x128xi1> to vector<1x128xi1>
    %302 = vector.broadcast %301 : vector<1x128xi1> to vector<8x128xi1>
    %303 = vector.broadcast %cst_71 : f32 to vector<8x128xf32>
    %304 = arith.select %302, %300, %303 : vector<8x128xi1>, vector<8x128xf32>
    %305 = arith.mulf %304, %304 : vector<8x128xf32>
    %cst_72 = arith.constant dense<0.000000e+00> : vector<8xf32>
    %306 = vector.multi_reduction <add>, %305, %cst_72 [1] : vector<8x128xf32> to vector<8xf32>
    %307 = vector.shape_cast %306 : vector<8xf32> to vector<8x1xf32>
    %cst_73 = arith.constant 0.0322580636 : f32
    %308 = vector.broadcast %cst_73 : f32 to vector<8x1xf32>
    %309 = arith.mulf %307, %308 : vector<8x1xf32>
    %310 = vector.shape_cast %292 : vector<128xf32> to vector<1x128xf32>
    %311 = vector.broadcast %310 : vector<1x128xf32> to vector<8x128xf32>
    %312 = arith.mulf %311, %304 : vector<8x128xf32>
    %313 = math.sqrt %309 : vector<8x1xf32>
    %cst_74 = arith.constant 9.99999997E-7 : f32
    %314 = vector.broadcast %cst_74 : f32 to vector<8x1xf32>
    %315 = arith.addf %313, %314 : vector<8x1xf32>
    %316 = vector.broadcast %315 : vector<8x1xf32> to vector<8x128xf32>
    %317 = arith.divf %312, %316 : vector<8x128xf32>
    %318 = vector.shape_cast %294 : vector<128xf32> to vector<1x128xf32>
    %319 = vector.broadcast %318 : vector<1x128xf32> to vector<8x128xf32>
    %320 = arith.addf %317, %319 : vector<8x128xf32>
    %321 = arith.truncf %320 : vector<8x128xf32> to vector<8x128xbf16>
    %c1280 = arith.constant 1280 : index
    %c0_75 = arith.constant 0 : index
    %322 = vector.load %arg2[%c1280, %c0_75] : memref<2560x128xbf16, #tpu.memory_space<vmem>>, vector<128x128xbf16>
    %cst_76 = arith.constant dense<0.000000e+00> : vector<8x128xf32>
    %323 = tpu.matmul %321, %322, %cst_76 {dimension_numbers = #tpu.dot_dimension_numbers<[1], [0], [0], [1], [0, 0, 1, 1], [], []>} : vector<8x128xbf16>, vector<128x128xbf16>, vector<8x128xf32> -> vector<8x128xf32>
    %c2 = arith.constant 2 : index
    %c0_77 = arith.constant 0 : index
    %324 = vector.load %arg3[%c2, %c0_77] : memref<40x128xf32, #tpu.memory_space<vmem>>, vector<1x128xf32>
    %325 = vector.shape_cast %324 : vector<1x128xf32> to vector<128xf32>
    %326 = vector.shape_cast %325 : vector<128xf32> to vector<1x128xf32>
    %327 = vector.broadcast %326 : vector<1x128xf32> to vector<8x128xf32>
    %328 = arith.addf %323, %327 : vector<8x128xf32>
    %c1408 = arith.constant 1408 : index
    %c0_78 = arith.constant 0 : index
    %329 = vector.load %arg2[%c1408, %c0_78] : memref<2560x128xbf16, #tpu.memory_space<vmem>>, vector<128x128xbf16>
    %cst_79 = arith.constant dense<0.000000e+00> : vector<8x128xf32>
    %330 = tpu.matmul %321, %329, %cst_79 {dimension_numbers = #tpu.dot_dimension_numbers<[1], [0], [0], [1], [0, 0, 1, 1], [], []>} : vector<8x128xbf16>, vector<128x128xbf16>, vector<8x128xf32> -> vector<8x128xf32>
    %c6 = arith.constant 6 : index
    %c0_80 = arith.constant 0 : index
    %331 = vector.load %arg3[%c6, %c0_80] : memref<40x128xf32, #tpu.memory_space<vmem>>, vector<1x128xf32>
    %332 = vector.shape_cast %331 : vector<1x128xf32> to vector<128xf32>
    %333 = vector.shape_cast %332 : vector<128xf32> to vector<1x128xf32>
    %334 = vector.broadcast %333 : vector<1x128xf32> to vector<8x128xf32>
    %335 = arith.addf %330, %334 : vector<8x128xf32>
    %c1536 = arith.constant 1536 : index
    %c0_81 = arith.constant 0 : index
    %336 = vector.load %arg2[%c1536, %c0_81] : memref<2560x128xbf16, #tpu.memory_space<vmem>>, vector<128x128xbf16>
    %cst_82 = arith.constant dense<0.000000e+00> : vector<8x128xf32>
    %337 = tpu.matmul %321, %336, %cst_82 {dimension_numbers = #tpu.dot_dimension_numbers<[1], [0], [0], [1], [0, 0, 1, 1], [], []>} : vector<8x128xbf16>, vector<128x128xbf16>, vector<8x128xf32> -> vector<8x128xf32>
    %c10 = arith.constant 10 : index
    %c0_83 = arith.constant 0 : index
    %338 = vector.load %arg3[%c10, %c0_83] : memref<40x128xf32, #tpu.memory_space<vmem>>, vector<1x128xf32>
    %339 = vector.shape_cast %338 : vector<1x128xf32> to vector<128xf32>
    %340 = vector.shape_cast %339 : vector<128xf32> to vector<1x128xf32>
    %341 = vector.broadcast %340 : vector<1x128xf32> to vector<8x128xf32>
    %342 = arith.addf %337, %341 : vector<8x128xf32>
    %343 = arith.truncf %328 : vector<8x128xf32> to vector<8x128xbf16>
    %344 = vector.extract_strided_slice %343 {offsets = [0, 0], sizes = [8, 32], strides = [1, 1]} : vector<8x128xbf16> to vector<8x32xbf16>
    %345 = vector.extract_strided_slice %343 {offsets = [0, 32], sizes = [8, 32], strides = [1, 1]} : vector<8x128xbf16> to vector<8x32xbf16>
    %346 = vector.extract_strided_slice %343 {offsets = [0, 64], sizes = [8, 32], strides = [1, 1]} : vector<8x128xbf16> to vector<8x32xbf16>
    %347 = vector.extract_strided_slice %343 {offsets = [0, 96], sizes = [8, 32], strides = [1, 1]} : vector<8x128xbf16> to vector<8x32xbf16>
    %348 = vector.shape_cast %344 : vector<8x32xbf16> to vector<1x8x32xbf16>
    %349 = vector.shape_cast %345 : vector<8x32xbf16> to vector<1x8x32xbf16>
    %350 = vector.shape_cast %346 : vector<8x32xbf16> to vector<1x8x32xbf16>
    %351 = vector.shape_cast %347 : vector<8x32xbf16> to vector<1x8x32xbf16>
    %352 = tpu.concatenate %348, %349, %350, %351 in 0 : vector<1x8x32xbf16>, vector<1x8x32xbf16>, vector<1x8x32xbf16>, vector<1x8x32xbf16> -> vector<4x8x32xbf16>
    %353 = arith.truncf %335 : vector<8x128xf32> to vector<8x128xbf16>
    %354 = vector.extract_strided_slice %353 {offsets = [0, 0], sizes = [8, 32], strides = [1, 1]} : vector<8x128xbf16> to vector<8x32xbf16>
    %355 = vector.extract_strided_slice %353 {offsets = [0, 32], sizes = [8, 32], strides = [1, 1]} : vector<8x128xbf16> to vector<8x32xbf16>
    %356 = vector.extract_strided_slice %353 {offsets = [0, 64], sizes = [8, 32], strides = [1, 1]} : vector<8x128xbf16> to vector<8x32xbf16>
    %357 = vector.extract_strided_slice %353 {offsets = [0, 96], sizes = [8, 32], strides = [1, 1]} : vector<8x128xbf16> to vector<8x32xbf16>
    %358 = vector.shape_cast %354 : vector<8x32xbf16> to vector<1x8x32xbf16>
    %359 = vector.shape_cast %355 : vector<8x32xbf16> to vector<1x8x32xbf16>
    %360 = vector.shape_cast %356 : vector<8x32xbf16> to vector<1x8x32xbf16>
    %361 = vector.shape_cast %357 : vector<8x32xbf16> to vector<1x8x32xbf16>
    %362 = tpu.concatenate %358, %359, %360, %361 in 0 : vector<1x8x32xbf16>, vector<1x8x32xbf16>, vector<1x8x32xbf16>, vector<1x8x32xbf16> -> vector<4x8x32xbf16>
    %363 = arith.truncf %342 : vector<8x128xf32> to vector<8x128xbf16>
    %364 = vector.extract_strided_slice %363 {offsets = [0, 0], sizes = [8, 32], strides = [1, 1]} : vector<8x128xbf16> to vector<8x32xbf16>
    %365 = vector.extract_strided_slice %363 {offsets = [0, 32], sizes = [8, 32], strides = [1, 1]} : vector<8x128xbf16> to vector<8x32xbf16>
    %366 = vector.extract_strided_slice %363 {offsets = [0, 64], sizes = [8, 32], strides = [1, 1]} : vector<8x128xbf16> to vector<8x32xbf16>
    %367 = vector.extract_strided_slice %363 {offsets = [0, 96], sizes = [8, 32], strides = [1, 1]} : vector<8x128xbf16> to vector<8x32xbf16>
    %368 = vector.shape_cast %364 : vector<8x32xbf16> to vector<1x8x32xbf16>
    %369 = vector.shape_cast %365 : vector<8x32xbf16> to vector<1x8x32xbf16>
    %370 = vector.shape_cast %366 : vector<8x32xbf16> to vector<1x8x32xbf16>
    %371 = vector.shape_cast %367 : vector<8x32xbf16> to vector<1x8x32xbf16>
    %372 = tpu.concatenate %368, %369, %370, %371 in 0 : vector<1x8x32xbf16>, vector<1x8x32xbf16>, vector<1x8x32xbf16>, vector<1x8x32xbf16> -> vector<4x8x32xbf16>
    "tpu.trace_start"() <{level = 10 : i32, message = "hqd,hkd->hqk"}> : () -> ()
    %cst_84 = arith.constant dense<0.000000e+00> : vector<4x8x8xf32>
    %373 = tpu.matmul %352, %362, %cst_84 {dimension_numbers = #tpu.dot_dimension_numbers<[2], [2], [1], [1], [0, 0, 0, 1, 1, 1], [0], [0]>} : vector<4x8x32xbf16>, vector<4x8x32xbf16>, vector<4x8x8xf32> -> vector<4x8x8xf32>
    %cst_85 = arith.constant -1.000000e+09 : f32
    "tpu.trace_stop"() : () -> ()
    %374 = vector.shape_cast %11 : vector<1x8x8xi1> to vector<1x8x8xi1>
    %375 = vector.broadcast %374 : vector<1x8x8xi1> to vector<4x8x8xi1>
    %376 = vector.broadcast %cst_85 : f32 to vector<4x8x8xf32>
    %377 = arith.select %375, %373, %376 : vector<4x8x8xi1>, vector<4x8x8xf32>
    %cst_86 = arith.constant dense<0xFF800000> : vector<4x8xf32>
    %378 = vector.multi_reduction <maximumf>, %377, %cst_86 [2] : vector<4x8x8xf32> to vector<4x8xf32>
    %379 = vector.shape_cast %378 : vector<4x8xf32> to vector<4x8x1xf32>
    %380 = vector.broadcast %379 : vector<4x8x1xf32> to vector<4x8x8xf32>
    %381 = arith.subf %377, %380 : vector<4x8x8xf32>
    %382 = math.exp %381 : vector<4x8x8xf32>
    %cst_87 = arith.constant dense<0.000000e+00> : vector<4x8xf32>
    %383 = vector.multi_reduction <add>, %382, %cst_87 [2] : vector<4x8x8xf32> to vector<4x8xf32>
    %384 = vector.shape_cast %383 : vector<4x8xf32> to vector<4x8x1xf32>
    %385 = tpu.reciprocal %384 {approx = true} : vector<4x8x1xf32> -> vector<4x8x1xf32>
    %386 = vector.broadcast %385 : vector<4x8x1xf32> to vector<4x8x8xf32>
    %387 = arith.mulf %382, %386 : vector<4x8x8xf32>
    %388 = arith.truncf %387 : vector<4x8x8xf32> to vector<4x8x8xbf16>
    "tpu.trace_start"() <{level = 10 : i32, message = "hqk,hkd->hqd"}> : () -> ()
    %cst_88 = arith.constant dense<0.000000e+00> : vector<4x8x32xf32>
    %389 = tpu.matmul %388, %372, %cst_88 {dimension_numbers = #tpu.dot_dimension_numbers<[2], [1], [1], [2], [0, 0, 0, 1, 1, 2], [0], [0]>} : vector<4x8x8xbf16>, vector<4x8x32xbf16>, vector<4x8x32xf32> -> vector<4x8x32xf32>
    "tpu.trace_stop"() : () -> ()
    %390 = vector.extract_strided_slice %389 {offsets = [0, 0, 0], sizes = [1, 8, 32], strides = [1, 1, 1]} : vector<4x8x32xf32> to vector<1x8x32xf32>
    %391 = vector.shape_cast %390 : vector<1x8x32xf32> to vector<8x32xf32>
    %392 = vector.extract_strided_slice %389 {offsets = [1, 0, 0], sizes = [1, 8, 32], strides = [1, 1, 1]} : vector<4x8x32xf32> to vector<1x8x32xf32>
    %393 = vector.shape_cast %392 : vector<1x8x32xf32> to vector<8x32xf32>
    %394 = vector.extract_strided_slice %389 {offsets = [2, 0, 0], sizes = [1, 8, 32], strides = [1, 1, 1]} : vector<4x8x32xf32> to vector<1x8x32xf32>
    %395 = vector.shape_cast %394 : vector<1x8x32xf32> to vector<8x32xf32>
    %396 = vector.extract_strided_slice %389 {offsets = [3, 0, 0], sizes = [1, 8, 32], strides = [1, 1, 1]} : vector<4x8x32xf32> to vector<1x8x32xf32>
    %397 = vector.shape_cast %396 : vector<1x8x32xf32> to vector<8x32xf32>
    %398 = tpu.concatenate %391, %393, %395, %397 in 1 : vector<8x32xf32>, vector<8x32xf32>, vector<8x32xf32>, vector<8x32xf32> -> vector<8x128xf32>
    %399 = arith.truncf %398 : vector<8x128xf32> to vector<8x128xbf16>
    %c1664 = arith.constant 1664 : index
    %c0_89 = arith.constant 0 : index
    %400 = vector.load %arg2[%c1664, %c0_89] : memref<2560x128xbf16, #tpu.memory_space<vmem>>, vector<128x128xbf16>
    %cst_90 = arith.constant dense<0.000000e+00> : vector<8x128xf32>
    %401 = tpu.matmul %399, %400, %cst_90 {dimension_numbers = #tpu.dot_dimension_numbers<[1], [0], [0], [1], [0, 0, 1, 1], [], []>} : vector<8x128xbf16>, vector<128x128xbf16>, vector<8x128xf32> -> vector<8x128xf32>
    %c14 = arith.constant 14 : index
    %c0_91 = arith.constant 0 : index
    %402 = vector.load %arg3[%c14, %c0_91] : memref<40x128xf32, #tpu.memory_space<vmem>>, vector<1x128xf32>
    %403 = vector.shape_cast %402 : vector<1x128xf32> to vector<128xf32>
    %404 = vector.shape_cast %403 : vector<128xf32> to vector<1x128xf32>
    %405 = vector.broadcast %404 : vector<1x128xf32> to vector<8x128xf32>
    %406 = arith.addf %401, %405 : vector<8x128xf32>
    %407 = arith.addf %290, %406 : vector<8x128xf32>
    %c24 = arith.constant 24 : index
    %c0_92 = arith.constant 0 : index
    %408 = vector.load %arg3[%c24, %c0_92] : memref<40x128xf32, #tpu.memory_space<vmem>>, vector<1x128xf32>
    %409 = vector.shape_cast %408 : vector<1x128xf32> to vector<128xf32>
    %c30 = arith.constant 30 : index
    %c0_93 = arith.constant 0 : index
    %410 = vector.load %arg3[%c30, %c0_93] : memref<40x128xf32, #tpu.memory_space<vmem>>, vector<1x128xf32>
    %411 = vector.shape_cast %410 : vector<1x128xf32> to vector<128xf32>
    %cst_94 = arith.constant dense<0.000000e+00> : vector<8xf32>
    %412 = vector.multi_reduction <add>, %407, %cst_94 [1] : vector<8x128xf32> to vector<8xf32>
    %413 = vector.shape_cast %412 : vector<8xf32> to vector<8x1xf32>
    %cst_95 = arith.constant 3.125000e-02 : f32
    %414 = vector.broadcast %cst_95 : f32 to vector<8x1xf32>
    %415 = arith.mulf %413, %414 : vector<8x1xf32>
    %416 = vector.broadcast %415 : vector<8x1xf32> to vector<8x128xf32>
    %417 = arith.subf %407, %416 : vector<8x128xf32>
    %cst_96 = arith.constant 0.000000e+00 : f32
    %418 = vector.shape_cast %7 : vector<1x128xi1> to vector<1x128xi1>
    %419 = vector.broadcast %418 : vector<1x128xi1> to vector<8x128xi1>
    %420 = vector.broadcast %cst_96 : f32 to vector<8x128xf32>
    %421 = arith.select %419, %417, %420 : vector<8x128xi1>, vector<8x128xf32>
    %422 = arith.mulf %421, %421 : vector<8x128xf32>
    %cst_97 = arith.constant dense<0.000000e+00> : vector<8xf32>
    %423 = vector.multi_reduction <add>, %422, %cst_97 [1] : vector<8x128xf32> to vector<8xf32>
    %424 = vector.shape_cast %423 : vector<8xf32> to vector<8x1xf32>
    %cst_98 = arith.constant 0.0322580636 : f32
    %425 = vector.broadcast %cst_98 : f32 to vector<8x1xf32>
    %426 = arith.mulf %424, %425 : vector<8x1xf32>
    %427 = vector.shape_cast %409 : vector<128xf32> to vector<1x128xf32>
    %428 = vector.broadcast %427 : vector<1x128xf32> to vector<8x128xf32>
    %429 = arith.mulf %428, %421 : vector<8x128xf32>
    %430 = math.sqrt %426 : vector<8x1xf32>
    %cst_99 = arith.constant 9.99999997E-7 : f32
    %431 = vector.broadcast %cst_99 : f32 to vector<8x1xf32>
    %432 = arith.addf %430, %431 : vector<8x1xf32>
    %433 = vector.broadcast %432 : vector<8x1xf32> to vector<8x128xf32>
    %434 = arith.divf %429, %433 : vector<8x128xf32>
    %435 = vector.shape_cast %411 : vector<128xf32> to vector<1x128xf32>
    %436 = vector.broadcast %435 : vector<1x128xf32> to vector<8x128xf32>
    %437 = arith.addf %434, %436 : vector<8x128xf32>
    %438 = arith.truncf %437 : vector<8x128xf32> to vector<8x128xbf16>
    %c1792 = arith.constant 1792 : index
    %c0_100 = arith.constant 0 : index
    %439 = vector.load %arg2[%c1792, %c0_100] : memref<2560x128xbf16, #tpu.memory_space<vmem>>, vector<128x128xbf16>
    %cst_101 = arith.constant dense<0.000000e+00> : vector<8x128xf32>
    %440 = tpu.matmul %438, %439, %cst_101 {dimension_numbers = #tpu.dot_dimension_numbers<[1], [0], [0], [1], [0, 0, 1, 1], [], []>} : vector<8x128xbf16>, vector<128x128xbf16>, vector<8x128xf32> -> vector<8x128xf32>
    %c3 = arith.constant 3 : index
    %c0_102 = arith.constant 0 : index
    %441 = vector.load %arg3[%c3, %c0_102] : memref<40x128xf32, #tpu.memory_space<vmem>>, vector<1x128xf32>
    %442 = vector.shape_cast %441 : vector<1x128xf32> to vector<128xf32>
    %443 = vector.shape_cast %442 : vector<128xf32> to vector<1x128xf32>
    %444 = vector.broadcast %443 : vector<1x128xf32> to vector<8x128xf32>
    %445 = arith.addf %440, %444 : vector<8x128xf32>
    %c1920 = arith.constant 1920 : index
    %c0_103 = arith.constant 0 : index
    %446 = vector.load %arg2[%c1920, %c0_103] : memref<2560x128xbf16, #tpu.memory_space<vmem>>, vector<128x128xbf16>
    %cst_104 = arith.constant dense<0.000000e+00> : vector<8x128xf32>
    %447 = tpu.matmul %4, %446, %cst_104 {dimension_numbers = #tpu.dot_dimension_numbers<[1], [0], [0], [1], [0, 0, 1, 1], [], []>} : vector<8x128xbf16>, vector<128x128xbf16>, vector<8x128xf32> -> vector<8x128xf32>
    %c7 = arith.constant 7 : index
    %c0_105 = arith.constant 0 : index
    %448 = vector.load %arg3[%c7, %c0_105] : memref<40x128xf32, #tpu.memory_space<vmem>>, vector<1x128xf32>
    %449 = vector.shape_cast %448 : vector<1x128xf32> to vector<128xf32>
    %450 = vector.shape_cast %449 : vector<128xf32> to vector<1x128xf32>
    %451 = vector.broadcast %450 : vector<1x128xf32> to vector<8x128xf32>
    %452 = arith.addf %447, %451 : vector<8x128xf32>
    %c2048 = arith.constant 2048 : index
    %c0_106 = arith.constant 0 : index
    %453 = vector.load %arg2[%c2048, %c0_106] : memref<2560x128xbf16, #tpu.memory_space<vmem>>, vector<128x128xbf16>
    %cst_107 = arith.constant dense<0.000000e+00> : vector<8x128xf32>
    %454 = tpu.matmul %4, %453, %cst_107 {dimension_numbers = #tpu.dot_dimension_numbers<[1], [0], [0], [1], [0, 0, 1, 1], [], []>} : vector<8x128xbf16>, vector<128x128xbf16>, vector<8x128xf32> -> vector<8x128xf32>
    %c11 = arith.constant 11 : index
    %c0_108 = arith.constant 0 : index
    %455 = vector.load %arg3[%c11, %c0_108] : memref<40x128xf32, #tpu.memory_space<vmem>>, vector<1x128xf32>
    %456 = vector.shape_cast %455 : vector<1x128xf32> to vector<128xf32>
    %457 = vector.shape_cast %456 : vector<128xf32> to vector<1x128xf32>
    %458 = vector.broadcast %457 : vector<1x128xf32> to vector<8x128xf32>
    %459 = arith.addf %454, %458 : vector<8x128xf32>
    %460 = arith.truncf %445 : vector<8x128xf32> to vector<8x128xbf16>
    %461 = vector.extract_strided_slice %460 {offsets = [0, 0], sizes = [8, 32], strides = [1, 1]} : vector<8x128xbf16> to vector<8x32xbf16>
    %462 = vector.extract_strided_slice %460 {offsets = [0, 32], sizes = [8, 32], strides = [1, 1]} : vector<8x128xbf16> to vector<8x32xbf16>
    %463 = vector.extract_strided_slice %460 {offsets = [0, 64], sizes = [8, 32], strides = [1, 1]} : vector<8x128xbf16> to vector<8x32xbf16>
    %464 = vector.extract_strided_slice %460 {offsets = [0, 96], sizes = [8, 32], strides = [1, 1]} : vector<8x128xbf16> to vector<8x32xbf16>
    %465 = vector.shape_cast %461 : vector<8x32xbf16> to vector<1x8x32xbf16>
    %466 = vector.shape_cast %462 : vector<8x32xbf16> to vector<1x8x32xbf16>
    %467 = vector.shape_cast %463 : vector<8x32xbf16> to vector<1x8x32xbf16>
    %468 = vector.shape_cast %464 : vector<8x32xbf16> to vector<1x8x32xbf16>
    %469 = tpu.concatenate %465, %466, %467, %468 in 0 : vector<1x8x32xbf16>, vector<1x8x32xbf16>, vector<1x8x32xbf16>, vector<1x8x32xbf16> -> vector<4x8x32xbf16>
    %470 = arith.truncf %452 : vector<8x128xf32> to vector<8x128xbf16>
    %471 = vector.extract_strided_slice %470 {offsets = [0, 0], sizes = [8, 32], strides = [1, 1]} : vector<8x128xbf16> to vector<8x32xbf16>
    %472 = vector.extract_strided_slice %470 {offsets = [0, 32], sizes = [8, 32], strides = [1, 1]} : vector<8x128xbf16> to vector<8x32xbf16>
    %473 = vector.extract_strided_slice %470 {offsets = [0, 64], sizes = [8, 32], strides = [1, 1]} : vector<8x128xbf16> to vector<8x32xbf16>
    %474 = vector.extract_strided_slice %470 {offsets = [0, 96], sizes = [8, 32], strides = [1, 1]} : vector<8x128xbf16> to vector<8x32xbf16>
    %475 = vector.shape_cast %471 : vector<8x32xbf16> to vector<1x8x32xbf16>
    %476 = vector.shape_cast %472 : vector<8x32xbf16> to vector<1x8x32xbf16>
    %477 = vector.shape_cast %473 : vector<8x32xbf16> to vector<1x8x32xbf16>
    %478 = vector.shape_cast %474 : vector<8x32xbf16> to vector<1x8x32xbf16>
    %479 = tpu.concatenate %475, %476, %477, %478 in 0 : vector<1x8x32xbf16>, vector<1x8x32xbf16>, vector<1x8x32xbf16>, vector<1x8x32xbf16> -> vector<4x8x32xbf16>
    %480 = arith.truncf %459 : vector<8x128xf32> to vector<8x128xbf16>
    %481 = vector.extract_strided_slice %480 {offsets = [0, 0], sizes = [8, 32], strides = [1, 1]} : vector<8x128xbf16> to vector<8x32xbf16>
    %482 = vector.extract_strided_slice %480 {offsets = [0, 32], sizes = [8, 32], strides = [1, 1]} : vector<8x128xbf16> to vector<8x32xbf16>
    %483 = vector.extract_strided_slice %480 {offsets = [0, 64], sizes = [8, 32], strides = [1, 1]} : vector<8x128xbf16> to vector<8x32xbf16>
    %484 = vector.extract_strided_slice %480 {offsets = [0, 96], sizes = [8, 32], strides = [1, 1]} : vector<8x128xbf16> to vector<8x32xbf16>
    %485 = vector.shape_cast %481 : vector<8x32xbf16> to vector<1x8x32xbf16>
    %486 = vector.shape_cast %482 : vector<8x32xbf16> to vector<1x8x32xbf16>
    %487 = vector.shape_cast %483 : vector<8x32xbf16> to vector<1x8x32xbf16>
    %488 = vector.shape_cast %484 : vector<8x32xbf16> to vector<1x8x32xbf16>
    %489 = tpu.concatenate %485, %486, %487, %488 in 0 : vector<1x8x32xbf16>, vector<1x8x32xbf16>, vector<1x8x32xbf16>, vector<1x8x32xbf16> -> vector<4x8x32xbf16>
    "tpu.trace_start"() <{level = 10 : i32, message = "hqd,hkd->hqk"}> : () -> ()
    %cst_109 = arith.constant dense<0.000000e+00> : vector<4x8x8xf32>
    %490 = tpu.matmul %469, %479, %cst_109 {dimension_numbers = #tpu.dot_dimension_numbers<[2], [2], [1], [1], [0, 0, 0, 1, 1, 1], [0], [0]>} : vector<4x8x32xbf16>, vector<4x8x32xbf16>, vector<4x8x8xf32> -> vector<4x8x8xf32>
    "tpu.trace_stop"() : () -> ()
    %cst_110 = arith.constant dense<0xFF800000> : vector<4x8xf32>
    %491 = vector.multi_reduction <maximumf>, %490, %cst_110 [2] : vector<4x8x8xf32> to vector<4x8xf32>
    %492 = vector.shape_cast %491 : vector<4x8xf32> to vector<4x8x1xf32>
    %493 = vector.broadcast %492 : vector<4x8x1xf32> to vector<4x8x8xf32>
    %494 = arith.subf %490, %493 : vector<4x8x8xf32>
    %495 = math.exp %494 : vector<4x8x8xf32>
    %cst_111 = arith.constant dense<0.000000e+00> : vector<4x8xf32>
    %496 = vector.multi_reduction <add>, %495, %cst_111 [2] : vector<4x8x8xf32> to vector<4x8xf32>
    %497 = vector.shape_cast %496 : vector<4x8xf32> to vector<4x8x1xf32>
    %498 = tpu.reciprocal %497 {approx = true} : vector<4x8x1xf32> -> vector<4x8x1xf32>
    %499 = vector.broadcast %498 : vector<4x8x1xf32> to vector<4x8x8xf32>
    %500 = arith.mulf %495, %499 : vector<4x8x8xf32>
    %501 = arith.truncf %500 : vector<4x8x8xf32> to vector<4x8x8xbf16>
    "tpu.trace_start"() <{level = 10 : i32, message = "hqk,hkd->hqd"}> : () -> ()
    %cst_112 = arith.constant dense<0.000000e+00> : vector<4x8x32xf32>
    %502 = tpu.matmul %501, %489, %cst_112 {dimension_numbers = #tpu.dot_dimension_numbers<[2], [1], [1], [2], [0, 0, 0, 1, 1, 2], [0], [0]>} : vector<4x8x8xbf16>, vector<4x8x32xbf16>, vector<4x8x32xf32> -> vector<4x8x32xf32>
    "tpu.trace_stop"() : () -> ()
    %503 = vector.extract_strided_slice %502 {offsets = [0, 0, 0], sizes = [1, 8, 32], strides = [1, 1, 1]} : vector<4x8x32xf32> to vector<1x8x32xf32>
    %504 = vector.shape_cast %503 : vector<1x8x32xf32> to vector<8x32xf32>
    %505 = vector.extract_strided_slice %502 {offsets = [1, 0, 0], sizes = [1, 8, 32], strides = [1, 1, 1]} : vector<4x8x32xf32> to vector<1x8x32xf32>
    %506 = vector.shape_cast %505 : vector<1x8x32xf32> to vector<8x32xf32>
    %507 = vector.extract_strided_slice %502 {offsets = [2, 0, 0], sizes = [1, 8, 32], strides = [1, 1, 1]} : vector<4x8x32xf32> to vector<1x8x32xf32>
    %508 = vector.shape_cast %507 : vector<1x8x32xf32> to vector<8x32xf32>
    %509 = vector.extract_strided_slice %502 {offsets = [3, 0, 0], sizes = [1, 8, 32], strides = [1, 1, 1]} : vector<4x8x32xf32> to vector<1x8x32xf32>
    %510 = vector.shape_cast %509 : vector<1x8x32xf32> to vector<8x32xf32>
    %511 = tpu.concatenate %504, %506, %508, %510 in 1 : vector<8x32xf32>, vector<8x32xf32>, vector<8x32xf32>, vector<8x32xf32> -> vector<8x128xf32>
    %512 = arith.truncf %511 : vector<8x128xf32> to vector<8x128xbf16>
    %c2176 = arith.constant 2176 : index
    %c0_113 = arith.constant 0 : index
    %513 = vector.load %arg2[%c2176, %c0_113] : memref<2560x128xbf16, #tpu.memory_space<vmem>>, vector<128x128xbf16>
    %cst_114 = arith.constant dense<0.000000e+00> : vector<8x128xf32>
    %514 = tpu.matmul %512, %513, %cst_114 {dimension_numbers = #tpu.dot_dimension_numbers<[1], [0], [0], [1], [0, 0, 1, 1], [], []>} : vector<8x128xbf16>, vector<128x128xbf16>, vector<8x128xf32> -> vector<8x128xf32>
    %c15 = arith.constant 15 : index
    %c0_115 = arith.constant 0 : index
    %515 = vector.load %arg3[%c15, %c0_115] : memref<40x128xf32, #tpu.memory_space<vmem>>, vector<1x128xf32>
    %516 = vector.shape_cast %515 : vector<1x128xf32> to vector<128xf32>
    %517 = vector.shape_cast %516 : vector<128xf32> to vector<1x128xf32>
    %518 = vector.broadcast %517 : vector<1x128xf32> to vector<8x128xf32>
    %519 = arith.addf %514, %518 : vector<8x128xf32>
    %520 = arith.addf %407, %519 : vector<8x128xf32>
    %c25 = arith.constant 25 : index
    %c0_116 = arith.constant 0 : index
    %521 = vector.load %arg3[%c25, %c0_116] : memref<40x128xf32, #tpu.memory_space<vmem>>, vector<1x128xf32>
    %522 = vector.shape_cast %521 : vector<1x128xf32> to vector<128xf32>
    %c31 = arith.constant 31 : index
    %c0_117 = arith.constant 0 : index
    %523 = vector.load %arg3[%c31, %c0_117] : memref<40x128xf32, #tpu.memory_space<vmem>>, vector<1x128xf32>
    %524 = vector.shape_cast %523 : vector<1x128xf32> to vector<128xf32>
    %cst_118 = arith.constant dense<0.000000e+00> : vector<8xf32>
    %525 = vector.multi_reduction <add>, %520, %cst_118 [1] : vector<8x128xf32> to vector<8xf32>
    %526 = vector.shape_cast %525 : vector<8xf32> to vector<8x1xf32>
    %cst_119 = arith.constant 3.125000e-02 : f32
    %527 = vector.broadcast %cst_119 : f32 to vector<8x1xf32>
    %528 = arith.mulf %526, %527 : vector<8x1xf32>
    %529 = vector.broadcast %528 : vector<8x1xf32> to vector<8x128xf32>
    %530 = arith.subf %520, %529 : vector<8x128xf32>
    %cst_120 = arith.constant 0.000000e+00 : f32
    %531 = vector.shape_cast %7 : vector<1x128xi1> to vector<1x128xi1>
    %532 = vector.broadcast %531 : vector<1x128xi1> to vector<8x128xi1>
    %533 = vector.broadcast %cst_120 : f32 to vector<8x128xf32>
    %534 = arith.select %532, %530, %533 : vector<8x128xi1>, vector<8x128xf32>
    %535 = arith.mulf %534, %534 : vector<8x128xf32>
    %cst_121 = arith.constant dense<0.000000e+00> : vector<8xf32>
    %536 = vector.multi_reduction <add>, %535, %cst_121 [1] : vector<8x128xf32> to vector<8xf32>
    %537 = vector.shape_cast %536 : vector<8xf32> to vector<8x1xf32>
    %cst_122 = arith.constant 0.0322580636 : f32
    %538 = vector.broadcast %cst_122 : f32 to vector<8x1xf32>
    %539 = arith.mulf %537, %538 : vector<8x1xf32>
    %540 = vector.shape_cast %522 : vector<128xf32> to vector<1x128xf32>
    %541 = vector.broadcast %540 : vector<1x128xf32> to vector<8x128xf32>
    %542 = arith.mulf %541, %534 : vector<8x128xf32>
    %543 = math.sqrt %539 : vector<8x1xf32>
    %cst_123 = arith.constant 9.99999997E-7 : f32
    %544 = vector.broadcast %cst_123 : f32 to vector<8x1xf32>
    %545 = arith.addf %543, %544 : vector<8x1xf32>
    %546 = vector.broadcast %545 : vector<8x1xf32> to vector<8x128xf32>
    %547 = arith.divf %542, %546 : vector<8x128xf32>
    %548 = vector.shape_cast %524 : vector<128xf32> to vector<1x128xf32>
    %549 = vector.broadcast %548 : vector<1x128xf32> to vector<8x128xf32>
    %550 = arith.addf %547, %549 : vector<8x128xf32>
    %551 = arith.truncf %550 : vector<8x128xf32> to vector<8x128xbf16>
    %c2304 = arith.constant 2304 : index
    %c0_124 = arith.constant 0 : index
    %552 = vector.load %arg2[%c2304, %c0_124] : memref<2560x128xbf16, #tpu.memory_space<vmem>>, vector<128x128xbf16>
    %cst_125 = arith.constant dense<0.000000e+00> : vector<8x128xf32>
    %553 = tpu.matmul %551, %552, %cst_125 {dimension_numbers = #tpu.dot_dimension_numbers<[1], [0], [0], [1], [0, 0, 1, 1], [], []>} : vector<8x128xbf16>, vector<128x128xbf16>, vector<8x128xf32> -> vector<8x128xf32>
    %c17 = arith.constant 17 : index
    %c0_126 = arith.constant 0 : index
    %554 = vector.load %arg3[%c17, %c0_126] : memref<40x128xf32, #tpu.memory_space<vmem>>, vector<1x128xf32>
    %555 = vector.shape_cast %554 : vector<1x128xf32> to vector<128xf32>
    %556 = vector.shape_cast %555 : vector<128xf32> to vector<1x128xf32>
    %557 = vector.broadcast %556 : vector<1x128xf32> to vector<8x128xf32>
    %558 = arith.addf %553, %557 : vector<8x128xf32>
    %cst_127 = arith.constant 0.000000e+00 : f32
    %559 = vector.broadcast %cst_127 : f32 to vector<8x128xf32>
    %560 = arith.maximumf %558, %559 : vector<8x128xf32>
    %561 = arith.truncf %560 : vector<8x128xf32> to vector<8x128xbf16>
    %c2432 = arith.constant 2432 : index
    %c0_128 = arith.constant 0 : index
    %562 = vector.load %arg2[%c2432, %c0_128] : memref<2560x128xbf16, #tpu.memory_space<vmem>>, vector<128x128xbf16>
    %cst_129 = arith.constant dense<0.000000e+00> : vector<8x128xf32>
    %563 = tpu.matmul %561, %562, %cst_129 {dimension_numbers = #tpu.dot_dimension_numbers<[1], [0], [0], [1], [0, 0, 1, 1], [], []>} : vector<8x128xbf16>, vector<128x128xbf16>, vector<8x128xf32> -> vector<8x128xf32>
    %564 = arith.addf %520, %563 : vector<8x128xf32>
    %c19 = arith.constant 19 : index
    %c0_130 = arith.constant 0 : index
    %565 = vector.load %arg3[%c19, %c0_130] : memref<40x128xf32, #tpu.memory_space<vmem>>, vector<1x128xf32>
    %566 = vector.shape_cast %565 : vector<1x128xf32> to vector<128xf32>
    %567 = vector.shape_cast %566 : vector<128xf32> to vector<1x128xf32>
    %568 = vector.broadcast %567 : vector<1x128xf32> to vector<8x128xf32>
    %569 = arith.addf %564, %568 : vector<8x128xf32>
    %c32 = arith.constant 32 : index
    %c0_131 = arith.constant 0 : index
    %570 = vector.load %arg3[%c32, %c0_131] : memref<40x128xf32, #tpu.memory_space<vmem>>, vector<1x128xf32>
    %571 = vector.shape_cast %570 : vector<1x128xf32> to vector<128xf32>
    %c33 = arith.constant 33 : index
    %c0_132 = arith.constant 0 : index
    %572 = vector.load %arg3[%c33, %c0_132] : memref<40x128xf32, #tpu.memory_space<vmem>>, vector<1x128xf32>
    %573 = vector.shape_cast %572 : vector<1x128xf32> to vector<128xf32>
    %cst_133 = arith.constant dense<0.000000e+00> : vector<8xf32>
    %574 = vector.multi_reduction <add>, %569, %cst_133 [1] : vector<8x128xf32> to vector<8xf32>
    %575 = vector.shape_cast %574 : vector<8xf32> to vector<8x1xf32>
    %cst_134 = arith.constant 3.125000e-02 : f32
    %576 = vector.broadcast %cst_134 : f32 to vector<8x1xf32>
    %577 = arith.mulf %575, %576 : vector<8x1xf32>
    %578 = vector.broadcast %577 : vector<8x1xf32> to vector<8x128xf32>
    %579 = arith.subf %569, %578 : vector<8x128xf32>
    %cst_135 = arith.constant 0.000000e+00 : f32
    %580 = vector.shape_cast %7 : vector<1x128xi1> to vector<1x128xi1>
    %581 = vector.broadcast %580 : vector<1x128xi1> to vector<8x128xi1>
    %582 = vector.broadcast %cst_135 : f32 to vector<8x128xf32>
    %583 = arith.select %581, %579, %582 : vector<8x128xi1>, vector<8x128xf32>
    %584 = arith.mulf %583, %583 : vector<8x128xf32>
    %cst_136 = arith.constant dense<0.000000e+00> : vector<8xf32>
    %585 = vector.multi_reduction <add>, %584, %cst_136 [1] : vector<8x128xf32> to vector<8xf32>
    %586 = vector.shape_cast %585 : vector<8xf32> to vector<8x1xf32>
    %cst_137 = arith.constant 0.0322580636 : f32
    %587 = vector.broadcast %cst_137 : f32 to vector<8x1xf32>
    %588 = arith.mulf %586, %587 : vector<8x1xf32>
    %589 = vector.shape_cast %571 : vector<128xf32> to vector<1x128xf32>
    %590 = vector.broadcast %589 : vector<1x128xf32> to vector<8x128xf32>
    %591 = arith.mulf %590, %583 : vector<8x128xf32>
    %592 = math.sqrt %588 : vector<8x1xf32>
    %cst_138 = arith.constant 9.99999997E-7 : f32
    %593 = vector.broadcast %cst_138 : f32 to vector<8x1xf32>
    %594 = arith.addf %592, %593 : vector<8x1xf32>
    %595 = vector.broadcast %594 : vector<8x1xf32> to vector<8x128xf32>
    %596 = arith.divf %591, %595 : vector<8x128xf32>
    %597 = vector.shape_cast %573 : vector<128xf32> to vector<1x128xf32>
    %598 = vector.broadcast %597 : vector<1x128xf32> to vector<8x128xf32>
    %599 = arith.addf %596, %598 : vector<8x128xf32>
    %c0_139 = arith.constant 0 : index
    %c0_140 = arith.constant 0 : index
    %c0_141 = arith.constant 0 : index
    %600 = vector.load %arg4[%c0_139, %c0_140, %c0_141] : memref<1x8x128xf32, #tpu.memory_space<vmem>>, vector<1x8x128xf32>
    %601 = vector.shape_cast %600 : vector<1x8x128xf32> to vector<8x128xf32>
    %602 = vector.shape_cast %599 : vector<8x128xf32> to vector<1x8x128xf32>
    tpu.vector_store %arg4[%c0_139, %c0_140, %c0_141], %602 {strides = array<i32>} : memref<1x8x128xf32, #tpu.memory_space<vmem>>, vector<1x8x128xf32>,
    return
  }
  func.func @transform_0(%arg0: i32) -> (i32, i32, i32) {
    %c0_i32 = arith.constant 0 : i32
    %c0_i32_0 = arith.constant 0 : i32
    %c0_i32_1 = arith.constant 0 : i32
    return %arg0, %c0_i32, %c0_i32_0 : i32, i32, i32
  }
  func.func @transform_1(%arg0: i32) -> (i32, i32) {
    %c0_i32 = arith.constant 0 : i32
    %c0_i32_0 = arith.constant 0 : i32
    %c0_i32_1 = arith.constant 0 : i32
    return %c0_i32, %c0_i32_0 : i32, i32
  }
  func.func @transform_2(%arg0: i32) -> (i32, i32) {
    %c0_i32 = arith.constant 0 : i32
    %c0_i32_0 = arith.constant 0 : i32
    %c0_i32_1 = arith.constant 0 : i32
    return %c0_i32, %c0_i32_0 : i32, i32
  }
  func.func @transform_3(%arg0: i32) -> (i32, i32, i32) {
    %c0_i32 = arith.constant 0 : i32
    %c0_i32_0 = arith.constant 0 : i32
    %c0_i32_1 = arith.constant 0 : i32
    return %arg0, %c0_i32, %c0_i32_0 : i32, i32, i32
  }
}

</mosaic_0001>

<llo_original>
// kernel: decoder_pallas.1
$region0: #{decoder_pallas.1}
  #allocation0 [shape = 'u32[]', space=smem, size = 0x4, offset = 0x4, fixed_abs, tag = 'smem constant byte address 0x4 - core index']
  #allocation1 [shape = 'u32[144,128]{1,0:T(1,128)}', space=vmem, size = 0x12000, scoped, tag = 'internal scratch']
  %s0 = inlined_call_operand.vmem [shape: f32[2,16,128], index: 0, kind: input, shape index: {}]
  %s1 = inlined_call_operand.hbm [shape: bf16[2560,128], index: 1, kind: input, shape index: {}]
  %s2 = inlined_call_operand.vmem [shape: f32[40,128], index: 2, kind: input, shape index: {}]
  %s3 = inlined_call_operand.hbm [shape: f32[2,8,128], index: 3, kind: output, shape index: {}]
  %s4 = sld [smem:[#allocation0]]
  $region49: #{decoder_pallas.1} parent=0
    _
  %s6 = ssub.s32 1, %s4
  %s7 = scalar_select 0, %s6, %s4
  $region1: #{decoder_pallas.1} parent=0
    #allocation2 [shape = 'u8[655360]{0}', space=vmem, size = 0xa0000, scoped, tag = 'input window, operand 1, single buffered']
    #allocation3 [shape = 's32[2]{0}', space=sflag, size = 0x8, scoped, tag = 'scoped memory for decoder_pallas.1']
    #allocation4 [shape = 's32[2]{0}', space=sflag, size = 0x8, scoped, tag = 'scoped memory for decoder_pallas.1']
    #allocation5 [shape = 'u8[8192]{0}', space=vmem, size = 0x2000, scoped, tag = 'output window, operand 0']
    %8 = vsyncpa [#allocation3], 0
    %9 = vsyncpa [#allocation4], 0
    %s10 = scalar_lea.sflag [#allocation4], 1
    %11 = vsyncpa %s10, 0
    loop: start=0, step=1, limit=4
    $region2: #{decoder_pallas.1} parent=1 // loop_pre_header
      _
    $region3: #{decoder_pallas.1} parent=1 // loop_header
      %s13 = sphi 0, %s17
      %p14 = scmp.ge.s32.totalorder %s13, 4
      %s23 = sphi 0, %s25
      %s26 = sphi 0, %s23
      %s27 = sphi 0, %s26
      %s43 = sphi 0, %s27
      %s47 = sphi 0, %s47
      %s49 = sphi 0, %s47
      %s50 = sphi 0, %s49
      %s64 = sphi 0, %s50
      %s68 = sphi 0, %s68
      %s70 = sphi 0, %s68
      %s71 = sphi 0, %s70
      %s85 = sphi 0, %s71
      %s91 = sphi 0, %s93
      %s94 = sphi 0, %s91
      %s95 = sphi 0, %s94
      %s111 = sphi 0, %s95
    $region4: #{decoder_pallas.1} parent=1 // loop_header_branch
      %16 = sbr.rel (%p14) target = $region8
    $region5: #{decoder_pallas.1} parent=1 // loop_body
      %s18 = ssub.s32 %s13, 1
      %s19 = ssub.s32 %s13, 2
      %s20 = sadd.s32 %s13, 1
      %s21 = ssub.s32 %s13, %s20
      %p22 = scmp.eq.s32.totalorder %s21, 0
      %s24 = sadd.s32 %s23, 1
      %s25 = scalar_select %p22, %s23, %s24
      %p28 = pneg %p22
      %p29 = scmp.eq.s32.totalorder %s13, 1
      %p30 = por %p28, %p29
      %p31 = scmp.ne.s32.totalorder %s23, %s26
      %p32 = scmp.eq.s32.totalorder %s13, 0
      %p33 = por %p31, %p32
      %p34 = scmp.ne.s32.totalorder %s23, %s26
      %p35 = scmp.eq.s32.totalorder %s18, 1
      %p36 = por %p34, %p35
      %p37 = scmp.ne.s32.totalorder %s26, %s27
      %p38 = scmp.eq.s32.totalorder %s18, 0
      %p39 = por %p37, %p38
      %p40 = scmp.ne.s32.totalorder %s26, %s27
      %p41 = scmp.eq.s32.totalorder %s19, 1
      %p42 = por %p40, %p41
      %p44 = scmp.ne.s32.totalorder %s27, %s43
      %p45 = scmp.eq.s32.totalorder %s19, 0
      %p46 = por %p44, %p45
      %s48 = sadd.s32 %s47, 1
      %p51 = scmp.eq.s32.totalorder %s13, 1
      %p52 = scmp.ne.s32.totalorder %s47, %s49
      %p53 = scmp.eq.s32.totalorder %s13, 0
      %p54 = por %p52, %p53
      %p55 = scmp.ne.s32.totalorder %s47, %s49
      %p56 = scmp.eq.s32.totalorder %s18, 1
      %p57 = por %p55, %p56
      %p58 = scmp.ne.s32.totalorder %s49, %s50
      %p59 = scmp.eq.s32.totalorder %s18, 0
      %p60 = por %p58, %p59
      %p61 = scmp.ne.s32.totalorder %s49, %s50
      %p62 = scmp.eq.s32.totalorder %s19, 1
      %p63 = por %p61, %p62
      %p65 = scmp.ne.s32.totalorder %s50, %s64
      %p66 = scmp.eq.s32.totalorder %s19, 0
      %p67 = por %p65, %p66
      %s69 = sadd.s32 %s68, 1
      %p72 = scmp.eq.s32.totalorder %s13, 1
      %p73 = scmp.ne.s32.totalorder %s68, %s70
      %p74 = scmp.eq.s32.totalorder %s13, 0
      %p75 = por %p73, %p74
      %p76 = scmp.ne.s32.totalorder %s68, %s70
      %p77 = scmp.eq.s32.totalorder %s18, 1
      %p78 = por %p76, %p77
      %p79 = scmp.ne.s32.totalorder %s70, %s71
      %p80 = scmp.eq.s32.totalorder %s18, 0
      %p81 = por %p79, %p80
      %p82 = scmp.ne.s32.totalorder %s70, %s71
      %p83 = scmp.eq.s32.totalorder %s19, 1
      %p84 = por %p82, %p83
      %p86 = scmp.ne.s32.totalorder %s71, %s85
      %p87 = scmp.eq.s32.totalorder %s19, 0
      %p88 = por %p86, %p87
      %s89 = ssub.s32 %s13, %s20
      %p90 = scmp.eq.s32.totalorder %s89, 0
      %s92 = sadd.s32 %s91, 1
      %s93 = scalar_select %p90, %s91, %s92
      %p96 = pneg %p90
      %p97 = scmp.eq.s32.totalorder %s13, 1
      %p98 = por %p96, %p97
      %p99 = scmp.ne.s32.totalorder %s91, %s94
      %p100 = scmp.eq.s32.totalorder %s13, 0
      %p101 = por %p99, %p100
      %p102 = scmp.ne.s32.totalorder %s91, %s94
      %p103 = scmp.eq.s32.totalorder %s18, 1
      %p104 = por %p102, %p103
      %p105 = scmp.ne.s32.totalorder %s94, %s95
      %p106 = scmp.eq.s32.totalorder %s18, 0
      %p107 = por %p105, %p106
      %p108 = scmp.ne.s32.totalorder %s94, %s95
      %p109 = scmp.eq.s32.totalorder %s19, 1
      %p110 = por %p108, %p109
      %p112 = scmp.ne.s32.totalorder %s95, %s111
      %p113 = scmp.eq.s32.totalorder %s19, 0
      %p114 = por %p112, %p113
      %p115 = scmp.le.s32.totalorder 1, %s13
      %p116 = scmp.lt.s32.totalorder %s13, 3
      %p117 = pnand %p115, %p116
      %p118 = pneg %p117
      // Predicated region
      $region9: #{decoder_pallas.1} parent=5 // pred_check
        _
      $region10: #{decoder_pallas.1} parent=5 // pred_check_branch
        %120 = sbr.rel (%p117) target = $region12
      $region11: #{decoder_pallas.1} parent=5 // pred_region
        %s121 = ssub.s32 %s13, 1
        // Predicated region
        $region13: #{decoder_pallas.1} parent=11 // pred_check
          %p122 = pneg %p60
        $region14: #{decoder_pallas.1} parent=11 // pred_check_branch
          %124 = sbr.rel (%p122) target = $region16
        $region15: #{decoder_pallas.1} parent=11 // pred_region
          %s126 = ssub.s32 20480, 20480
          %127 = vsyncadd [#allocation3], %s126
          %s128 = sshll.u32 [#allocation2], 4
          %s129 = int_to_ptr.vmem [resolvable:$true] %s128
          %134 = dma.hbm_to_vmem [thread:$0]  %s1, 20480, %s129, [#allocation3], 64, 64, 4
        $region16: #{decoder_pallas.1} parent=11 // pred_fallthru
          _
        // Predicated region
        $region17: #{decoder_pallas.1} parent=11 // pred_check
          %p135 = pneg %p81
        $region18: #{decoder_pallas.1} parent=11 // pred_check_branch
          %137 = sbr.rel (%p135) target = $region20
        $region19: #{decoder_pallas.1} parent=11 // pred_region
          _
        $region20: #{decoder_pallas.1} parent=11 // pred_fallthru
          _
      $region12: #{decoder_pallas.1} parent=5 // pred_fallthru
        _
      %p138 = scmp.lt.s32.totalorder %s13, 2
      // Predicated region
      $region21: #{decoder_pallas.1} parent=5 // pred_check
        %p139 = pneg %p138
      $region22: #{decoder_pallas.1} parent=5 // pred_check_branch
        %141 = sbr.rel (%p139) target = $region24
      $region23: #{decoder_pallas.1} parent=5 // pred_region
        // Predicated region
        $region25: #{decoder_pallas.1} parent=23 // pred_check
          %p142 = pneg %p33
        $region26: #{decoder_pallas.1} parent=23 // pred_check_branch
          %144 = sbr.rel (%p142) target = $region28
        $region27: #{decoder_pallas.1} parent=23 // pred_region
          %p145 = scmp.lt.s32.totalorder %s13, 1
          %s146 = scalar_select %p145, %s13, 1
          %s147 = smul.addr %s146, 2
          %s148 = smul.addr %s147, 8
          %s149 = scalar_lea.vmem %s0, %s148
        $region28: #{decoder_pallas.1} parent=23 // pred_fallthru
          _
      $region24: #{decoder_pallas.1} parent=5 // pred_fallthru
        _
      %p150 = scmp.le.s32.totalorder 1, %s13
      %p151 = scmp.lt.s32.totalorder %s13, 3
      %p152 = pnand %p150, %p151
      %p153 = pneg %p152
      // Predicated region
      $region29: #{decoder_pallas.1} parent=5 // pred_check
        _
      $region30: #{decoder_pallas.1} parent=5 // pred_check_branch
        %155 = sbr.rel (%p152) target = $region32
      $region31: #{decoder_pallas.1} parent=5 // pred_region
        %s156 = ssub.s32 %s13, 1
        // Predicated region
        $region33: #{decoder_pallas.1} parent=31 // pred_check
          %p157 = pneg %p60
        $region34: #{decoder_pallas.1} parent=31 // pred_check_branch
          %159 = sbr.rel (%p157) target = $region36
        $region35: #{decoder_pallas.1} parent=31 // pred_region
          %160 = dma.done [#allocation3], 20480
        $region36: #{decoder_pallas.1} parent=31 // pred_fallthru
          _
        %p161 = scmp.lt.s32.totalorder %s18, 1
        %s162 = scalar_select %p161, %s18, 1
        %s163 = smul.addr %s162, 2
        %s164 = smul.addr %s163, 8
        %s165 = scalar_lea.vmem %s0, %s164
        %p166 = pneg %p39
        %p167 = pneg %p36
        %p168 = pneg %p60
        %p169 = pneg %p57
        %p170 = pneg %p81
        %p171 = pneg %p78
        %p172 = pneg %p107
        %p173 = pneg %p104
        %s174 = sand.u32 %s94, 1
        %s175 = scalar_lea.sflag [#allocation4], %s174
        %s176 = sand.u32 %s94, 1
        %s177 = smul.addr %s176, 8
        %s178 = scalar_lea.vmem [#allocation5], %s177
        %p179 = scmp.lt.s32.totalorder %s18, 1
        %s180 = scalar_select %p179, %s18, 1
        %s181 = smul.addr %s180, 2
        %s182 = smul.addr %s181, 8
        %s183 = scalar_lea.vmem %s0, %s182
        %v185 = vld [vmem:[%s183] sm:$0xff]
        %v186 = vld [vmem:[%s183 + $0x8] sm:$0xff]
        %v187 = vpack.c.bf16 %v186, %v186
        %v188 = vlaneseq
        %v189 = vand.u32 %v188, 127
        %vm190 = vcmp.lt.s32.totalorder %v189, 32
        %v191 = vlaneseq
        %v192 = vshrl.u32 %v191, 7
        %vm193 = vcmp.ge.s32.totalorder %v192, %v189
        %v194 = vld [vmem:[%s2 + $0x14] sm:$0x1]
        %v195 = vld [vmem:[%s2 + $0x1a] sm:$0x1]
        %196 = vadd.xlane.f32.xlu0 %v185
        %v197 = vpop.xlane.xlu0 %196
        %v198 = vmul.f32 %v197, 0.03125
        %v199 = vsub.f32 %v185, %v198
        %v200 = vsel %vm190, 1, 0
        %vm201 = vcmp.eq.s32.totalorder %v200, 1
        %v202 = vsel %vm201, %v199, 0.0
        %v203 = vmul.f32 %v202, %v202
        %204 = vadd.xlane.f32.xlu0 %v203
        %v205 = vpop.xlane.xlu0 %204
        %v206 = vmul.f32 %v205, 0.032258064
        %v207 = vlaneseq
        %v208 = vshrl.u32 %v207, 7
        %v209 = vsub.s32 0, %v208
        %v210 = vrot.slane %v194, %v209
        %v211 = vmul.f32 %v210, %v202
        %v212 = vrsqrt.pop %v206
        %v213 = vmul.f32 %v206, %v212
        %vm214 = vcmp.eq.f32.partialorder %v206, inf
        %v215 = vsel %vm214, %v206, %v213
        %vm216 = vcmp.eq.f32.partialorder %v206, 0.0
        %v217 = vand.u32 %v206, 2147483648
        %v218 = vsel %vm216, %v217, %v215
        %v219 = vadd.f32 %v218, 1e-06
        %v220 = vrcp.pop %v219
        %v221 = vmul.f32 %v211, %v220
        %v222 = vlaneseq
        %v223 = vshrl.u32 %v222, 7
        %v224 = vsub.s32 0, %v223
        %v225 = vrot.slane %v195, %v224
        %v226 = vadd.f32 %v221, %v225
        %v227 = vpack.c.bf16 %v226, %v226
        %v228 = vld [vmem:[#allocation2] sm:$0xf]
        %v229 = vld [vmem:[#allocation2 + $0x4] sm:$0xf]
        %v230 = vld [vmem:[#allocation2 + $0x8] sm:$0xf]
        %v231 = vld [vmem:[#allocation2 + $0xc] sm:$0xf]
        %v232 = vld [vmem:[#allocation2 + $0x10] sm:$0xf]
        %v233 = vld [vmem:[#allocation2 + $0x14] sm:$0xf]
        %v234 = vld [vmem:[#allocation2 + $0x18] sm:$0xf]
        %v235 = vld [vmem:[#allocation2 + $0x1c] sm:$0xf]
        %v236 = vld [vmem:[#allocation2 + $0x20] sm:$0xf]
        %v237 = vld [vmem:[#allocation2 + $0x24] sm:$0xf]
        %v238 = vld [vmem:[#allocation2 + $0x28] sm:$0xf]
        %v239 = vld [vmem:[#allocation2 + $0x2c] sm:$0xf]
        %v240 = vld [vmem:[#allocation2 + $0x30] sm:$0xf]
        %v241 = vld [vmem:[#allocation2 + $0x34] sm:$0xf]
        %v242 = vld [vmem:[#allocation2 + $0x38] sm:$0xf]
        %v243 = vld [vmem:[#allocation2 + $0x3c] sm:$0xf]
        %v244 = vld [vmem:[%s2] sm:$0x1]
        %v245 = vlaneseq
        %v246 = vshrl.u32 %v245, 7
        %v247 = vsub.s32 0, %v246
        %v248 = vrot.slane %v244, %v247
        %v265 = vunpack.c.l.b16 %v228
        %v266 = vunpack.c.l.b16 %v229
        %v267 = vunpack.c.l.b16 %v230
        %v268 = vunpack.c.l.b16 %v231
        %v269 = vunpack.c.l.b16 %v232
        %v270 = vunpack.c.l.b16 %v233
        %v271 = vunpack.c.l.b16 %v234
        %v272 = vunpack.c.l.b16 %v235
        %v273 = vunpack.c.l.b16 %v236
        %v274 = vunpack.c.l.b16 %v237
        %v275 = vunpack.c.l.b16 %v238
        %v276 = vunpack.c.l.b16 %v239
        %v277 = vunpack.c.l.b16 %v240
        %v278 = vunpack.c.l.b16 %v241
        %v279 = vunpack.c.l.b16 %v242
        %v280 = vunpack.c.l.b16 %v243
        %v281 = vpack.c.b16 %v266, %v265
        %v282 = vpack.c.b16 %v268, %v267
        %v283 = vpack.c.b16 %v270, %v269
        %v284 = vpack.c.b16 %v272, %v271
        %v285 = vpack.c.b16 %v274, %v273
        %v286 = vpack.c.b16 %v276, %v275
        %v287 = vpack.c.b16 %v278, %v277
        %v288 = vpack.c.b16 %v280, %v279
        %297 = vmatprep.subr.bf16.mxu0 0
        %298 = vmatpush1.bf16.msra.mxu0 %v281
        %299 = vmatprep.subr.bf16.mxu0 0
        %300 = vmatpush1.bf16.msra.mxu0 %v282
        %301 = vmatprep.subr.bf16.mxu0 0
        %302 = vmatpush1.bf16.msra.mxu0 %v283
        %303 = vmatprep.subr.bf16.mxu0 0
        %304 = vmatpush1.bf16.msra.mxu0 %v284
        %305 = vmatprep.subr.bf16.mxu0 0
        %306 = vmatpush1.bf16.msra.mxu0 %v285
        %307 = vmatprep.subr.bf16.mxu0 0
        %308 = vmatpush1.bf16.msra.mxu0 %v286
        %309 = vmatprep.subr.bf16.mxu0 0
        %310 = vmatpush1.bf16.msra.mxu0 %v287
        %311 = vmatprep.subr.bf16.mxu0 0
        %312 = vmatpush1.bf16.msra.mxu0 %v288
        %313 = vmatprep.subr.bf16.mxu0 0
        %314 = vmatpush1.bf16.msra.mxu0 0
        %315 = vmatprep.subr.bf16.mxu0 0
        %316 = vmatpush1.bf16.msra.mxu0 0
        %317 = vmatprep.subr.bf16.mxu0 0
        %318 = vmatpush1.bf16.msra.mxu0 0
        %319 = vmatprep.subr.bf16.mxu0 0
        %320 = vmatpush1.bf16.msra.mxu0 0
        %321 = vmatprep.subr.bf16.mxu0 0
        %322 = vmatpush1.bf16.msra.mxu0 0
        %323 = vmatprep.subr.bf16.mxu0 0
        %324 = vmatpush1.bf16.msra.mxu0 0
        %325 = vmatprep.subr.bf16.mxu0 0
        %326 = vmatpush1.bf16.msra.mxu0 0
        %327 = vmatprep.subr.bf16.mxu0 0
        %328 = vmatpush1.bf16.msra.mxu0 0
        %329 = vmatprep.mubr.bf16.mxu0 0
        %330 = vmatmul.mubr.bf16.gmra.mrb[0].mxu0 %v227
        %v331 = vpop.f32.mrb[0].mxu0
        %v332 = vadd.f32 %v248, %v331
        %v333 = vpop.f32.mrb[0].mxu0
        %v334 = vpop.f32.mrb[0].mxu0
        %v335 = vpop.f32.mrb[0].mxu0
        %336 = vdwg.mxu0
        %v337 = vld [vmem:[#allocation2 + $0x40] sm:$0xf]
        %v338 = vld [vmem:[#allocation2 + $0x44] sm:$0xf]
        %v339 = vld [vmem:[#allocation2 + $0x48] sm:$0xf]
        %v340 = vld [vmem:[#allocation2 + $0x4c] sm:$0xf]
        %v341 = vld [vmem:[#allocation2 + $0x50] sm:$0xf]
        %v342 = vld [vmem:[#allocation2 + $0x54] sm:$0xf]
        %v343 = vld [vmem:[#allocation2 + $0x58] sm:$0xf]
        %v344 = vld [vmem:[#allocation2 + $0x5c] sm:$0xf]
        %v345 = vld [vmem:[#allocation2 + $0x60] sm:$0xf]
        %v346 = vld [vmem:[#allocation2 + $0x64] sm:$0xf]
        %v347 = vld [vmem:[#allocation2 + $0x68] sm:$0xf]
        %v348 = vld [vmem:[#allocation2 + $0x6c] sm:$0xf]
        %v349 = vld [vmem:[#allocation2 + $0x70] sm:$0xf]
        %v350 = vld [vmem:[#allocation2 + $0x74] sm:$0xf]
        %v351 = vld [vmem:[#allocation2 + $0x78] sm:$0xf]
        %v352 = vld [vmem:[#allocation2 + $0x7c] sm:$0xf]
        %v353 = vld [vmem:[%s2 + $0x4] sm:$0x1]
        %v354 = vlaneseq
        %v355 = vshrl.u32 %v354, 7
        %v356 = vsub.s32 0, %v355
        %v357 = vrot.slane %v353, %v356
        %v374 = vunpack.c.l.b16 %v337
        %v375 = vunpack.c.l.b16 %v338
        %v376 = vunpack.c.l.b16 %v339
        %v377 = vunpack.c.l.b16 %v340
        %v378 = vunpack.c.l.b16 %v341
        %v379 = vunpack.c.l.b16 %v342
        %v380 = vunpack.c.l.b16 %v343
        %v381 = vunpack.c.l.b16 %v344
        %v382 = vunpack.c.l.b16 %v345
        %v383 = vunpack.c.l.b16 %v346
        %v384 = vunpack.c.l.b16 %v347
        %v385 = vunpack.c.l.b16 %v348
        %v386 = vunpack.c.l.b16 %v349
        %v387 = vunpack.c.l.b16 %v350
        %v388 = vunpack.c.l.b16 %v351
        %v389 = vunpack.c.l.b16 %v352
        %v390 = vpack.c.b16 %v375, %v374
        %v391 = vpack.c.b16 %v377, %v376
        %v392 = vpack.c.b16 %v379, %v378
        %v393 = vpack.c.b16 %v381, %v380
        %v394 = vpack.c.b16 %v383, %v382
        %v395 = vpack.c.b16 %v385, %v384
        %v396 = vpack.c.b16 %v387, %v386
        %v397 = vpack.c.b16 %v389, %v388
        %406 = vmatprep.subr.bf16.mxu0 0
        %407 = vmatpush1.bf16.msra.mxu0 %v390
        %408 = vmatprep.subr.bf16.mxu0 0
        %409 = vmatpush1.bf16.msra.mxu0 %v391
        %410 = vmatprep.subr.bf16.mxu0 0
        %411 = vmatpush1.bf16.msra.mxu0 %v392
        %412 = vmatprep.subr.bf16.mxu0 0
        %413 = vmatpush1.bf16.msra.mxu0 %v393
        %414 = vmatprep.subr.bf16.mxu0 0
        %415 = vmatpush1.bf16.msra.mxu0 %v394
        %416 = vmatprep.subr.bf16.mxu0 0
        %417 = vmatpush1.bf16.msra.mxu0 %v395
        %418 = vmatprep.subr.bf16.mxu0 0
        %419 = vmatpush1.bf16.msra.mxu0 %v396
        %420 = vmatprep.subr.bf16.mxu0 0
        %421 = vmatpush1.bf16.msra.mxu0 %v397
        %422 = vmatprep.subr.bf16.mxu0 0
        %423 = vmatpush1.bf16.msra.mxu0 0
        %424 = vmatprep.subr.bf16.mxu0 0
        %425 = vmatpush1.bf16.msra.mxu0 0
        %426 = vmatprep.subr.bf16.mxu0 0
        %427 = vmatpush1.bf16.msra.mxu0 0
        %428 = vmatprep.subr.bf16.mxu0 0
        %429 = vmatpush1.bf16.msra.mxu0 0
        %430 = vmatprep.subr.bf16.mxu0 0
        %431 = vmatpush1.bf16.msra.mxu0 0
        %432 = vmatprep.subr.bf16.mxu0 0
        %433 = vmatpush1.bf16.msra.mxu0 0
        %434 = vmatprep.subr.bf16.mxu0 0
        %435 = vmatpush1.bf16.msra.mxu0 0
        %436 = vmatprep.subr.bf16.mxu0 0
        %437 = vmatpush1.bf16.msra.mxu0 0
        %438 = vmatprep.mubr.bf16.mxu0 0
        %439 = vmatmul.mubr.bf16.gmra.mrb[0].mxu0 %v227
        %v440 = vpop.f32.mrb[0].mxu0
        %v441 = vadd.f32 %v357, %v440
        %v442 = vpop.f32.mrb[0].mxu0
        %v443 = vpop.f32.mrb[0].mxu0
        %v444 = vpop.f32.mrb[0].mxu0
        %445 = vdwg.mxu0
        %v446 = vld [vmem:[#allocation2 + $0x80] sm:$0xf]
        %v447 = vld [vmem:[#allocation2 + $0x84] sm:$0xf]
        %v448 = vld [vmem:[#allocation2 + $0x88] sm:$0xf]
        %v449 = vld [vmem:[#allocation2 + $0x8c] sm:$0xf]
        %v450 = vld [vmem:[#allocation2 + $0x90] sm:$0xf]
        %v451 = vld [vmem:[#allocation2 + $0x94] sm:$0xf]
        %v452 = vld [vmem:[#allocation2 + $0x98] sm:$0xf]
        %v453 = vld [vmem:[#allocation2 + $0x9c] sm:$0xf]
        %v454 = vld [vmem:[#allocation2 + $0xa0] sm:$0xf]
        %v455 = vld [vmem:[#allocation2 + $0xa4] sm:$0xf]
        %v456 = vld [vmem:[#allocation2 + $0xa8] sm:$0xf]
        %v457 = vld [vmem:[#allocation2 + $0xac] sm:$0xf]
        %v458 = vld [vmem:[#allocation2 + $0xb0] sm:$0xf]
        %v459 = vld [vmem:[#allocation2 + $0xb4] sm:$0xf]
        %v460 = vld [vmem:[#allocation2 + $0xb8] sm:$0xf]
        %v461 = vld [vmem:[#allocation2 + $0xbc] sm:$0xf]
        %v462 = vld [vmem:[%s2 + $0x8] sm:$0x1]
        %v463 = vlaneseq
        %v464 = vshrl.u32 %v463, 7
        %v465 = vsub.s32 0, %v464
        %v466 = vrot.slane %v462, %v465
        %v483 = vunpack.c.l.b16 %v446
        %v484 = vunpack.c.l.b16 %v447
        %v485 = vunpack.c.l.b16 %v448
        %v486 = vunpack.c.l.b16 %v449
        %v487 = vunpack.c.l.b16 %v450
        %v488 = vunpack.c.l.b16 %v451
        %v489 = vunpack.c.l.b16 %v452
        %v490 = vunpack.c.l.b16 %v453
        %v491 = vunpack.c.l.b16 %v454
        %v492 = vunpack.c.l.b16 %v455
        %v493 = vunpack.c.l.b16 %v456
        %v494 = vunpack.c.l.b16 %v457
        %v495 = vunpack.c.l.b16 %v458
        %v496 = vunpack.c.l.b16 %v459
        %v497 = vunpack.c.l.b16 %v460
        %v498 = vunpack.c.l.b16 %v461
        %v499 = vpack.c.b16 %v484, %v483
        %v500 = vpack.c.b16 %v486, %v485
        %v501 = vpack.c.b16 %v488, %v487
        %v502 = vpack.c.b16 %v490, %v489
        %v503 = vpack.c.b16 %v492, %v491
        %v504 = vpack.c.b16 %v494, %v493
        %v505 = vpack.c.b16 %v496, %v495
        %v506 = vpack.c.b16 %v498, %v497
        %515 = vmatprep.subr.bf16.mxu0 0
        %516 = vmatpush1.bf16.msra.mxu0 %v499
        %517 = vmatprep.subr.bf16.mxu0 0
        %518 = vmatpush1.bf16.msra.mxu0 %v500
        %519 = vmatprep.subr.bf16.mxu0 0
        %520 = vmatpush1.bf16.msra.mxu0 %v501
        %521 = vmatprep.subr.bf16.mxu0 0
        %522 = vmatpush1.bf16.msra.mxu0 %v502
        %523 = vmatprep.subr.bf16.mxu0 0
        %524 = vmatpush1.bf16.msra.mxu0 %v503
        %525 = vmatprep.subr.bf16.mxu0 0
        %526 = vmatpush1.bf16.msra.mxu0 %v504
        %527 = vmatprep.subr.bf16.mxu0 0
        %528 = vmatpush1.bf16.msra.mxu0 %v505
        %529 = vmatprep.subr.bf16.mxu0 0
        %530 = vmatpush1.bf16.msra.mxu0 %v506
        %531 = vmatprep.subr.bf16.mxu0 0
        %532 = vmatpush1.bf16.msra.mxu0 0
        %533 = vmatprep.subr.bf16.mxu0 0
        %534 = vmatpush1.bf16.msra.mxu0 0
        %535 = vmatprep.subr.bf16.mxu0 0
        %536 = vmatpush1.bf16.msra.mxu0 0
        %537 = vmatprep.subr.bf16.mxu0 0
        %538 = vmatpush1.bf16.msra.mxu0 0
        %539 = vmatprep.subr.bf16.mxu0 0
        %540 = vmatpush1.bf16.msra.mxu0 0
        %541 = vmatprep.subr.bf16.mxu0 0
        %542 = vmatpush1.bf16.msra.mxu0 0
        %543 = vmatprep.subr.bf16.mxu0 0
        %544 = vmatpush1.bf16.msra.mxu0 0
        %545 = vmatprep.subr.bf16.mxu0 0
        %546 = vmatpush1.bf16.msra.mxu0 0
        %547 = vmatprep.mubr.bf16.mxu0 0
        %548 = vmatmul.mubr.bf16.gmra.mrb[0].mxu0 %v227
        %v549 = vpop.f32.mrb[0].mxu0
        %v550 = vadd.f32 %v466, %v549
        %v551 = vpop.f32.mrb[0].mxu0
        %v552 = vpop.f32.mrb[0].mxu0
        %v553 = vpop.f32.mrb[0].mxu0
        %554 = vdwg.mxu0
        %v555 = vpack.c.bf16 %v332, %v332
        %557 = vrot.lane.b32.xlu0 %v555, 96
        %v558 = vpop.permute.xlu0 %557
        %559 = vrot.lane.b32.xlu0 %v555, 64
        %v560 = vpop.permute.xlu0 %559
        %561 = vrot.lane.b32.xlu0 %v555, 32
        %v562 = vpop.permute.xlu0 %561
        %v563 = vpack.c.bf16 %v441, %v441
        %565 = vrot.lane.b32.xlu0 %v563, 96
        %v566 = vpop.permute.xlu0 %565
        %567 = vrot.lane.b32.xlu0 %v563, 64
        %v568 = vpop.permute.xlu0 %567
        %569 = vrot.lane.b32.xlu0 %v563, 32
        %v570 = vpop.permute.xlu0 %569
        %v571 = vpack.c.bf16 %v550, %v550
        %573 = vrot.lane.b32.xlu0 %v571, 96
        %v574 = vpop.permute.xlu0 %573
        %575 = vrot.lane.b32.xlu0 %v571, 64
        %v576 = vpop.permute.xlu0 %575
        %577 = vrot.lane.b32.xlu0 %v571, 32
        %v578 = vpop.permute.xlu0 %577
        %vm579 = vcmask 261120
        %v581 = vsel %vm579, %v555, 0
        %v584 = vsel %vm579, %v563, 0
        %586 = vmatprep.subr.bf16.mxu0 0
        %587 = vmatpush1.bf16.xpose.msra.mxu0 %v584
        %588 = vmatprep.subr.bf16.mxu0 0
        %589 = vmatpush1.bf16.xpose.msra.mxu0 0
        %590 = vmatprep.subr.bf16.mxu0 0
        %591 = vmatpush1.bf16.xpose.msra.mxu0 0
        %592 = vmatprep.subr.bf16.mxu0 0
        %593 = vmatpush1.bf16.xpose.msra.mxu0 0
        %594 = vmatprep.subr.bf16.mxu0 0
        %595 = vmatpush1.bf16.xpose.msra.mxu0 0
        %596 = vmatprep.subr.bf16.mxu0 0
        %597 = vmatpush1.bf16.xpose.msra.mxu0 0
        %598 = vmatprep.subr.bf16.mxu0 0
        %599 = vmatpush1.bf16.xpose.msra.mxu0 0
        %600 = vmatprep.subr.bf16.mxu0 0
        %601 = vmatpush1.bf16.xpose.msra.mxu0 0
        %602 = vmatprep.subr.bf16.mxu0 0
        %603 = vmatpush1.bf16.xpose.msra.mxu0 0
        %604 = vmatprep.subr.bf16.mxu0 0
        %605 = vmatpush1.bf16.xpose.msra.mxu0 0
        %606 = vmatprep.subr.bf16.mxu0 0
        %607 = vmatpush1.bf16.xpose.msra.mxu0 0
        %608 = vmatprep.subr.bf16.mxu0 0
        %609 = vmatpush1.bf16.xpose.msra.mxu0 0
        %610 = vmatprep.subr.bf16.mxu0 0
        %611 = vmatpush1.bf16.xpose.msra.mxu0 0
        %612 = vmatprep.subr.bf16.mxu0 0
        %613 = vmatpush1.bf16.xpose.msra.mxu0 0
        %614 = vmatprep.subr.bf16.mxu0 0
        %615 = vmatpush1.bf16.xpose.msra.mxu0 0
        %616 = vmatprep.subr.bf16.mxu0 0
        %617 = vmatpush1.bf16.xpose.msra.mxu0 0
        %618 = vmatprep.mubr.bf16.mxu0 0
        %619 = vmatmul.mubr.bf16.gmra.mrb[0].mxu0 %v581
        %v620 = vpop.f32.mrb[0].mxu0
        %v621 = vadd.f32 0.0, %v620
        %v622 = vpop.f32.mrb[0].mxu0
        %v623 = vpop.f32.mrb[0].mxu0
        %v624 = vpop.f32.mrb[0].mxu0
        %625 = vdwg.mxu0
        %v627 = vsel %vm579, %v558, 0
        %v630 = vsel %vm579, %v566, 0
        %632 = vmatprep.subr.bf16.mxu0 0
        %633 = vmatpush1.bf16.xpose.msra.mxu0 %v630
        %634 = vmatprep.subr.bf16.mxu0 0
        %635 = vmatpush1.bf16.xpose.msra.mxu0 0
        %636 = vmatprep.subr.bf16.mxu0 0
        %637 = vmatpush1.bf16.xpose.msra.mxu0 0
        %638 = vmatprep.subr.bf16.mxu0 0
        %639 = vmatpush1.bf16.xpose.msra.mxu0 0
        %640 = vmatprep.subr.bf16.mxu0 0
        %641 = vmatpush1.bf16.xpose.msra.mxu0 0
        %642 = vmatprep.subr.bf16.mxu0 0
        %643 = vmatpush1.bf16.xpose.msra.mxu0 0
        %644 = vmatprep.subr.bf16.mxu0 0
        %645 = vmatpush1.bf16.xpose.msra.mxu0 0
        %646 = vmatprep.subr.bf16.mxu0 0
        %647 = vmatpush1.bf16.xpose.msra.mxu0 0
        %648 = vmatprep.subr.bf16.mxu0 0
        %649 = vmatpush1.bf16.xpose.msra.mxu0 0
        %650 = vmatprep.subr.bf16.mxu0 0
        %651 = vmatpush1.bf16.xpose.msra.mxu0 0
        %652 = vmatprep.subr.bf16.mxu0 0
        %653 = vmatpush1.bf16.xpose.msra.mxu0 0
        %654 = vmatprep.subr.bf16.mxu0 0
        %655 = vmatpush1.bf16.xpose.msra.mxu0 0
        %656 = vmatprep.subr.bf16.mxu0 0
        %657 = vmatpush1.bf16.xpose.msra.mxu0 0
        %658 = vmatprep.subr.bf16.mxu0 0
        %659 = vmatpush1.bf16.xpose.msra.mxu0 0
        %660 = vmatprep.subr.bf16.mxu0 0
        %661 = vmatpush1.bf16.xpose.msra.mxu0 0
        %662 = vmatprep.subr.bf16.mxu0 0
        %663 = vmatpush1.bf16.xpose.msra.mxu0 0
        %664 = vmatprep.mubr.bf16.mxu0 0
        %665 = vmatmul.mubr.bf16.gmra.mrb[0].mxu0 %v627
        %v666 = vpop.f32.mrb[0].mxu0
        %v667 = vadd.f32 0.0, %v666
        %v668 = vpop.f32.mrb[0].mxu0
        %v669 = vpop.f32.mrb[0].mxu0
        %v670 = vpop.f32.mrb[0].mxu0
        %671 = vdwg.mxu0
        %v673 = vsel %vm579, %v560, 0
        %v676 = vsel %vm579, %v568, 0
        %678 = vmatprep.subr.bf16.mxu0 0
        %679 = vmatpush1.bf16.xpose.msra.mxu0 %v676
        %680 = vmatprep.subr.bf16.mxu0 0
        %681 = vmatpush1.bf16.xpose.msra.mxu0 0
        %682 = vmatprep.subr.bf16.mxu0 0
        %683 = vmatpush1.bf16.xpose.msra.mxu0 0
        %684 = vmatprep.subr.bf16.mxu0 0
        %685 = vmatpush1.bf16.xpose.msra.mxu0 0
        %686 = vmatprep.subr.bf16.mxu0 0
        %687 = vmatpush1.bf16.xpose.msra.mxu0 0
        %688 = vmatprep.subr.bf16.mxu0 0
        %689 = vmatpush1.bf16.xpose.msra.mxu0 0
        %690 = vmatprep.subr.bf16.mxu0 0
        %691 = vmatpush1.bf16.xpose.msra.mxu0 0
        %692 = vmatprep.subr.bf16.mxu0 0
        %693 = vmatpush1.bf16.xpose.msra.mxu0 0
        %694 = vmatprep.subr.bf16.mxu0 0
        %695 = vmatpush1.bf16.xpose.msra.mxu0 0
        %696 = vmatprep.subr.bf16.mxu0 0
        %697 = vmatpush1.bf16.xpose.msra.mxu0 0
        %698 = vmatprep.subr.bf16.mxu0 0
        %699 = vmatpush1.bf16.xpose.msra.mxu0 0
        %700 = vmatprep.subr.bf16.mxu0 0
        %701 = vmatpush1.bf16.xpose.msra.mxu0 0
        %702 = vmatprep.subr.bf16.mxu0 0
        %703 = vmatpush1.bf16.xpose.msra.mxu0 0
        %704 = vmatprep.subr.bf16.mxu0 0
        %705 = vmatpush1.bf16.xpose.msra.mxu0 0
        %706 = vmatprep.subr.bf16.mxu0 0
        %707 = vmatpush1.bf16.xpose.msra.mxu0 0
        %708 = vmatprep.subr.bf16.mxu0 0
        %709 = vmatpush1.bf16.xpose.msra.mxu0 0
        %710 = vmatprep.mubr.bf16.mxu0 0
        %711 = vmatmul.mubr.bf16.gmra.mrb[0].mxu0 %v673
        %v712 = vpop.f32.mrb[0].mxu0
        %v713 = vadd.f32 0.0, %v712
        %v714 = vpop.f32.mrb[0].mxu0
        %v715 = vpop.f32.mrb[0].mxu0
        %v716 = vpop.f32.mrb[0].mxu0
        %717 = vdwg.mxu0
        %v719 = vsel %vm579, %v562, 0
        %v722 = vsel %vm579, %v570, 0
        %724 = vmatprep.subr.bf16.mxu0 0
        %725 = vmatpush1.bf16.xpose.msra.mxu0 %v722
        %726 = vmatprep.subr.bf16.mxu0 0
        %727 = vmatpush1.bf16.xpose.msra.mxu0 0
        %728 = vmatprep.subr.bf16.mxu0 0
        %729 = vmatpush1.bf16.xpose.msra.mxu0 0
        %730 = vmatprep.subr.bf16.mxu0 0
        %731 = vmatpush1.bf16.xpose.msra.mxu0 0
        %732 = vmatprep.subr.bf16.mxu0 0
        %733 = vmatpush1.bf16.xpose.msra.mxu0 0
        %734 = vmatprep.subr.bf16.mxu0 0
        %735 = vmatpush1.bf16.xpose.msra.mxu0 0
        %736 = vmatprep.subr.bf16.mxu0 0
        %737 = vmatpush1.bf16.xpose.msra.mxu0 0
        %738 = vmatprep.subr.bf16.mxu0 0
        %739 = vmatpush1.bf16.xpose.msra.mxu0 0
        %740 = vmatprep.subr.bf16.mxu0 0
        %741 = vmatpush1.bf16.xpose.msra.mxu0 0
        %742 = vmatprep.subr.bf16.mxu0 0
        %743 = vmatpush1.bf16.xpose.msra.mxu0 0
        %744 = vmatprep.subr.bf16.mxu0 0
        %745 = vmatpush1.bf16.xpose.msra.mxu0 0
        %746 = vmatprep.subr.bf16.mxu0 0
        %747 = vmatpush1.bf16.xpose.msra.mxu0 0
        %748 = vmatprep.subr.bf16.mxu0 0
        %749 = vmatpush1.bf16.xpose.msra.mxu0 0
        %750 = vmatprep.subr.bf16.mxu0 0
        %751 = vmatpush1.bf16.xpose.msra.mxu0 0
        %752 = vmatprep.subr.bf16.mxu0 0
        %753 = vmatpush1.bf16.xpose.msra.mxu0 0
        %754 = vmatprep.subr.bf16.mxu0 0
        %755 = vmatpush1.bf16.xpose.msra.mxu0 0
        %756 = vmatprep.mubr.bf16.mxu0 0
        %757 = vmatmul.mubr.bf16.gmra.mrb[0].mxu0 %v719
        %v758 = vpop.f32.mrb[0].mxu0
        %v759 = vadd.f32 0.0, %v758
        %v760 = vpop.f32.mrb[0].mxu0
        %v761 = vpop.f32.mrb[0].mxu0
        %v762 = vpop.f32.mrb[0].mxu0
        %763 = vdwg.mxu0
        %v764 = vsel %vm193, 1, 0
        %vm765 = vcmp.eq.s32.totalorder %v764, 1
        %v766 = vsel %vm765, %v621, -1e+09
        %v767 = vsel %vm765, %v667, -1e+09
        %v768 = vsel %vm765, %v713, -1e+09
        %v769 = vsel %vm765, %v759, -1e+09
        %vm770 = vcmask 64512
        %v771 = vsel %vm770, %v766, -inf
        %772 = vmax.xlane.f32.xlu0 %v771
        %v773 = vpop.xlane.xlu0 %772
        %v774 = vsel %vm770, %v767, -inf
        %775 = vmax.xlane.f32.xlu0 %v774
        %v776 = vpop.xlane.xlu0 %775
        %v777 = vsel %vm770, %v768, -inf
        %778 = vmax.xlane.f32.xlu0 %v777
        %v779 = vpop.xlane.xlu0 %778
        %v780 = vsel %vm770, %v769, -inf
        %781 = vmax.xlane.f32.xlu0 %v780
        %v782 = vpop.xlane.xlu0 %781
        %v783 = vsub.f32 %v766, %v773
        %v784 = vsub.f32 %v767, %v776
        %v785 = vsub.f32 %v768, %v779
        %v786 = vsub.f32 %v769, %v782
        %v787 = vmul.f32 %v783, 1.442695
        %v788 = vpow.pop %v787
        %v789 = vmul.f32 %v784, 1.442695
        %v790 = vpow.pop %v789
        %v791 = vmul.f32 %v785, 1.442695
        %v792 = vpow.pop %v791
        %v793 = vmul.f32 %v786, 1.442695
        %v794 = vpow.pop %v793
        %v795 = vsel %vm770, %v788, 0.0
        %796 = vadd.xlane.f32.xlu0 %v795
        %v797 = vpop.xlane.xlu0 %796
        %v798 = vsel %vm770, %v790, 0.0
        %799 = vadd.xlane.f32.xlu0 %v798
        %v800 = vpop.xlane.xlu0 %799
        %v801 = vsel %vm770, %v792, 0.0
        %802 = vadd.xlane.f32.xlu0 %v801
        %v803 = vpop.xlane.xlu0 %802
        %v804 = vsel %vm770, %v794, 0.0
        %805 = vadd.xlane.f32.xlu0 %v804
        %v806 = vpop.xlane.xlu0 %805
        %v807 = vrcp.pop %v797
        %v808 = vrcp.pop %v800
        %v809 = vrcp.pop %v803
        %v810 = vrcp.pop %v806
        %v811 = vmul.f32 %v788, %v807
        %v812 = vmul.f32 %v790, %v808
        %v813 = vmul.f32 %v792, %v809
        %v814 = vmul.f32 %v794, %v810
        %v815 = vpack.c.bf16 %v811, %v811
        %v816 = vpack.c.bf16 %v812, %v812
        %v817 = vpack.c.bf16 %v813, %v813
        %v818 = vpack.c.bf16 %v814, %v814
        %v820 = vsel %vm770, %v815, 0
        %vm822 = vcmask 1043456
        %v824 = vsel %vm822, %v571, 0
        %826 = vmatprep.subr.bf16.mxu0 0
        %827 = vmatpush1.bf16.msra.mxu0 %v824
        %828 = vmatprep.subr.bf16.mxu0 0
        %829 = vmatpush1.bf16.msra.mxu0 0
        %830 = vmatprep.subr.bf16.mxu0 0
        %831 = vmatpush1.bf16.msra.mxu0 0
        %832 = vmatprep.subr.bf16.mxu0 0
        %833 = vmatpush1.bf16.msra.mxu0 0
        %834 = vmatprep.subr.bf16.mxu0 0
        %835 = vmatpush1.bf16.msra.mxu0 0
        %836 = vmatprep.subr.bf16.mxu0 0
        %837 = vmatpush1.bf16.msra.mxu0 0
        %838 = vmatprep.subr.bf16.mxu0 0
        %839 = vmatpush1.bf16.msra.mxu0 0
        %840 = vmatprep.subr.bf16.mxu0 0
        %841 = vmatpush1.bf16.msra.mxu0 0
        %842 = vmatprep.subr.bf16.mxu0 0
        %843 = vmatpush1.bf16.msra.mxu0 0
        %844 = vmatprep.subr.bf16.mxu0 0
        %845 = vmatpush1.bf16.msra.mxu0 0
        %846 = vmatprep.subr.bf16.mxu0 0
        %847 = vmatpush1.bf16.msra.mxu0 0
        %848 = vmatprep.subr.bf16.mxu0 0
        %849 = vmatpush1.bf16.msra.mxu0 0
        %850 = vmatprep.subr.bf16.mxu0 0
        %851 = vmatpush1.bf16.msra.mxu0 0
        %852 = vmatprep.subr.bf16.mxu0 0
        %853 = vmatpush1.bf16.msra.mxu0 0
        %854 = vmatprep.subr.bf16.mxu0 0
        %855 = vmatpush1.bf16.msra.mxu0 0
        %856 = vmatprep.subr.bf16.mxu0 0
        %857 = vmatpush1.bf16.msra.mxu0 0
        %858 = vmatprep.mubr.bf16.mxu0 0
        %859 = vmatmul.mubr.bf16.gmra.mrb[0].mxu0 %v820
        %v860 = vpop.f32.mrb[0].mxu0
        %v861 = vadd.f32 0.0, %v860
        %v862 = vpop.f32.mrb[0].mxu0
        %v863 = vpop.f32.mrb[0].mxu0
        %v864 = vpop.f32.mrb[0].mxu0
        %865 = vdwg.mxu0
        %v867 = vsel %vm770, %v816, 0
        %v870 = vsel %vm822, %v574, 0
        %872 = vmatprep.subr.bf16.mxu0 0
        %873 = vmatpush1.bf16.msra.mxu0 %v870
        %874 = vmatprep.subr.bf16.mxu0 0
        %875 = vmatpush1.bf16.msra.mxu0 0
        %876 = vmatprep.subr.bf16.mxu0 0
        %877 = vmatpush1.bf16.msra.mxu0 0
        %878 = vmatprep.subr.bf16.mxu0 0
        %879 = vmatpush1.bf16.msra.mxu0 0
        %880 = vmatprep.subr.bf16.mxu0 0
        %881 = vmatpush1.bf16.msra.mxu0 0
        %882 = vmatprep.subr.bf16.mxu0 0
        %883 = vmatpush1.bf16.msra.mxu0 0
        %884 = vmatprep.subr.bf16.mxu0 0
        %885 = vmatpush1.bf16.msra.mxu0 0
        %886 = vmatprep.subr.bf16.mxu0 0
        %887 = vmatpush1.bf16.msra.mxu0 0
        %888 = vmatprep.subr.bf16.mxu0 0
        %889 = vmatpush1.bf16.msra.mxu0 0
        %890 = vmatprep.subr.bf16.mxu0 0
        %891 = vmatpush1.bf16.msra.mxu0 0
        %892 = vmatprep.subr.bf16.mxu0 0
        %893 = vmatpush1.bf16.msra.mxu0 0
        %894 = vmatprep.subr.bf16.mxu0 0
        %895 = vmatpush1.bf16.msra.mxu0 0
        %896 = vmatprep.subr.bf16.mxu0 0
        %897 = vmatpush1.bf16.msra.mxu0 0
        %898 = vmatprep.subr.bf16.mxu0 0
        %899 = vmatpush1.bf16.msra.mxu0 0
        %900 = vmatprep.subr.bf16.mxu0 0
        %901 = vmatpush1.bf16.msra.mxu0 0
        %902 = vmatprep.subr.bf16.mxu0 0
        %903 = vmatpush1.bf16.msra.mxu0 0
        %904 = vmatprep.mubr.bf16.mxu0 0
        %905 = vmatmul.mubr.bf16.gmra.mrb[0].mxu0 %v867
        %v906 = vpop.f32.mrb[0].mxu0
        %v907 = vadd.f32 0.0, %v906
        %v908 = vpop.f32.mrb[0].mxu0
        %v909 = vpop.f32.mrb[0].mxu0
        %v910 = vpop.f32.mrb[0].mxu0
        %911 = vdwg.mxu0
        %v913 = vsel %vm770, %v817, 0
        %v916 = vsel %vm822, %v576, 0
        %918 = vmatprep.subr.bf16.mxu0 0
        %919 = vmatpush1.bf16.msra.mxu0 %v916
        %920 = vmatprep.subr.bf16.mxu0 0
        %921 = vmatpush1.bf16.msra.mxu0 0
        %922 = vmatprep.subr.bf16.mxu0 0
        %923 = vmatpush1.bf16.msra.mxu0 0
        %924 = vmatprep.subr.bf16.mxu0 0
        %925 = vmatpush1.bf16.msra.mxu0 0
        %926 = vmatprep.subr.bf16.mxu0 0
        %927 = vmatpush1.bf16.msra.mxu0 0
        %928 = vmatprep.subr.bf16.mxu0 0
        %929 = vmatpush1.bf16.msra.mxu0 0
        %930 = vmatprep.subr.bf16.mxu0 0
        %931 = vmatpush1.bf16.msra.mxu0 0
        %932 = vmatprep.subr.bf16.mxu0 0
        %933 = vmatpush1.bf16.msra.mxu0 0
        %934 = vmatprep.subr.bf16.mxu0 0
        %935 = vmatpush1.bf16.msra.mxu0 0
        %936 = vmatprep.subr.bf16.mxu0 0
        %937 = vmatpush1.bf16.msra.mxu0 0
        %938 = vmatprep.subr.bf16.mxu0 0
        %939 = vmatpush1.bf16.msra.mxu0 0
        %940 = vmatprep.subr.bf16.mxu0 0
        %941 = vmatpush1.bf16.msra.mxu0 0
        %942 = vmatprep.subr.bf16.mxu0 0
        %943 = vmatpush1.bf16.msra.mxu0 0
        %944 = vmatprep.subr.bf16.mxu0 0
        %945 = vmatpush1.bf16.msra.mxu0 0
        %946 = vmatprep.subr.bf16.mxu0 0
        %947 = vmatpush1.bf16.msra.mxu0 0
        %948 = vmatprep.subr.bf16.mxu0 0
        %949 = vmatpush1.bf16.msra.mxu0 0
        %950 = vmatprep.mubr.bf16.mxu0 0
        %951 = vmatmul.mubr.bf16.gmra.mrb[0].mxu0 %v913
        %v952 = vpop.f32.mrb[0].mxu0
        %v953 = vadd.f32 0.0, %v952
        %v954 = vpop.f32.mrb[0].mxu0
        %v955 = vpop.f32.mrb[0].mxu0
        %v956 = vpop.f32.mrb[0].mxu0
        %957 = vdwg.mxu0
        %v959 = vsel %vm770, %v818, 0
        %v962 = vsel %vm822, %v578, 0
        %964 = vmatprep.subr.bf16.mxu0 0
        %965 = vmatpush1.bf16.msra.mxu0 %v962
        %966 = vmatprep.subr.bf16.mxu0 0
        %967 = vmatpush1.bf16.msra.mxu0 0
        %968 = vmatprep.subr.bf16.mxu0 0
        %969 = vmatpush1.bf16.msra.mxu0 0
        %970 = vmatprep.subr.bf16.mxu0 0
        %971 = vmatpush1.bf16.msra.mxu0 0
        %972 = vmatprep.subr.bf16.mxu0 0
        %973 = vmatpush1.bf16.msra.mxu0 0
        %974 = vmatprep.subr.bf16.mxu0 0
        %975 = vmatpush1.bf16.msra.mxu0 0
        %976 = vmatprep.subr.bf16.mxu0 0
        %977 = vmatpush1.bf16.msra.mxu0 0
        %978 = vmatprep.subr.bf16.mxu0 0
        %979 = vmatpush1.bf16.msra.mxu0 0
        %980 = vmatprep.subr.bf16.mxu0 0
        %981 = vmatpush1.bf16.msra.mxu0 0
        %982 = vmatprep.subr.bf16.mxu0 0
        %983 = vmatpush1.bf16.msra.mxu0 0
        %984 = vmatprep.subr.bf16.mxu0 0
        %985 = vmatpush1.bf16.msra.mxu0 0
        %986 = vmatprep.subr.bf16.mxu0 0
        %987 = vmatpush1.bf16.msra.mxu0 0
        %988 = vmatprep.subr.bf16.mxu0 0
        %989 = vmatpush1.bf16.msra.mxu0 0
        %990 = vmatprep.subr.bf16.mxu0 0
        %991 = vmatpush1.bf16.msra.mxu0 0
        %992 = vmatprep.subr.bf16.mxu0 0
        %993 = vmatpush1.bf16.msra.mxu0 0
        %994 = vmatprep.subr.bf16.mxu0 0
        %995 = vmatpush1.bf16.msra.mxu0 0
        %996 = vmatprep.mubr.bf16.mxu0 0
        %997 = vmatmul.mubr.bf16.gmra.mrb[0].mxu0 %v959
        %v998 = vpop.f32.mrb[0].mxu0
        %v999 = vadd.f32 0.0, %v998
        %v1000 = vpop.f32.mrb[0].mxu0
        %v1001 = vpop.f32.mrb[0].mxu0
        %v1002 = vpop.f32.mrb[0].mxu0
        %1003 = vdwg.mxu0
        %1005 = vrot.lane.b32.xlu0 %v907, 32
        %v1006 = vpop.permute.xlu0 %1005
        %1009 = vrot.lane.b32.xlu0 %v953, 64
        %v1010 = vpop.permute.xlu0 %1009
        %1013 = vrot.lane.b32.xlu0 %v999, 96
        %v1014 = vpop.permute.xlu0 %1013
        %v1016 = vsel %vm579, %v861, %v1006
        %vm1017 = vcmask 523264
        %v1018 = vsel %vm1017, %v1016, %v1010
        %vm1019 = vcmask 785408
        %v1020 = vsel %vm1019, %v1018, %v1014
        %v1021 = vpack.c.bf16 %v1020, %v1020
        %v1022 = vld [vmem:[#allocation2 + $0xc0] sm:$0xf]
        %v1023 = vld [vmem:[#allocation2 + $0xc4] sm:$0xf]
        %v1024 = vld [vmem:[#allocation2 + $0xc8] sm:$0xf]
        %v1025 = vld [vmem:[#allocation2 + $0xcc] sm:$0xf]
        %v1026 = vld [vmem:[#allocation2 + $0xd0] sm:$0xf]
        %v1027 = vld [vmem:[#allocation2 + $0xd4] sm:$0xf]
        %v1028 = vld [vmem:[#allocation2 + $0xd8] sm:$0xf]
        %v1029 = vld [vmem:[#allocation2 + $0xdc] sm:$0xf]
        %v1030 = vld [vmem:[#allocation2 + $0xe0] sm:$0xf]
        %v1031 = vld [vmem:[#allocation2 + $0xe4] sm:$0xf]
        %v1032 = vld [vmem:[#allocation2 + $0xe8] sm:$0xf]
        %v1033 = vld [vmem:[#allocation2 + $0xec] sm:$0xf]
        %v1034 = vld [vmem:[#allocation2 + $0xf0] sm:$0xf]
        %v1035 = vld [vmem:[#allocation2 + $0xf4] sm:$0xf]
        %v1036 = vld [vmem:[#allocation2 + $0xf8] sm:$0xf]
        %v1037 = vld [vmem:[#allocation2 + $0xfc] sm:$0xf]
        %v1038 = vld [vmem:[%s2 + $0xc] sm:$0x1]
        %v1039 = vlaneseq
        %v1040 = vshrl.u32 %v1039, 7
        %v1041 = vsub.s32 0, %v1040
        %v1042 = vrot.slane %v1038, %v1041
        %v1059 = vunpack.c.l.b16 %v1022
        %v1060 = vunpack.c.l.b16 %v1023
        %v1061 = vunpack.c.l.b16 %v1024
        %v1062 = vunpack.c.l.b16 %v1025
        %v1063 = vunpack.c.l.b16 %v1026
        %v1064 = vunpack.c.l.b16 %v1027
        %v1065 = vunpack.c.l.b16 %v1028
        %v1066 = vunpack.c.l.b16 %v1029
        %v1067 = vunpack.c.l.b16 %v1030
        %v1068 = vunpack.c.l.b16 %v1031
        %v1069 = vunpack.c.l.b16 %v1032
        %v1070 = vunpack.c.l.b16 %v1033
        %v1071 = vunpack.c.l.b16 %v1034
        %v1072 = vunpack.c.l.b16 %v1035
        %v1073 = vunpack.c.l.b16 %v1036
        %v1074 = vunpack.c.l.b16 %v1037
        %v1075 = vpack.c.b16 %v1060, %v1059
        %v1076 = vpack.c.b16 %v1062, %v1061
        %v1077 = vpack.c.b16 %v1064, %v1063
        %v1078 = vpack.c.b16 %v1066, %v1065
        %v1079 = vpack.c.b16 %v1068, %v1067
        %v1080 = vpack.c.b16 %v1070, %v1069
        %v1081 = vpack.c.b16 %v1072, %v1071
        %v1082 = vpack.c.b16 %v1074, %v1073
        %1091 = vmatprep.subr.bf16.mxu0 0
        %1092 = vmatpush1.bf16.msra.mxu0 %v1075
        %1093 = vmatprep.subr.bf16.mxu0 0
        %1094 = vmatpush1.bf16.msra.mxu0 %v1076
        %1095 = vmatprep.subr.bf16.mxu0 0
        %1096 = vmatpush1.bf16.msra.mxu0 %v1077
        %1097 = vmatprep.subr.bf16.mxu0 0
        %1098 = vmatpush1.bf16.msra.mxu0 %v1078
        %1099 = vmatprep.subr.bf16.mxu0 0
        %1100 = vmatpush1.bf16.msra.mxu0 %v1079
        %1101 = vmatprep.subr.bf16.mxu0 0
        %1102 = vmatpush1.bf16.msra.mxu0 %v1080
        %1103 = vmatprep.subr.bf16.mxu0 0
        %1104 = vmatpush1.bf16.msra.mxu0 %v1081
        %1105 = vmatprep.subr.bf16.mxu0 0
        %1106 = vmatpush1.bf16.msra.mxu0 %v1082
        %1107 = vmatprep.subr.bf16.mxu0 0
        %1108 = vmatpush1.bf16.msra.mxu0 0
        %1109 = vmatprep.subr.bf16.mxu0 0
        %1110 = vmatpush1.bf16.msra.mxu0 0
        %1111 = vmatprep.subr.bf16.mxu0 0
        %1112 = vmatpush1.bf16.msra.mxu0 0
        %1113 = vmatprep.subr.bf16.mxu0 0
        %1114 = vmatpush1.bf16.msra.mxu0 0
        %1115 = vmatprep.subr.bf16.mxu0 0
        %1116 = vmatpush1.bf16.msra.mxu0 0
        %1117 = vmatprep.subr.bf16.mxu0 0
        %1118 = vmatpush1.bf16.msra.mxu0 0
        %1119 = vmatprep.subr.bf16.mxu0 0
        %1120 = vmatpush1.bf16.msra.mxu0 0
        %1121 = vmatprep.subr.bf16.mxu0 0
        %1122 = vmatpush1.bf16.msra.mxu0 0
        %1123 = vmatprep.mubr.bf16.mxu0 0
        %1124 = vmatmul.mubr.bf16.gmra.mrb[0].mxu0 %v1021
        %v1125 = vpop.f32.mrb[0].mxu0
        %v1126 = vadd.f32 %v1042, %v1125
        %v1127 = vpop.f32.mrb[0].mxu0
        %v1128 = vpop.f32.mrb[0].mxu0
        %v1129 = vpop.f32.mrb[0].mxu0
        %1130 = vdwg.mxu0
        %v1131 = vadd.f32 %v185, %v1126
        %v1132 = vld [vmem:[%s2 + $0x15] sm:$0x1]
        %v1133 = vld [vmem:[%s2 + $0x1b] sm:$0x1]
        %1134 = vadd.xlane.f32.xlu0 %v1131
        %v1135 = vpop.xlane.xlu0 %1134
        %v1136 = vmul.f32 %v1135, 0.03125
        %v1137 = vsub.f32 %v1131, %v1136
        %v1138 = vsel %vm201, %v1137, 0.0
        %v1139 = vmul.f32 %v1138, %v1138
        %1140 = vadd.xlane.f32.xlu0 %v1139
        %v1141 = vpop.xlane.xlu0 %1140
        %v1142 = vmul.f32 %v1141, 0.032258064
        %v1143 = vlaneseq
        %v1144 = vshrl.u32 %v1143, 7
        %v1145 = vsub.s32 0, %v1144
        %v1146 = vrot.slane %v1132, %v1145
        %v1147 = vmul.f32 %v1146, %v1138
        %v1148 = vrsqrt.pop %v1142
        %v1149 = vmul.f32 %v1142, %v1148
        %vm1150 = vcmp.eq.f32.partialorder %v1142, inf
        %v1151 = vsel %vm1150, %v1142, %v1149
        %vm1152 = vcmp.eq.f32.partialorder %v1142, 0.0
        %v1153 = vand.u32 %v1142, 2147483648
        %v1154 = vsel %vm1152, %v1153, %v1151
        %v1155 = vadd.f32 %v1154, 1e-06
        %v1156 = vrcp.pop %v1155
        %v1157 = vmul.f32 %v1147, %v1156
        %v1158 = vlaneseq
        %v1159 = vshrl.u32 %v1158, 7
        %v1160 = vsub.s32 0, %v1159
        %v1161 = vrot.slane %v1133, %v1160
        %v1162 = vadd.f32 %v1157, %v1161
        %v1163 = vpack.c.bf16 %v1162, %v1162
        %v1164 = vld [vmem:[#allocation2 + $0x100] sm:$0xf]
        %v1165 = vld [vmem:[#allocation2 + $0x104] sm:$0xf]
        %v1166 = vld [vmem:[#allocation2 + $0x108] sm:$0xf]
        %v1167 = vld [vmem:[#allocation2 + $0x10c] sm:$0xf]
        %v1168 = vld [vmem:[#allocation2 + $0x110] sm:$0xf]
        %v1169 = vld [vmem:[#allocation2 + $0x114] sm:$0xf]
        %v1170 = vld [vmem:[#allocation2 + $0x118] sm:$0xf]
        %v1171 = vld [vmem:[#allocation2 + $0x11c] sm:$0xf]
        %v1172 = vld [vmem:[#allocation2 + $0x120] sm:$0xf]
        %v1173 = vld [vmem:[#allocation2 + $0x124] sm:$0xf]
        %v1174 = vld [vmem:[#allocation2 + $0x128] sm:$0xf]
        %v1175 = vld [vmem:[#allocation2 + $0x12c] sm:$0xf]
        %v1176 = vld [vmem:[#allocation2 + $0x130] sm:$0xf]
        %v1177 = vld [vmem:[#allocation2 + $0x134] sm:$0xf]
        %v1178 = vld [vmem:[#allocation2 + $0x138] sm:$0xf]
        %v1179 = vld [vmem:[#allocation2 + $0x13c] sm:$0xf]
        %v1180 = vld [vmem:[%s2 + $0x1] sm:$0x1]
        %v1181 = vlaneseq
        %v1182 = vshrl.u32 %v1181, 7
        %v1183 = vsub.s32 0, %v1182
        %v1184 = vrot.slane %v1180, %v1183
        %v1201 = vunpack.c.l.b16 %v1164
        %v1202 = vunpack.c.l.b16 %v1165
        %v1203 = vunpack.c.l.b16 %v1166
        %v1204 = vunpack.c.l.b16 %v1167
        %v1205 = vunpack.c.l.b16 %v1168
        %v1206 = vunpack.c.l.b16 %v1169
        %v1207 = vunpack.c.l.b16 %v1170
        %v1208 = vunpack.c.l.b16 %v1171
        %v1209 = vunpack.c.l.b16 %v1172
        %v1210 = vunpack.c.l.b16 %v1173
        %v1211 = vunpack.c.l.b16 %v1174
        %v1212 = vunpack.c.l.b16 %v1175
        %v1213 = vunpack.c.l.b16 %v1176
        %v1214 = vunpack.c.l.b16 %v1177
        %v1215 = vunpack.c.l.b16 %v1178
        %v1216 = vunpack.c.l.b16 %v1179
        %v1217 = vpack.c.b16 %v1202, %v1201
        %v1218 = vpack.c.b16 %v1204, %v1203
        %v1219 = vpack.c.b16 %v1206, %v1205
        %v1220 = vpack.c.b16 %v1208, %v1207
        %v1221 = vpack.c.b16 %v1210, %v1209
        %v1222 = vpack.c.b16 %v1212, %v1211
        %v1223 = vpack.c.b16 %v1214, %v1213
        %v1224 = vpack.c.b16 %v1216, %v1215
        %1233 = vmatprep.subr.bf16.mxu0 0
        %1234 = vmatpush1.bf16.msra.mxu0 %v1217
        %1235 = vmatprep.subr.bf16.mxu0 0
        %1236 = vmatpush1.bf16.msra.mxu0 %v1218
        %1237 = vmatprep.subr.bf16.mxu0 0
        %1238 = vmatpush1.bf16.msra.mxu0 %v1219
        %1239 = vmatprep.subr.bf16.mxu0 0
        %1240 = vmatpush1.bf16.msra.mxu0 %v1220
        %1241 = vmatprep.subr.bf16.mxu0 0
        %1242 = vmatpush1.bf16.msra.mxu0 %v1221
        %1243 = vmatprep.subr.bf16.mxu0 0
        %1244 = vmatpush1.bf16.msra.mxu0 %v1222
        %1245 = vmatprep.subr.bf16.mxu0 0
        %1246 = vmatpush1.bf16.msra.mxu0 %v1223
        %1247 = vmatprep.subr.bf16.mxu0 0
        %1248 = vmatpush1.bf16.msra.mxu0 %v1224
        %1249 = vmatprep.subr.bf16.mxu0 0
        %1250 = vmatpush1.bf16.msra.mxu0 0
        %1251 = vmatprep.subr.bf16.mxu0 0
        %1252 = vmatpush1.bf16.msra.mxu0 0
        %1253 = vmatprep.subr.bf16.mxu0 0
        %1254 = vmatpush1.bf16.msra.mxu0 0
        %1255 = vmatprep.subr.bf16.mxu0 0
        %1256 = vmatpush1.bf16.msra.mxu0 0
        %1257 = vmatprep.subr.bf16.mxu0 0
        %1258 = vmatpush1.bf16.msra.mxu0 0
        %1259 = vmatprep.subr.bf16.mxu0 0
        %1260 = vmatpush1.bf16.msra.mxu0 0
        %1261 = vmatprep.subr.bf16.mxu0 0
        %1262 = vmatpush1.bf16.msra.mxu0 0
        %1263 = vmatprep.subr.bf16.mxu0 0
        %1264 = vmatpush1.bf16.msra.mxu0 0
        %1265 = vmatprep.mubr.bf16.mxu0 0
        %1266 = vmatmul.mubr.bf16.gmra.mrb[0].mxu0 %v1163
        %v1267 = vpop.f32.mrb[0].mxu0
        %v1268 = vadd.f32 %v1184, %v1267
        %v1269 = vpop.f32.mrb[0].mxu0
        %v1270 = vpop.f32.mrb[0].mxu0
        %v1271 = vpop.f32.mrb[0].mxu0
        %1272 = vdwg.mxu0
        %v1273 = vld [vmem:[#allocation2 + $0x140] sm:$0xf]
        %v1274 = vld [vmem:[#allocation2 + $0x144] sm:$0xf]
        %v1275 = vld [vmem:[#allocation2 + $0x148] sm:$0xf]
        %v1276 = vld [vmem:[#allocation2 + $0x14c] sm:$0xf]
        %v1277 = vld [vmem:[#allocation2 + $0x150] sm:$0xf]
        %v1278 = vld [vmem:[#allocation2 + $0x154] sm:$0xf]
        %v1279 = vld [vmem:[#allocation2 + $0x158] sm:$0xf]
        %v1280 = vld [vmem:[#allocation2 + $0x15c] sm:$0xf]
        %v1281 = vld [vmem:[#allocation2 + $0x160] sm:$0xf]
        %v1282 = vld [vmem:[#allocation2 + $0x164] sm:$0xf]
        %v1283 = vld [vmem:[#allocation2 + $0x168] sm:$0xf]
        %v1284 = vld [vmem:[#allocation2 + $0x16c] sm:$0xf]
        %v1285 = vld [vmem:[#allocation2 + $0x170] sm:$0xf]
        %v1286 = vld [vmem:[#allocation2 + $0x174] sm:$0xf]
        %v1287 = vld [vmem:[#allocation2 + $0x178] sm:$0xf]
        %v1288 = vld [vmem:[#allocation2 + $0x17c] sm:$0xf]
        %v1289 = vld [vmem:[%s2 + $0x5] sm:$0x1]
        %v1290 = vlaneseq
        %v1291 = vshrl.u32 %v1290, 7
        %v1292 = vsub.s32 0, %v1291
        %v1293 = vrot.slane %v1289, %v1292
        %v1310 = vunpack.c.l.b16 %v1273
        %v1311 = vunpack.c.l.b16 %v1274
        %v1312 = vunpack.c.l.b16 %v1275
        %v1313 = vunpack.c.l.b16 %v1276
        %v1314 = vunpack.c.l.b16 %v1277
        %v1315 = vunpack.c.l.b16 %v1278
        %v1316 = vunpack.c.l.b16 %v1279
        %v1317 = vunpack.c.l.b16 %v1280
        %v1318 = vunpack.c.l.b16 %v1281
        %v1319 = vunpack.c.l.b16 %v1282
        %v1320 = vunpack.c.l.b16 %v1283
        %v1321 = vunpack.c.l.b16 %v1284
        %v1322 = vunpack.c.l.b16 %v1285
        %v1323 = vunpack.c.l.b16 %v1286
        %v1324 = vunpack.c.l.b16 %v1287
        %v1325 = vunpack.c.l.b16 %v1288
        %v1326 = vpack.c.b16 %v1311, %v1310
        %v1327 = vpack.c.b16 %v1313, %v1312
        %v1328 = vpack.c.b16 %v1315, %v1314
        %v1329 = vpack.c.b16 %v1317, %v1316
        %v1330 = vpack.c.b16 %v1319, %v1318
        %v1331 = vpack.c.b16 %v1321, %v1320
        %v1332 = vpack.c.b16 %v1323, %v1322
        %v1333 = vpack.c.b16 %v1325, %v1324
        %1342 = vmatprep.subr.bf16.mxu0 0
        %1343 = vmatpush1.bf16.msra.mxu0 %v1326
        %1344 = vmatprep.subr.bf16.mxu0 0
        %1345 = vmatpush1.bf16.msra.mxu0 %v1327
        %1346 = vmatprep.subr.bf16.mxu0 0
        %1347 = vmatpush1.bf16.msra.mxu0 %v1328
        %1348 = vmatprep.subr.bf16.mxu0 0
        %1349 = vmatpush1.bf16.msra.mxu0 %v1329
        %1350 = vmatprep.subr.bf16.mxu0 0
        %1351 = vmatpush1.bf16.msra.mxu0 %v1330
        %1352 = vmatprep.subr.bf16.mxu0 0
        %1353 = vmatpush1.bf16.msra.mxu0 %v1331
        %1354 = vmatprep.subr.bf16.mxu0 0
        %1355 = vmatpush1.bf16.msra.mxu0 %v1332
        %1356 = vmatprep.subr.bf16.mxu0 0
        %1357 = vmatpush1.bf16.msra.mxu0 %v1333
        %1358 = vmatprep.subr.bf16.mxu0 0
        %1359 = vmatpush1.bf16.msra.mxu0 0
        %1360 = vmatprep.subr.bf16.mxu0 0
        %1361 = vmatpush1.bf16.msra.mxu0 0
        %1362 = vmatprep.subr.bf16.mxu0 0
        %1363 = vmatpush1.bf16.msra.mxu0 0
        %1364 = vmatprep.subr.bf16.mxu0 0
        %1365 = vmatpush1.bf16.msra.mxu0 0
        %1366 = vmatprep.subr.bf16.mxu0 0
        %1367 = vmatpush1.bf16.msra.mxu0 0
        %1368 = vmatprep.subr.bf16.mxu0 0
        %1369 = vmatpush1.bf16.msra.mxu0 0
        %1370 = vmatprep.subr.bf16.mxu0 0
        %1371 = vmatpush1.bf16.msra.mxu0 0
        %1372 = vmatprep.subr.bf16.mxu0 0
        %1373 = vmatpush1.bf16.msra.mxu0 0
        %1374 = vmatprep.mubr.bf16.mxu0 0
        %1375 = vmatmul.mubr.bf16.gmra.mrb[0].mxu0 %v187
        %v1376 = vpop.f32.mrb[0].mxu0
        %v1377 = vadd.f32 %v1293, %v1376
        %v1378 = vpop.f32.mrb[0].mxu0
        %v1379 = vpop.f32.mrb[0].mxu0
        %v1380 = vpop.f32.mrb[0].mxu0
        %1381 = vdwg.mxu0
        %v1382 = vld [vmem:[#allocation2 + $0x180] sm:$0xf]
        %v1383 = vld [vmem:[#allocation2 + $0x184] sm:$0xf]
        %v1384 = vld [vmem:[#allocation2 + $0x188] sm:$0xf]
        %v1385 = vld [vmem:[#allocation2 + $0x18c] sm:$0xf]
        %v1386 = vld [vmem:[#allocation2 + $0x190] sm:$0xf]
        %v1387 = vld [vmem:[#allocation2 + $0x194] sm:$0xf]
        %v1388 = vld [vmem:[#allocation2 + $0x198] sm:$0xf]
        %v1389 = vld [vmem:[#allocation2 + $0x19c] sm:$0xf]
        %v1390 = vld [vmem:[#allocation2 + $0x1a0] sm:$0xf]
        %v1391 = vld [vmem:[#allocation2 + $0x1a4] sm:$0xf]
        %v1392 = vld [vmem:[#allocation2 + $0x1a8] sm:$0xf]
        %v1393 = vld [vmem:[#allocation2 + $0x1ac] sm:$0xf]
        %v1394 = vld [vmem:[#allocation2 + $0x1b0] sm:$0xf]
        %v1395 = vld [vmem:[#allocation2 + $0x1b4] sm:$0xf]
        %v1396 = vld [vmem:[#allocation2 + $0x1b8] sm:$0xf]
        %v1397 = vld [vmem:[#allocation2 + $0x1bc] sm:$0xf]
        %v1398 = vld [vmem:[%s2 + $0x9] sm:$0x1]
        %v1399 = vlaneseq
        %v1400 = vshrl.u32 %v1399, 7
        %v1401 = vsub.s32 0, %v1400
        %v1402 = vrot.slane %v1398, %v1401
        %v1419 = vunpack.c.l.b16 %v1382
        %v1420 = vunpack.c.l.b16 %v1383
        %v1421 = vunpack.c.l.b16 %v1384
        %v1422 = vunpack.c.l.b16 %v1385
        %v1423 = vunpack.c.l.b16 %v1386
        %v1424 = vunpack.c.l.b16 %v1387
        %v1425 = vunpack.c.l.b16 %v1388
        %v1426 = vunpack.c.l.b16 %v1389
        %v1427 = vunpack.c.l.b16 %v1390
        %v1428 = vunpack.c.l.b16 %v1391
        %v1429 = vunpack.c.l.b16 %v1392
        %v1430 = vunpack.c.l.b16 %v1393
        %v1431 = vunpack.c.l.b16 %v1394
        %v1432 = vunpack.c.l.b16 %v1395
        %v1433 = vunpack.c.l.b16 %v1396
        %v1434 = vunpack.c.l.b16 %v1397
        %v1435 = vpack.c.b16 %v1420, %v1419
        %v1436 = vpack.c.b16 %v1422, %v1421
        %v1437 = vpack.c.b16 %v1424, %v1423
        %v1438 = vpack.c.b16 %v1426, %v1425
        %v1439 = vpack.c.b16 %v1428, %v1427
        %v1440 = vpack.c.b16 %v1430, %v1429
        %v1441 = vpack.c.b16 %v1432, %v1431
        %v1442 = vpack.c.b16 %v1434, %v1433
        %1451 = vmatprep.subr.bf16.mxu0 0
        %1452 = vmatpush1.bf16.msra.mxu0 %v1435
        %1453 = vmatprep.subr.bf16.mxu0 0
        %1454 = vmatpush1.bf16.msra.mxu0 %v1436
        %1455 = vmatprep.subr.bf16.mxu0 0
        %1456 = vmatpush1.bf16.msra.mxu0 %v1437
        %1457 = vmatprep.subr.bf16.mxu0 0
        %1458 = vmatpush1.bf16.msra.mxu0 %v1438
        %1459 = vmatprep.subr.bf16.mxu0 0
        %1460 = vmatpush1.bf16.msra.mxu0 %v1439
        %1461 = vmatprep.subr.bf16.mxu0 0
        %1462 = vmatpush1.bf16.msra.mxu0 %v1440
        %1463 = vmatprep.subr.bf16.mxu0 0
        %1464 = vmatpush1.bf16.msra.mxu0 %v1441
        %1465 = vmatprep.subr.bf16.mxu0 0
        %1466 = vmatpush1.bf16.msra.mxu0 %v1442
        %1467 = vmatprep.subr.bf16.mxu0 0
        %1468 = vmatpush1.bf16.msra.mxu0 0
        %1469 = vmatprep.subr.bf16.mxu0 0
        %1470 = vmatpush1.bf16.msra.mxu0 0
        %1471 = vmatprep.subr.bf16.mxu0 0
        %1472 = vmatpush1.bf16.msra.mxu0 0
        %1473 = vmatprep.subr.bf16.mxu0 0
        %1474 = vmatpush1.bf16.msra.mxu0 0
        %1475 = vmatprep.subr.bf16.mxu0 0
        %1476 = vmatpush1.bf16.msra.mxu0 0
        %1477 = vmatprep.subr.bf16.mxu0 0
        %1478 = vmatpush1.bf16.msra.mxu0 0
        %1479 = vmatprep.subr.bf16.mxu0 0
        %1480 = vmatpush1.bf16.msra.mxu0 0
        %1481 = vmatprep.subr.bf16.mxu0 0
        %1482 = vmatpush1.bf16.msra.mxu0 0
        %1483 = vmatprep.mubr.bf16.mxu0 0
        %1484 = vmatmul.mubr.bf16.gmra.mrb[0].mxu0 %v187
        %v1485 = vpop.f32.mrb[0].mxu0
        %v1486 = vadd.f32 %v1402, %v1485
        %v1487 = vpop.f32.mrb[0].mxu0
        %v1488 = vpop.f32.mrb[0].mxu0
        %v1489 = vpop.f32.mrb[0].mxu0
        %1490 = vdwg.mxu0
        %v1491 = vpack.c.bf16 %v1268, %v1268
        %1493 = vrot.lane.b32.xlu0 %v1491, 96
        %v1494 = vpop.permute.xlu0 %1493
        %1495 = vrot.lane.b32.xlu0 %v1491, 64
        %v1496 = vpop.permute.xlu0 %1495
        %1497 = vrot.lane.b32.xlu0 %v1491, 32
        %v1498 = vpop.permute.xlu0 %1497
        %v1499 = vpack.c.bf16 %v1377, %v1377
        %1501 = vrot.lane.b32.xlu0 %v1499, 96
        %v1502 = vpop.permute.xlu0 %1501
        %1503 = vrot.lane.b32.xlu0 %v1499, 64
        %v1504 = vpop.permute.xlu0 %1503
        %1505 = vrot.lane.b32.xlu0 %v1499, 32
        %v1506 = vpop.permute.xlu0 %1505
        %v1507 = vpack.c.bf16 %v1486, %v1486
        %1509 = vrot.lane.b32.xlu0 %v1507, 96
        %v1510 = vpop.permute.xlu0 %1509
        %1511 = vrot.lane.b32.xlu0 %v1507, 64
        %v1512 = vpop.permute.xlu0 %1511
        %1513 = vrot.lane.b32.xlu0 %v1507, 32
        %v1514 = vpop.permute.xlu0 %1513
        %v1516 = vsel %vm579, %v1491, 0
        %v1519 = vsel %vm579, %v1499, 0
        %1521 = vmatprep.subr.bf16.mxu0 0
        %1522 = vmatpush1.bf16.xpose.msra.mxu0 %v1519
        %1523 = vmatprep.subr.bf16.mxu0 0
        %1524 = vmatpush1.bf16.xpose.msra.mxu0 0
        %1525 = vmatprep.subr.bf16.mxu0 0
        %1526 = vmatpush1.bf16.xpose.msra.mxu0 0
        %1527 = vmatprep.subr.bf16.mxu0 0
        %1528 = vmatpush1.bf16.xpose.msra.mxu0 0
        %1529 = vmatprep.subr.bf16.mxu0 0
        %1530 = vmatpush1.bf16.xpose.msra.mxu0 0
        %1531 = vmatprep.subr.bf16.mxu0 0
        %1532 = vmatpush1.bf16.xpose.msra.mxu0 0
        %1533 = vmatprep.subr.bf16.mxu0 0
        %1534 = vmatpush1.bf16.xpose.msra.mxu0 0
        %1535 = vmatprep.subr.bf16.mxu0 0
        %1536 = vmatpush1.bf16.xpose.msra.mxu0 0
        %1537 = vmatprep.subr.bf16.mxu0 0
        %1538 = vmatpush1.bf16.xpose.msra.mxu0 0
        %1539 = vmatprep.subr.bf16.mxu0 0
        %1540 = vmatpush1.bf16.xpose.msra.mxu0 0
        %1541 = vmatprep.subr.bf16.mxu0 0
        %1542 = vmatpush1.bf16.xpose.msra.mxu0 0
        %1543 = vmatprep.subr.bf16.mxu0 0
        %1544 = vmatpush1.bf16.xpose.msra.mxu0 0
        %1545 = vmatprep.subr.bf16.mxu0 0
        %1546 = vmatpush1.bf16.xpose.msra.mxu0 0
        %1547 = vmatprep.subr.bf16.mxu0 0
        %1548 = vmatpush1.bf16.xpose.msra.mxu0 0
        %1549 = vmatprep.subr.bf16.mxu0 0
        %1550 = vmatpush1.bf16.xpose.msra.mxu0 0
        %1551 = vmatprep.subr.bf16.mxu0 0
        %1552 = vmatpush1.bf16.xpose.msra.mxu0 0
        %1553 = vmatprep.mubr.bf16.mxu0 0
        %1554 = vmatmul.mubr.bf16.gmra.mrb[0].mxu0 %v1516
        %v1555 = vpop.f32.mrb[0].mxu0
        %v1556 = vadd.f32 0.0, %v1555
        %v1557 = vpop.f32.mrb[0].mxu0
        %v1558 = vpop.f32.mrb[0].mxu0
        %v1559 = vpop.f32.mrb[0].mxu0
        %1560 = vdwg.mxu0
        %v1562 = vsel %vm579, %v1494, 0
        %v1565 = vsel %vm579, %v1502, 0
        %1567 = vmatprep.subr.bf16.mxu0 0
        %1568 = vmatpush1.bf16.xpose.msra.mxu0 %v1565
        %1569 = vmatprep.subr.bf16.mxu0 0
        %1570 = vmatpush1.bf16.xpose.msra.mxu0 0
        %1571 = vmatprep.subr.bf16.mxu0 0
        %1572 = vmatpush1.bf16.xpose.msra.mxu0 0
        %1573 = vmatprep.subr.bf16.mxu0 0
        %1574 = vmatpush1.bf16.xpose.msra.mxu0 0
        %1575 = vmatprep.subr.bf16.mxu0 0
        %1576 = vmatpush1.bf16.xpose.msra.mxu0 0
        %1577 = vmatprep.subr.bf16.mxu0 0
        %1578 = vmatpush1.bf16.xpose.msra.mxu0 0
        %1579 = vmatprep.subr.bf16.mxu0 0
        %1580 = vmatpush1.bf16.xpose.msra.mxu0 0
        %1581 = vmatprep.subr.bf16.mxu0 0
        %1582 = vmatpush1.bf16.xpose.msra.mxu0 0
        %1583 = vmatprep.subr.bf16.mxu0 0
        %1584 = vmatpush1.bf16.xpose.msra.mxu0 0
        %1585 = vmatprep.subr.bf16.mxu0 0
        %1586 = vmatpush1.bf16.xpose.msra.mxu0 0
        %1587 = vmatprep.subr.bf16.mxu0 0
        %1588 = vmatpush1.bf16.xpose.msra.mxu0 0
        %1589 = vmatprep.subr.bf16.mxu0 0
        %1590 = vmatpush1.bf16.xpose.msra.mxu0 0
        %1591 = vmatprep.subr.bf16.mxu0 0
        %1592 = vmatpush1.bf16.xpose.msra.mxu0 0
        %1593 = vmatprep.subr.bf16.mxu0 0
        %1594 = vmatpush1.bf16.xpose.msra.mxu0 0
        %1595 = vmatprep.subr.bf16.mxu0 0
        %1596 = vmatpush1.bf16.xpose.msra.mxu0 0
        %1597 = vmatprep.subr.bf16.mxu0 0
        %1598 = vmatpush1.bf16.xpose.msra.mxu0 0
        %1599 = vmatprep.mubr.bf16.mxu0 0
        %1600 = vmatmul.mubr.bf16.gmra.mrb[0].mxu0 %v1562
        %v1601 = vpop.f32.mrb[0].mxu0
        %v1602 = vadd.f32 0.0, %v1601
        %v1603 = vpop.f32.mrb[0].mxu0
        %v1604 = vpop.f32.mrb[0].mxu0
        %v1605 = vpop.f32.mrb[0].mxu0
        %1606 = vdwg.mxu0
        %v1608 = vsel %vm579, %v1496, 0
        %v1611 = vsel %vm579, %v1504, 0
        %1613 = vmatprep.subr.bf16.mxu0 0
        %1614 = vmatpush1.bf16.xpose.msra.mxu0 %v1611
        %1615 = vmatprep.subr.bf16.mxu0 0
        %1616 = vmatpush1.bf16.xpose.msra.mxu0 0
        %1617 = vmatprep.subr.bf16.mxu0 0
        %1618 = vmatpush1.bf16.xpose.msra.mxu0 0
        %1619 = vmatprep.subr.bf16.mxu0 0
        %1620 = vmatpush1.bf16.xpose.msra.mxu0 0
        %1621 = vmatprep.subr.bf16.mxu0 0
        %1622 = vmatpush1.bf16.xpose.msra.mxu0 0
        %1623 = vmatprep.subr.bf16.mxu0 0
        %1624 = vmatpush1.bf16.xpose.msra.mxu0 0
        %1625 = vmatprep.subr.bf16.mxu0 0
        %1626 = vmatpush1.bf16.xpose.msra.mxu0 0
        %1627 = vmatprep.subr.bf16.mxu0 0
        %1628 = vmatpush1.bf16.xpose.msra.mxu0 0
        %1629 = vmatprep.subr.bf16.mxu0 0
        %1630 = vmatpush1.bf16.xpose.msra.mxu0 0
        %1631 = vmatprep.subr.bf16.mxu0 0
        %1632 = vmatpush1.bf16.xpose.msra.mxu0 0
        %1633 = vmatprep.subr.bf16.mxu0 0
        %1634 = vmatpush1.bf16.xpose.msra.mxu0 0
        %1635 = vmatprep.subr.bf16.mxu0 0
        %1636 = vmatpush1.bf16.xpose.msra.mxu0 0
        %1637 = vmatprep.subr.bf16.mxu0 0
        %1638 = vmatpush1.bf16.xpose.msra.mxu0 0
        %1639 = vmatprep.subr.bf16.mxu0 0
        %1640 = vmatpush1.bf16.xpose.msra.mxu0 0
        %1641 = vmatprep.subr.bf16.mxu0 0
        %1642 = vmatpush1.bf16.xpose.msra.mxu0 0
        %1643 = vmatprep.subr.bf16.mxu0 0
        %1644 = vmatpush1.bf16.xpose.msra.mxu0 0
        %1645 = vmatprep.mubr.bf16.mxu0 0
        %1646 = vmatmul.mubr.bf16.gmra.mrb[0].mxu0 %v1608
        %v1647 = vpop.f32.mrb[0].mxu0
        %v1648 = vadd.f32 0.0, %v1647
        %v1649 = vpop.f32.mrb[0].mxu0
        %v1650 = vpop.f32.mrb[0].mxu0
        %v1651 = vpop.f32.mrb[0].mxu0
        %1652 = vdwg.mxu0
        %v1654 = vsel %vm579, %v1498, 0
        %v1657 = vsel %vm579, %v1506, 0
        %1659 = vmatprep.subr.bf16.mxu0 0
        %1660 = vmatpush1.bf16.xpose.msra.mxu0 %v1657
        %1661 = vmatprep.subr.bf16.mxu0 0
        %1662 = vmatpush1.bf16.xpose.msra.mxu0 0
        %1663 = vmatprep.subr.bf16.mxu0 0
        %1664 = vmatpush1.bf16.xpose.msra.mxu0 0
        %1665 = vmatprep.subr.bf16.mxu0 0
        %1666 = vmatpush1.bf16.xpose.msra.mxu0 0
        %1667 = vmatprep.subr.bf16.mxu0 0
        %1668 = vmatpush1.bf16.xpose.msra.mxu0 0
        %1669 = vmatprep.subr.bf16.mxu0 0
        %1670 = vmatpush1.bf16.xpose.msra.mxu0 0
        %1671 = vmatprep.subr.bf16.mxu0 0
        %1672 = vmatpush1.bf16.xpose.msra.mxu0 0
        %1673 = vmatprep.subr.bf16.mxu0 0
        %1674 = vmatpush1.bf16.xpose.msra.mxu0 0
        %1675 = vmatprep.subr.bf16.mxu0 0
        %1676 = vmatpush1.bf16.xpose.msra.mxu0 0
        %1677 = vmatprep.subr.bf16.mxu0 0
        %1678 = vmatpush1.bf16.xpose.msra.mxu0 0
        %1679 = vmatprep.subr.bf16.mxu0 0
        %1680 = vmatpush1.bf16.xpose.msra.mxu0 0
        %1681 = vmatprep.subr.bf16.mxu0 0
        %1682 = vmatpush1.bf16.xpose.msra.mxu0 0
        %1683 = vmatprep.subr.bf16.mxu0 0
        %1684 = vmatpush1.bf16.xpose.msra.mxu0 0
        %1685 = vmatprep.subr.bf16.mxu0 0
        %1686 = vmatpush1.bf16.xpose.msra.mxu0 0
        %1687 = vmatprep.subr.bf16.mxu0 0
        %1688 = vmatpush1.bf16.xpose.msra.mxu0 0
        %1689 = vmatprep.subr.bf16.mxu0 0
        %1690 = vmatpush1.bf16.xpose.msra.mxu0 0
        %1691 = vmatprep.mubr.bf16.mxu0 0
        %1692 = vmatmul.mubr.bf16.gmra.mrb[0].mxu0 %v1654
        %v1693 = vpop.f32.mrb[0].mxu0
        %v1694 = vadd.f32 0.0, %v1693
        %v1695 = vpop.f32.mrb[0].mxu0
        %v1696 = vpop.f32.mrb[0].mxu0
        %v1697 = vpop.f32.mrb[0].mxu0
        %1698 = vdwg.mxu0
        %v1699 = vsel %vm770, %v1556, -inf
        %1700 = vmax.xlane.f32.xlu0 %v1699
        %v1701 = vpop.xlane.xlu0 %1700
        %v1702 = vsel %vm770, %v1602, -inf
        %1703 = vmax.xlane.f32.xlu0 %v1702
        %v1704 = vpop.xlane.xlu0 %1703
        %v1705 = vsel %vm770, %v1648, -inf
        %1706 = vmax.xlane.f32.xlu0 %v1705
        %v1707 = vpop.xlane.xlu0 %1706
        %v1708 = vsel %vm770, %v1694, -inf
        %1709 = vmax.xlane.f32.xlu0 %v1708
        %v1710 = vpop.xlane.xlu0 %1709
        %v1711 = vsub.f32 %v1556, %v1701
        %v1712 = vsub.f32 %v1602, %v1704
        %v1713 = vsub.f32 %v1648, %v1707
        %v1714 = vsub.f32 %v1694, %v1710
        %v1715 = vmul.f32 %v1711, 1.442695
        %v1716 = vpow.pop %v1715
        %v1717 = vmul.f32 %v1712, 1.442695
        %v1718 = vpow.pop %v1717
        %v1719 = vmul.f32 %v1713, 1.442695
        %v1720 = vpow.pop %v1719
        %v1721 = vmul.f32 %v1714, 1.442695
        %v1722 = vpow.pop %v1721
        %v1723 = vsel %vm770, %v1716, 0.0
        %1724 = vadd.xlane.f32.xlu0 %v1723
        %v1725 = vpop.xlane.xlu0 %1724
        %v1726 = vsel %vm770, %v1718, 0.0
        %1727 = vadd.xlane.f32.xlu0 %v1726
        %v1728 = vpop.xlane.xlu0 %1727
        %v1729 = vsel %vm770, %v1720, 0.0
        %1730 = vadd.xlane.f32.xlu0 %v1729
        %v1731 = vpop.xlane.xlu0 %1730
        %v1732 = vsel %vm770, %v1722, 0.0
        %1733 = vadd.xlane.f32.xlu0 %v1732
        %v1734 = vpop.xlane.xlu0 %1733
        %v1735 = vrcp.pop %v1725
        %v1736 = vrcp.pop %v1728
        %v1737 = vrcp.pop %v1731
        %v1738 = vrcp.pop %v1734
        %v1739 = vmul.f32 %v1716, %v1735
        %v1740 = vmul.f32 %v1718, %v1736
        %v1741 = vmul.f32 %v1720, %v1737
        %v1742 = vmul.f32 %v1722, %v1738
        %v1743 = vpack.c.bf16 %v1739, %v1739
        %v1744 = vpack.c.bf16 %v1740, %v1740
        %v1745 = vpack.c.bf16 %v1741, %v1741
        %v1746 = vpack.c.bf16 %v1742, %v1742
        %v1748 = vsel %vm770, %v1743, 0
        %v1751 = vsel %vm822, %v1507, 0
        %1753 = vmatprep.subr.bf16.mxu0 0
        %1754 = vmatpush1.bf16.msra.mxu0 %v1751
        %1755 = vmatprep.subr.bf16.mxu0 0
        %1756 = vmatpush1.bf16.msra.mxu0 0
        %1757 = vmatprep.subr.bf16.mxu0 0
        %1758 = vmatpush1.bf16.msra.mxu0 0
        %1759 = vmatprep.subr.bf16.mxu0 0
        %1760 = vmatpush1.bf16.msra.mxu0 0
        %1761 = vmatprep.subr.bf16.mxu0 0
        %1762 = vmatpush1.bf16.msra.mxu0 0
        %1763 = vmatprep.subr.bf16.mxu0 0
        %1764 = vmatpush1.bf16.msra.mxu0 0
        %1765 = vmatprep.subr.bf16.mxu0 0
        %1766 = vmatpush1.bf16.msra.mxu0 0
        %1767 = vmatprep.subr.bf16.mxu0 0
        %1768 = vmatpush1.bf16.msra.mxu0 0
        %1769 = vmatprep.subr.bf16.mxu0 0
        %1770 = vmatpush1.bf16.msra.mxu0 0
        %1771 = vmatprep.subr.bf16.mxu0 0
        %1772 = vmatpush1.bf16.msra.mxu0 0
        %1773 = vmatprep.subr.bf16.mxu0 0
        %1774 = vmatpush1.bf16.msra.mxu0 0
        %1775 = vmatprep.subr.bf16.mxu0 0
        %1776 = vmatpush1.bf16.msra.mxu0 0
        %1777 = vmatprep.subr.bf16.mxu0 0
        %1778 = vmatpush1.bf16.msra.mxu0 0
        %1779 = vmatprep.subr.bf16.mxu0 0
        %1780 = vmatpush1.bf16.msra.mxu0 0
        %1781 = vmatprep.subr.bf16.mxu0 0
        %1782 = vmatpush1.bf16.msra.mxu0 0
        %1783 = vmatprep.subr.bf16.mxu0 0
        %1784 = vmatpush1.bf16.msra.mxu0 0
        %1785 = vmatprep.mubr.bf16.mxu0 0
        %1786 = vmatmul.mubr.bf16.gmra.mrb[0].mxu0 %v1748
        %v1787 = vpop.f32.mrb[0].mxu0
        %v1788 = vadd.f32 0.0, %v1787
        %v1789 = vpop.f32.mrb[0].mxu0
        %v1790 = vpop.f32.mrb[0].mxu0
        %v1791 = vpop.f32.mrb[0].mxu0
        %1792 = vdwg.mxu0
        %v1794 = vsel %vm770, %v1744, 0
        %v1797 = vsel %vm822, %v1510, 0
        %1799 = vmatprep.subr.bf16.mxu0 0
        %1800 = vmatpush1.bf16.msra.mxu0 %v1797
        %1801 = vmatprep.subr.bf16.mxu0 0
        %1802 = vmatpush1.bf16.msra.mxu0 0
        %1803 = vmatprep.subr.bf16.mxu0 0
        %1804 = vmatpush1.bf16.msra.mxu0 0
        %1805 = vmatprep.subr.bf16.mxu0 0
        %1806 = vmatpush1.bf16.msra.mxu0 0
        %1807 = vmatprep.subr.bf16.mxu0 0
        %1808 = vmatpush1.bf16.msra.mxu0 0
        %1809 = vmatprep.subr.bf16.mxu0 0
        %1810 = vmatpush1.bf16.msra.mxu0 0
        %1811 = vmatprep.subr.bf16.mxu0 0
        %1812 = vmatpush1.bf16.msra.mxu0 0
        %1813 = vmatprep.subr.bf16.mxu0 0
        %1814 = vmatpush1.bf16.msra.mxu0 0
        %1815 = vmatprep.subr.bf16.mxu0 0
        %1816 = vmatpush1.bf16.msra.mxu0 0
        %1817 = vmatprep.subr.bf16.mxu0 0
        %1818 = vmatpush1.bf16.msra.mxu0 0
        %1819 = vmatprep.subr.bf16.mxu0 0
        %1820 = vmatpush1.bf16.msra.mxu0 0
        %1821 = vmatprep.subr.bf16.mxu0 0
        %1822 = vmatpush1.bf16.msra.mxu0 0
        %1823 = vmatprep.subr.bf16.mxu0 0
        %1824 = vmatpush1.bf16.msra.mxu0 0
        %1825 = vmatprep.subr.bf16.mxu0 0
        %1826 = vmatpush1.bf16.msra.mxu0 0
        %1827 = vmatprep.subr.bf16.mxu0 0
        %1828 = vmatpush1.bf16.msra.mxu0 0
        %1829 = vmatprep.subr.bf16.mxu0 0
        %1830 = vmatpush1.bf16.msra.mxu0 0
        %1831 = vmatprep.mubr.bf16.mxu0 0
        %1832 = vmatmul.mubr.bf16.gmra.mrb[0].mxu0 %v1794
        %v1833 = vpop.f32.mrb[0].mxu0
        %v1834 = vadd.f32 0.0, %v1833
        %v1835 = vpop.f32.mrb[0].mxu0
        %v1836 = vpop.f32.mrb[0].mxu0
        %v1837 = vpop.f32.mrb[0].mxu0
        %1838 = vdwg.mxu0
        %v1840 = vsel %vm770, %v1745, 0
        %v1843 = vsel %vm822, %v1512, 0
        %1845 = vmatprep.subr.bf16.mxu0 0
        %1846 = vmatpush1.bf16.msra.mxu0 %v1843
        %1847 = vmatprep.subr.bf16.mxu0 0
        %1848 = vmatpush1.bf16.msra.mxu0 0
        %1849 = vmatprep.subr.bf16.mxu0 0
        %1850 = vmatpush1.bf16.msra.mxu0 0
        %1851 = vmatprep.subr.bf16.mxu0 0
        %1852 = vmatpush1.bf16.msra.mxu0 0
        %1853 = vmatprep.subr.bf16.mxu0 0
        %1854 = vmatpush1.bf16.msra.mxu0 0
        %1855 = vmatprep.subr.bf16.mxu0 0
        %1856 = vmatpush1.bf16.msra.mxu0 0
        %1857 = vmatprep.subr.bf16.mxu0 0
        %1858 = vmatpush1.bf16.msra.mxu0 0
        %1859 = vmatprep.subr.bf16.mxu0 0
        %1860 = vmatpush1.bf16.msra.mxu0 0
        %1861 = vmatprep.subr.bf16.mxu0 0
        %1862 = vmatpush1.bf16.msra.mxu0 0
        %1863 = vmatprep.subr.bf16.mxu0 0
        %1864 = vmatpush1.bf16.msra.mxu0 0
        %1865 = vmatprep.subr.bf16.mxu0 0
        %1866 = vmatpush1.bf16.msra.mxu0 0
        %1867 = vmatprep.subr.bf16.mxu0 0
        %1868 = vmatpush1.bf16.msra.mxu0 0
        %1869 = vmatprep.subr.bf16.mxu0 0
        %1870 = vmatpush1.bf16.msra.mxu0 0
        %1871 = vmatprep.subr.bf16.mxu0 0
        %1872 = vmatpush1.bf16.msra.mxu0 0
        %1873 = vmatprep.subr.bf16.mxu0 0
        %1874 = vmatpush1.bf16.msra.mxu0 0
        %1875 = vmatprep.subr.bf16.mxu0 0
        %1876 = vmatpush1.bf16.msra.mxu0 0
        %1877 = vmatprep.mubr.bf16.mxu0 0
        %1878 = vmatmul.mubr.bf16.gmra.mrb[0].mxu0 %v1840
        %v1879 = vpop.f32.mrb[0].mxu0
        %v1880 = vadd.f32 0.0, %v1879
        %v1881 = vpop.f32.mrb[0].mxu0
        %v1882 = vpop.f32.mrb[0].mxu0
        %v1883 = vpop.f32.mrb[0].mxu0
        %1884 = vdwg.mxu0
        %v1886 = vsel %vm770, %v1746, 0
        %v1889 = vsel %vm822, %v1514, 0
        %1891 = vmatprep.subr.bf16.mxu0 0
        %1892 = vmatpush1.bf16.msra.mxu0 %v1889
        %1893 = vmatprep.subr.bf16.mxu0 0
        %1894 = vmatpush1.bf16.msra.mxu0 0
        %1895 = vmatprep.subr.bf16.mxu0 0
        %1896 = vmatpush1.bf16.msra.mxu0 0
        %1897 = vmatprep.subr.bf16.mxu0 0
        %1898 = vmatpush1.bf16.msra.mxu0 0
        %1899 = vmatprep.subr.bf16.mxu0 0
        %1900 = vmatpush1.bf16.msra.mxu0 0
        %1901 = vmatprep.subr.bf16.mxu0 0
        %1902 = vmatpush1.bf16.msra.mxu0 0
        %1903 = vmatprep.subr.bf16.mxu0 0
        %1904 = vmatpush1.bf16.msra.mxu0 0
        %1905 = vmatprep.subr.bf16.mxu0 0
        %1906 = vmatpush1.bf16.msra.mxu0 0
        %1907 = vmatprep.subr.bf16.mxu0 0
        %1908 = vmatpush1.bf16.msra.mxu0 0
        %1909 = vmatprep.subr.bf16.mxu0 0
        %1910 = vmatpush1.bf16.msra.mxu0 0
        %1911 = vmatprep.subr.bf16.mxu0 0
        %1912 = vmatpush1.bf16.msra.mxu0 0
        %1913 = vmatprep.subr.bf16.mxu0 0
        %1914 = vmatpush1.bf16.msra.mxu0 0
        %1915 = vmatprep.subr.bf16.mxu0 0
        %1916 = vmatpush1.bf16.msra.mxu0 0
        %1917 = vmatprep.subr.bf16.mxu0 0
        %1918 = vmatpush1.bf16.msra.mxu0 0
        %1919 = vmatprep.subr.bf16.mxu0 0
        %1920 = vmatpush1.bf16.msra.mxu0 0
        %1921 = vmatprep.subr.bf16.mxu0 0
        %1922 = vmatpush1.bf16.msra.mxu0 0
        %1923 = vmatprep.mubr.bf16.mxu0 0
        %1924 = vmatmul.mubr.bf16.gmra.mrb[0].mxu0 %v1886
        %v1925 = vpop.f32.mrb[0].mxu0
        %v1926 = vadd.f32 0.0, %v1925
        %v1927 = vpop.f32.mrb[0].mxu0
        %v1928 = vpop.f32.mrb[0].mxu0
        %v1929 = vpop.f32.mrb[0].mxu0
        %1930 = vdwg.mxu0
        %1932 = vrot.lane.b32.xlu0 %v1834, 32
        %v1933 = vpop.permute.xlu0 %1932
        %1936 = vrot.lane.b32.xlu0 %v1880, 64
        %v1937 = vpop.permute.xlu0 %1936
        %1940 = vrot.lane.b32.xlu0 %v1926, 96
        %v1941 = vpop.permute.xlu0 %1940
        %v1943 = vsel %vm579, %v1788, %v1933
        %v1944 = vsel %vm1017, %v1943, %v1937
        %v1945 = vsel %vm1019, %v1944, %v1941
        %v1946 = vpack.c.bf16 %v1945, %v1945
        %v1947 = vld [vmem:[#allocation2 + $0x1c0] sm:$0xf]
        %v1948 = vld [vmem:[#allocation2 + $0x1c4] sm:$0xf]
        %v1949 = vld [vmem:[#allocation2 + $0x1c8] sm:$0xf]
        %v1950 = vld [vmem:[#allocation2 + $0x1cc] sm:$0xf]
        %v1951 = vld [vmem:[#allocation2 + $0x1d0] sm:$0xf]
        %v1952 = vld [vmem:[#allocation2 + $0x1d4] sm:$0xf]
        %v1953 = vld [vmem:[#allocation2 + $0x1d8] sm:$0xf]
        %v1954 = vld [vmem:[#allocation2 + $0x1dc] sm:$0xf]
        %v1955 = vld [vmem:[#allocation2 + $0x1e0] sm:$0xf]
        %v1956 = vld [vmem:[#allocation2 + $0x1e4] sm:$0xf]
        %v1957 = vld [vmem:[#allocation2 + $0x1e8] sm:$0xf]
        %v1958 = vld [vmem:[#allocation2 + $0x1ec] sm:$0xf]
        %v1959 = vld [vmem:[#allocation2 + $0x1f0] sm:$0xf]
        %v1960 = vld [vmem:[#allocation2 + $0x1f4] sm:$0xf]
        %v1961 = vld [vmem:[#allocation2 + $0x1f8] sm:$0xf]
        %v1962 = vld [vmem:[#allocation2 + $0x1fc] sm:$0xf]
        %v1963 = vld [vmem:[%s2 + $0xd] sm:$0x1]
        %v1964 = vlaneseq
        %v1965 = vshrl.u32 %v1964, 7
        %v1966 = vsub.s32 0, %v1965
        %v1967 = vrot.slane %v1963, %v1966
        %v1984 = vunpack.c.l.b16 %v1947
        %v1985 = vunpack.c.l.b16 %v1948
        %v1986 = vunpack.c.l.b16 %v1949
        %v1987 = vunpack.c.l.b16 %v1950
        %v1988 = vunpack.c.l.b16 %v1951
        %v1989 = vunpack.c.l.b16 %v1952
        %v1990 = vunpack.c.l.b16 %v1953
        %v1991 = vunpack.c.l.b16 %v1954
        %v1992 = vunpack.c.l.b16 %v1955
        %v1993 = vunpack.c.l.b16 %v1956
        %v1994 = vunpack.c.l.b16 %v1957
        %v1995 = vunpack.c.l.b16 %v1958
        %v1996 = vunpack.c.l.b16 %v1959
        %v1997 = vunpack.c.l.b16 %v1960
        %v1998 = vunpack.c.l.b16 %v1961
        %v1999 = vunpack.c.l.b16 %v1962
        %v2000 = vpack.c.b16 %v1985, %v1984
        %v2001 = vpack.c.b16 %v1987, %v1986
        %v2002 = vpack.c.b16 %v1989, %v1988
        %v2003 = vpack.c.b16 %v1991, %v1990
        %v2004 = vpack.c.b16 %v1993, %v1992
        %v2005 = vpack.c.b16 %v1995, %v1994
        %v2006 = vpack.c.b16 %v1997, %v1996
        %v2007 = vpack.c.b16 %v1999, %v1998
        %2016 = vmatprep.subr.bf16.mxu0 0
        %2017 = vmatpush1.bf16.msra.mxu0 %v2000
        %2018 = vmatprep.subr.bf16.mxu0 0
        %2019 = vmatpush1.bf16.msra.mxu0 %v2001
        %2020 = vmatprep.subr.bf16.mxu0 0
        %2021 = vmatpush1.bf16.msra.mxu0 %v2002
        %2022 = vmatprep.subr.bf16.mxu0 0
        %2023 = vmatpush1.bf16.msra.mxu0 %v2003
        %2024 = vmatprep.subr.bf16.mxu0 0
        %2025 = vmatpush1.bf16.msra.mxu0 %v2004
        %2026 = vmatprep.subr.bf16.mxu0 0
        %2027 = vmatpush1.bf16.msra.mxu0 %v2005
        %2028 = vmatprep.subr.bf16.mxu0 0
        %2029 = vmatpush1.bf16.msra.mxu0 %v2006
        %2030 = vmatprep.subr.bf16.mxu0 0
        %2031 = vmatpush1.bf16.msra.mxu0 %v2007
        %2032 = vmatprep.subr.bf16.mxu0 0
        %2033 = vmatpush1.bf16.msra.mxu0 0
        %2034 = vmatprep.subr.bf16.mxu0 0
        %2035 = vmatpush1.bf16.msra.mxu0 0
        %2036 = vmatprep.subr.bf16.mxu0 0
        %2037 = vmatpush1.bf16.msra.mxu0 0
        %2038 = vmatprep.subr.bf16.mxu0 0
        %2039 = vmatpush1.bf16.msra.mxu0 0
        %2040 = vmatprep.subr.bf16.mxu0 0
        %2041 = vmatpush1.bf16.msra.mxu0 0
        %2042 = vmatprep.subr.bf16.mxu0 0
        %2043 = vmatpush1.bf16.msra.mxu0 0
        %2044 = vmatprep.subr.bf16.mxu0 0
        %2045 = vmatpush1.bf16.msra.mxu0 0
        %2046 = vmatprep.subr.bf16.mxu0 0
        %2047 = vmatpush1.bf16.msra.mxu0 0
        %2048 = vmatprep.mubr.bf16.mxu0 0
        %2049 = vmatmul.mubr.bf16.gmra.mrb[0].mxu0 %v1946
        %v2050 = vpop.f32.mrb[0].mxu0
        %v2051 = vadd.f32 %v1967, %v2050
        %v2052 = vpop.f32.mrb[0].mxu0
        %v2053 = vpop.f32.mrb[0].mxu0
        %v2054 = vpop.f32.mrb[0].mxu0
        %2055 = vdwg.mxu0
        %v2056 = vadd.f32 %v1131, %v2051
        %v2057 = vld [vmem:[%s2 + $0x16] sm:$0x1]
        %v2058 = vld [vmem:[%s2 + $0x1c] sm:$0x1]
        %2059 = vadd.xlane.f32.xlu0 %v2056
        %v2060 = vpop.xlane.xlu0 %2059
        %v2061 = vmul.f32 %v2060, 0.03125
        %v2062 = vsub.f32 %v2056, %v2061
        %v2063 = vsel %vm201, %v2062, 0.0
        %v2064 = vmul.f32 %v2063, %v2063
        %2065 = vadd.xlane.f32.xlu0 %v2064
        %v2066 = vpop.xlane.xlu0 %2065
        %v2067 = vmul.f32 %v2066, 0.032258064
        %v2068 = vlaneseq
        %v2069 = vshrl.u32 %v2068, 7
        %v2070 = vsub.s32 0, %v2069
        %v2071 = vrot.slane %v2057, %v2070
        %v2072 = vmul.f32 %v2071, %v2063
        %v2073 = vrsqrt.pop %v2067
        %v2074 = vmul.f32 %v2067, %v2073
        %vm2075 = vcmp.eq.f32.partialorder %v2067, inf
        %v2076 = vsel %vm2075, %v2067, %v2074
        %vm2077 = vcmp.eq.f32.partialorder %v2067, 0.0
        %v2078 = vand.u32 %v2067, 2147483648
        %v2079 = vsel %vm2077, %v2078, %v2076
        %v2080 = vadd.f32 %v2079, 1e-06
        %v2081 = vrcp.pop %v2080
        %v2082 = vmul.f32 %v2072, %v2081
        %v2083 = vlaneseq
        %v2084 = vshrl.u32 %v2083, 7
        %v2085 = vsub.s32 0, %v2084
        %v2086 = vrot.slane %v2058, %v2085
        %v2087 = vadd.f32 %v2082, %v2086
        %v2088 = vpack.c.bf16 %v2087, %v2087
        %v2089 = vld [vmem:[#allocation2 + $0x200] sm:$0xf]
        %v2090 = vld [vmem:[#allocation2 + $0x204] sm:$0xf]
        %v2091 = vld [vmem:[#allocation2 + $0x208] sm:$0xf]
        %v2092 = vld [vmem:[#allocation2 + $0x20c] sm:$0xf]
        %v2093 = vld [vmem:[#allocation2 + $0x210] sm:$0xf]
        %v2094 = vld [vmem:[#allocation2 + $0x214] sm:$0xf]
        %v2095 = vld [vmem:[#allocation2 + $0x218] sm:$0xf]
        %v2096 = vld [vmem:[#allocation2 + $0x21c] sm:$0xf]
        %v2097 = vld [vmem:[#allocation2 + $0x220] sm:$0xf]
        %v2098 = vld [vmem:[#allocation2 + $0x224] sm:$0xf]
        %v2099 = vld [vmem:[#allocation2 + $0x228] sm:$0xf]
        %v2100 = vld [vmem:[#allocation2 + $0x22c] sm:$0xf]
        %v2101 = vld [vmem:[#allocation2 + $0x230] sm:$0xf]
        %v2102 = vld [vmem:[#allocation2 + $0x234] sm:$0xf]
        %v2103 = vld [vmem:[#allocation2 + $0x238] sm:$0xf]
        %v2104 = vld [vmem:[#allocation2 + $0x23c] sm:$0xf]
        %v2105 = vld [vmem:[%s2 + $0x10] sm:$0x1]
        %v2106 = vlaneseq
        %v2107 = vshrl.u32 %v2106, 7
        %v2108 = vsub.s32 0, %v2107
        %v2109 = vrot.slane %v2105, %v2108
        %v2126 = vunpack.c.l.b16 %v2089
        %v2127 = vunpack.c.l.b16 %v2090
        %v2128 = vunpack.c.l.b16 %v2091
        %v2129 = vunpack.c.l.b16 %v2092
        %v2130 = vunpack.c.l.b16 %v2093
        %v2131 = vunpack.c.l.b16 %v2094
        %v2132 = vunpack.c.l.b16 %v2095
        %v2133 = vunpack.c.l.b16 %v2096
        %v2134 = vunpack.c.l.b16 %v2097
        %v2135 = vunpack.c.l.b16 %v2098
        %v2136 = vunpack.c.l.b16 %v2099
        %v2137 = vunpack.c.l.b16 %v2100
        %v2138 = vunpack.c.l.b16 %v2101
        %v2139 = vunpack.c.l.b16 %v2102
        %v2140 = vunpack.c.l.b16 %v2103
        %v2141 = vunpack.c.l.b16 %v2104
        %v2142 = vpack.c.b16 %v2127, %v2126
        %v2143 = vpack.c.b16 %v2129, %v2128
        %v2144 = vpack.c.b16 %v2131, %v2130
        %v2145 = vpack.c.b16 %v2133, %v2132
        %v2146 = vpack.c.b16 %v2135, %v2134
        %v2147 = vpack.c.b16 %v2137, %v2136
        %v2148 = vpack.c.b16 %v2139, %v2138
        %v2149 = vpack.c.b16 %v2141, %v2140
        %2158 = vmatprep.subr.bf16.mxu0 0
        %2159 = vmatpush1.bf16.msra.mxu0 %v2142
        %2160 = vmatprep.subr.bf16.mxu0 0
        %2161 = vmatpush1.bf16.msra.mxu0 %v2143
        %2162 = vmatprep.subr.bf16.mxu0 0
        %2163 = vmatpush1.bf16.msra.mxu0 %v2144
        %2164 = vmatprep.subr.bf16.mxu0 0
        %2165 = vmatpush1.bf16.msra.mxu0 %v2145
        %2166 = vmatprep.subr.bf16.mxu0 0
        %2167 = vmatpush1.bf16.msra.mxu0 %v2146
        %2168 = vmatprep.subr.bf16.mxu0 0
        %2169 = vmatpush1.bf16.msra.mxu0 %v2147
        %2170 = vmatprep.subr.bf16.mxu0 0
        %2171 = vmatpush1.bf16.msra.mxu0 %v2148
        %2172 = vmatprep.subr.bf16.mxu0 0
        %2173 = vmatpush1.bf16.msra.mxu0 %v2149
        %2174 = vmatprep.subr.bf16.mxu0 0
        %2175 = vmatpush1.bf16.msra.mxu0 0
        %2176 = vmatprep.subr.bf16.mxu0 0
        %2177 = vmatpush1.bf16.msra.mxu0 0
        %2178 = vmatprep.subr.bf16.mxu0 0
        %2179 = vmatpush1.bf16.msra.mxu0 0
        %2180 = vmatprep.subr.bf16.mxu0 0
        %2181 = vmatpush1.bf16.msra.mxu0 0
        %2182 = vmatprep.subr.bf16.mxu0 0
        %2183 = vmatpush1.bf16.msra.mxu0 0
        %2184 = vmatprep.subr.bf16.mxu0 0
        %2185 = vmatpush1.bf16.msra.mxu0 0
        %2186 = vmatprep.subr.bf16.mxu0 0
        %2187 = vmatpush1.bf16.msra.mxu0 0
        %2188 = vmatprep.subr.bf16.mxu0 0
        %2189 = vmatpush1.bf16.msra.mxu0 0
        %2190 = vmatprep.mubr.bf16.mxu0 0
        %2191 = vmatmul.mubr.bf16.gmra.mrb[0].mxu0 %v2088
        %v2192 = vpop.f32.mrb[0].mxu0
        %v2193 = vadd.f32 %v2109, %v2192
        %v2194 = vpop.f32.mrb[0].mxu0
        %v2195 = vpop.f32.mrb[0].mxu0
        %v2196 = vpop.f32.mrb[0].mxu0
        %2197 = vdwg.mxu0
        %v2198 = vmax.f32 %v2193, 0.0
        %v2199 = vpack.c.bf16 %v2198, %v2198
        %v2200 = vld [vmem:[#allocation2 + $0x240] sm:$0xf]
        %v2201 = vld [vmem:[#allocation2 + $0x244] sm:$0xf]
        %v2202 = vld [vmem:[#allocation2 + $0x248] sm:$0xf]
        %v2203 = vld [vmem:[#allocation2 + $0x24c] sm:$0xf]
        %v2204 = vld [vmem:[#allocation2 + $0x250] sm:$0xf]
        %v2205 = vld [vmem:[#allocation2 + $0x254] sm:$0xf]
        %v2206 = vld [vmem:[#allocation2 + $0x258] sm:$0xf]
        %v2207 = vld [vmem:[#allocation2 + $0x25c] sm:$0xf]
        %v2208 = vld [vmem:[#allocation2 + $0x260] sm:$0xf]
        %v2209 = vld [vmem:[#allocation2 + $0x264] sm:$0xf]
        %v2210 = vld [vmem:[#allocation2 + $0x268] sm:$0xf]
        %v2211 = vld [vmem:[#allocation2 + $0x26c] sm:$0xf]
        %v2212 = vld [vmem:[#allocation2 + $0x270] sm:$0xf]
        %v2213 = vld [vmem:[#allocation2 + $0x274] sm:$0xf]
        %v2214 = vld [vmem:[#allocation2 + $0x278] sm:$0xf]
        %v2215 = vld [vmem:[#allocation2 + $0x27c] sm:$0xf]
        %v2232 = vunpack.c.l.b16 %v2200
        %v2233 = vunpack.c.l.b16 %v2201
        %v2234 = vunpack.c.l.b16 %v2202
        %v2235 = vunpack.c.l.b16 %v2203
        %v2236 = vunpack.c.l.b16 %v2204
        %v2237 = vunpack.c.l.b16 %v2205
        %v2238 = vunpack.c.l.b16 %v2206
        %v2239 = vunpack.c.l.b16 %v2207
        %v2240 = vunpack.c.l.b16 %v2208
        %v2241 = vunpack.c.l.b16 %v2209
        %v2242 = vunpack.c.l.b16 %v2210
        %v2243 = vunpack.c.l.b16 %v2211
        %v2244 = vunpack.c.l.b16 %v2212
        %v2245 = vunpack.c.l.b16 %v2213
        %v2246 = vunpack.c.l.b16 %v2214
        %v2247 = vunpack.c.l.b16 %v2215
        %v2248 = vpack.c.b16 %v2233, %v2232
        %v2249 = vpack.c.b16 %v2235, %v2234
        %v2250 = vpack.c.b16 %v2237, %v2236
        %v2251 = vpack.c.b16 %v2239, %v2238
        %v2252 = vpack.c.b16 %v2241, %v2240
        %v2253 = vpack.c.b16 %v2243, %v2242
        %v2254 = vpack.c.b16 %v2245, %v2244
        %v2255 = vpack.c.b16 %v2247, %v2246
        %2264 = vmatprep.subr.bf16.mxu0 0
        %2265 = vmatpush1.bf16.msra.mxu0 %v2248
        %2266 = vmatprep.subr.bf16.mxu0 0
        %2267 = vmatpush1.bf16.msra.mxu0 %v2249
        %2268 = vmatprep.subr.bf16.mxu0 0
        %2269 = vmatpush1.bf16.msra.mxu0 %v2250
        %2270 = vmatprep.subr.bf16.mxu0 0
        %2271 = vmatpush1.bf16.msra.mxu0 %v2251
        %2272 = vmatprep.subr.bf16.mxu0 0
        %2273 = vmatpush1.bf16.msra.mxu0 %v2252
        %2274 = vmatprep.subr.bf16.mxu0 0
        %2275 = vmatpush1.bf16.msra.mxu0 %v2253
        %2276 = vmatprep.subr.bf16.mxu0 0
        %2277 = vmatpush1.bf16.msra.mxu0 %v2254
        %2278 = vmatprep.subr.bf16.mxu0 0
        %2279 = vmatpush1.bf16.msra.mxu0 %v2255
        %2280 = vmatprep.subr.bf16.mxu0 0
        %2281 = vmatpush1.bf16.msra.mxu0 0
        %2282 = vmatprep.subr.bf16.mxu0 0
        %2283 = vmatpush1.bf16.msra.mxu0 0
        %2284 = vmatprep.subr.bf16.mxu0 0
        %2285 = vmatpush1.bf16.msra.mxu0 0
        %2286 = vmatprep.subr.bf16.mxu0 0
        %2287 = vmatpush1.bf16.msra.mxu0 0
        %2288 = vmatprep.subr.bf16.mxu0 0
        %2289 = vmatpush1.bf16.msra.mxu0 0
        %2290 = vmatprep.subr.bf16.mxu0 0
        %2291 = vmatpush1.bf16.msra.mxu0 0
        %2292 = vmatprep.subr.bf16.mxu0 0
        %2293 = vmatpush1.bf16.msra.mxu0 0
        %2294 = vmatprep.subr.bf16.mxu0 0
        %2295 = vmatpush1.bf16.msra.mxu0 0
        %2296 = vmatprep.mubr.bf16.mxu0 0
        %2297 = vmatmul.mubr.bf16.gmra.mrb[0].mxu0 %v2199
        %v2298 = vpop.f32.mrb[0].mxu0
        %v2299 = vadd.f32 0.0, %v2298
        %v2300 = vpop.f32.mrb[0].mxu0
        %v2301 = vpop.f32.mrb[0].mxu0
        %v2302 = vpop.f32.mrb[0].mxu0
        %2303 = vdwg.mxu0
        %v2304 = vadd.f32 %v2056, %v2299
        %v2305 = vld [vmem:[%s2 + $0x12] sm:$0x1]
        %v2306 = vlaneseq
        %v2307 = vshrl.u32 %v2306, 7
        %v2308 = vsub.s32 0, %v2307
        %v2309 = vrot.slane %v2305, %v2308
        %v2310 = vadd.f32 %v2304, %v2309
        %v2311 = vld [vmem:[%s2 + $0x17] sm:$0x1]
        %v2312 = vld [vmem:[%s2 + $0x1d] sm:$0x1]
        %2313 = vadd.xlane.f32.xlu0 %v2310
        %v2314 = vpop.xlane.xlu0 %2313
        %v2315 = vmul.f32 %v2314, 0.03125
        %v2316 = vsub.f32 %v2310, %v2315
        %v2317 = vsel %vm201, %v2316, 0.0
        %v2318 = vmul.f32 %v2317, %v2317
        %2319 = vadd.xlane.f32.xlu0 %v2318
        %v2320 = vpop.xlane.xlu0 %2319
        %v2321 = vmul.f32 %v2320, 0.032258064
        %v2322 = vlaneseq
        %v2323 = vshrl.u32 %v2322, 7
        %v2324 = vsub.s32 0, %v2323
        %v2325 = vrot.slane %v2311, %v2324
        %v2326 = vmul.f32 %v2325, %v2317
        %v2327 = vrsqrt.pop %v2321
        %v2328 = vmul.f32 %v2321, %v2327
        %vm2329 = vcmp.eq.f32.partialorder %v2321, inf
        %v2330 = vsel %vm2329, %v2321, %v2328
        %vm2331 = vcmp.eq.f32.partialorder %v2321, 0.0
        %v2332 = vand.u32 %v2321, 2147483648
        %v2333 = vsel %vm2331, %v2332, %v2330
        %v2334 = vadd.f32 %v2333, 1e-06
        %v2335 = vrcp.pop %v2334
        %v2336 = vmul.f32 %v2326, %v2335
        %v2337 = vlaneseq
        %v2338 = vshrl.u32 %v2337, 7
        %v2339 = vsub.s32 0, %v2338
        %v2340 = vrot.slane %v2312, %v2339
        %v2341 = vadd.f32 %v2336, %v2340
        %v2342 = vpack.c.bf16 %v2341, %v2341
        %v2343 = vld [vmem:[#allocation2 + $0x280] sm:$0xf]
        %v2344 = vld [vmem:[#allocation2 + $0x284] sm:$0xf]
        %v2345 = vld [vmem:[#allocation2 + $0x288] sm:$0xf]
        %v2346 = vld [vmem:[#allocation2 + $0x28c] sm:$0xf]
        %v2347 = vld [vmem:[#allocation2 + $0x290] sm:$0xf]
        %v2348 = vld [vmem:[#allocation2 + $0x294] sm:$0xf]
        %v2349 = vld [vmem:[#allocation2 + $0x298] sm:$0xf]
        %v2350 = vld [vmem:[#allocation2 + $0x29c] sm:$0xf]
        %v2351 = vld [vmem:[#allocation2 + $0x2a0] sm:$0xf]
        %v2352 = vld [vmem:[#allocation2 + $0x2a4] sm:$0xf]
        %v2353 = vld [vmem:[#allocation2 + $0x2a8] sm:$0xf]
        %v2354 = vld [vmem:[#allocation2 + $0x2ac] sm:$0xf]
        %v2355 = vld [vmem:[#allocation2 + $0x2b0] sm:$0xf]
        %v2356 = vld [vmem:[#allocation2 + $0x2b4] sm:$0xf]
        %v2357 = vld [vmem:[#allocation2 + $0x2b8] sm:$0xf]
        %v2358 = vld [vmem:[#allocation2 + $0x2bc] sm:$0xf]
        %v2359 = vld [vmem:[%s2 + $0x2] sm:$0x1]
        %v2360 = vlaneseq
        %v2361 = vshrl.u32 %v2360, 7
        %v2362 = vsub.s32 0, %v2361
        %v2363 = vrot.slane %v2359, %v2362
        %v2380 = vunpack.c.l.b16 %v2343
        %v2381 = vunpack.c.l.b16 %v2344
        %v2382 = vunpack.c.l.b16 %v2345
        %v2383 = vunpack.c.l.b16 %v2346
        %v2384 = vunpack.c.l.b16 %v2347
        %v2385 = vunpack.c.l.b16 %v2348
        %v2386 = vunpack.c.l.b16 %v2349
        %v2387 = vunpack.c.l.b16 %v2350
        %v2388 = vunpack.c.l.b16 %v2351
        %v2389 = vunpack.c.l.b16 %v2352
        %v2390 = vunpack.c.l.b16 %v2353
        %v2391 = vunpack.c.l.b16 %v2354
        %v2392 = vunpack.c.l.b16 %v2355
        %v2393 = vunpack.c.l.b16 %v2356
        %v2394 = vunpack.c.l.b16 %v2357
        %v2395 = vunpack.c.l.b16 %v2358
        %v2396 = vpack.c.b16 %v2381, %v2380
        %v2397 = vpack.c.b16 %v2383, %v2382
        %v2398 = vpack.c.b16 %v2385, %v2384
        %v2399 = vpack.c.b16 %v2387, %v2386
        %v2400 = vpack.c.b16 %v2389, %v2388
        %v2401 = vpack.c.b16 %v2391, %v2390
        %v2402 = vpack.c.b16 %v2393, %v2392
        %v2403 = vpack.c.b16 %v2395, %v2394
        %2412 = vmatprep.subr.bf16.mxu0 0
        %2413 = vmatpush1.bf16.msra.mxu0 %v2396
        %2414 = vmatprep.subr.bf16.mxu0 0
        %2415 = vmatpush1.bf16.msra.mxu0 %v2397
        %2416 = vmatprep.subr.bf16.mxu0 0
        %2417 = vmatpush1.bf16.msra.mxu0 %v2398
        %2418 = vmatprep.subr.bf16.mxu0 0
        %2419 = vmatpush1.bf16.msra.mxu0 %v2399
        %2420 = vmatprep.subr.bf16.mxu0 0
        %2421 = vmatpush1.bf16.msra.mxu0 %v2400
        %2422 = vmatprep.subr.bf16.mxu0 0
        %2423 = vmatpush1.bf16.msra.mxu0 %v2401
        %2424 = vmatprep.subr.bf16.mxu0 0
        %2425 = vmatpush1.bf16.msra.mxu0 %v2402
        %2426 = vmatprep.subr.bf16.mxu0 0
        %2427 = vmatpush1.bf16.msra.mxu0 %v2403
        %2428 = vmatprep.subr.bf16.mxu0 0
        %2429 = vmatpush1.bf16.msra.mxu0 0
        %2430 = vmatprep.subr.bf16.mxu0 0
        %2431 = vmatpush1.bf16.msra.mxu0 0
        %2432 = vmatprep.subr.bf16.mxu0 0
        %2433 = vmatpush1.bf16.msra.mxu0 0
        %2434 = vmatprep.subr.bf16.mxu0 0
        %2435 = vmatpush1.bf16.msra.mxu0 0
        %2436 = vmatprep.subr.bf16.mxu0 0
        %2437 = vmatpush1.bf16.msra.mxu0 0
        %2438 = vmatprep.subr.bf16.mxu0 0
        %2439 = vmatpush1.bf16.msra.mxu0 0
        %2440 = vmatprep.subr.bf16.mxu0 0
        %2441 = vmatpush1.bf16.msra.mxu0 0
        %2442 = vmatprep.subr.bf16.mxu0 0
        %2443 = vmatpush1.bf16.msra.mxu0 0
        %2444 = vmatprep.mubr.bf16.mxu0 0
        %2445 = vmatmul.mubr.bf16.gmra.mrb[0].mxu0 %v2342
        %v2446 = vpop.f32.mrb[0].mxu0
        %v2447 = vadd.f32 %v2363, %v2446
        %v2448 = vpop.f32.mrb[0].mxu0
        %v2449 = vpop.f32.mrb[0].mxu0
        %v2450 = vpop.f32.mrb[0].mxu0
        %2451 = vdwg.mxu0
        %v2452 = vld [vmem:[#allocation2 + $0x2c0] sm:$0xf]
        %v2453 = vld [vmem:[#allocation2 + $0x2c4] sm:$0xf]
        %v2454 = vld [vmem:[#allocation2 + $0x2c8] sm:$0xf]
        %v2455 = vld [vmem:[#allocation2 + $0x2cc] sm:$0xf]
        %v2456 = vld [vmem:[#allocation2 + $0x2d0] sm:$0xf]
        %v2457 = vld [vmem:[#allocation2 + $0x2d4] sm:$0xf]
        %v2458 = vld [vmem:[#allocation2 + $0x2d8] sm:$0xf]
        %v2459 = vld [vmem:[#allocation2 + $0x2dc] sm:$0xf]
        %v2460 = vld [vmem:[#allocation2 + $0x2e0] sm:$0xf]
        %v2461 = vld [vmem:[#allocation2 + $0x2e4] sm:$0xf]
        %v2462 = vld [vmem:[#allocation2 + $0x2e8] sm:$0xf]
        %v2463 = vld [vmem:[#allocation2 + $0x2ec] sm:$0xf]
        %v2464 = vld [vmem:[#allocation2 + $0x2f0] sm:$0xf]
        %v2465 = vld [vmem:[#allocation2 + $0x2f4] sm:$0xf]
        %v2466 = vld [vmem:[#allocation2 + $0x2f8] sm:$0xf]
        %v2467 = vld [vmem:[#allocation2 + $0x2fc] sm:$0xf]
        %v2468 = vld [vmem:[%s2 + $0x6] sm:$0x1]
        %v2469 = vlaneseq
        %v2470 = vshrl.u32 %v2469, 7
        %v2471 = vsub.s32 0, %v2470
        %v2472 = vrot.slane %v2468, %v2471
        %v2489 = vunpack.c.l.b16 %v2452
        %v2490 = vunpack.c.l.b16 %v2453
        %v2491 = vunpack.c.l.b16 %v2454
        %v2492 = vunpack.c.l.b16 %v2455
        %v2493 = vunpack.c.l.b16 %v2456
        %v2494 = vunpack.c.l.b16 %v2457
        %v2495 = vunpack.c.l.b16 %v2458
        %v2496 = vunpack.c.l.b16 %v2459
        %v2497 = vunpack.c.l.b16 %v2460
        %v2498 = vunpack.c.l.b16 %v2461
        %v2499 = vunpack.c.l.b16 %v2462
        %v2500 = vunpack.c.l.b16 %v2463
        %v2501 = vunpack.c.l.b16 %v2464
        %v2502 = vunpack.c.l.b16 %v2465
        %v2503 = vunpack.c.l.b16 %v2466
        %v2504 = vunpack.c.l.b16 %v2467
        %v2505 = vpack.c.b16 %v2490, %v2489
        %v2506 = vpack.c.b16 %v2492, %v2491
        %v2507 = vpack.c.b16 %v2494, %v2493
        %v2508 = vpack.c.b16 %v2496, %v2495
        %v2509 = vpack.c.b16 %v2498, %v2497
        %v2510 = vpack.c.b16 %v2500, %v2499
        %v2511 = vpack.c.b16 %v2502, %v2501
        %v2512 = vpack.c.b16 %v2504, %v2503
        %2521 = vmatprep.subr.bf16.mxu0 0
        %2522 = vmatpush1.bf16.msra.mxu0 %v2505
        %2523 = vmatprep.subr.bf16.mxu0 0
        %2524 = vmatpush1.bf16.msra.mxu0 %v2506
        %2525 = vmatprep.subr.bf16.mxu0 0
        %2526 = vmatpush1.bf16.msra.mxu0 %v2507
        %2527 = vmatprep.subr.bf16.mxu0 0
        %2528 = vmatpush1.bf16.msra.mxu0 %v2508
        %2529 = vmatprep.subr.bf16.mxu0 0
        %2530 = vmatpush1.bf16.msra.mxu0 %v2509
        %2531 = vmatprep.subr.bf16.mxu0 0
        %2532 = vmatpush1.bf16.msra.mxu0 %v2510
        %2533 = vmatprep.subr.bf16.mxu0 0
        %2534 = vmatpush1.bf16.msra.mxu0 %v2511
        %2535 = vmatprep.subr.bf16.mxu0 0
        %2536 = vmatpush1.bf16.msra.mxu0 %v2512
        %2537 = vmatprep.subr.bf16.mxu0 0
        %2538 = vmatpush1.bf16.msra.mxu0 0
        %2539 = vmatprep.subr.bf16.mxu0 0
        %2540 = vmatpush1.bf16.msra.mxu0 0
        %2541 = vmatprep.subr.bf16.mxu0 0
        %2542 = vmatpush1.bf16.msra.mxu0 0
        %2543 = vmatprep.subr.bf16.mxu0 0
        %2544 = vmatpush1.bf16.msra.mxu0 0
        %2545 = vmatprep.subr.bf16.mxu0 0
        %2546 = vmatpush1.bf16.msra.mxu0 0
        %2547 = vmatprep.subr.bf16.mxu0 0
        %2548 = vmatpush1.bf16.msra.mxu0 0
        %2549 = vmatprep.subr.bf16.mxu0 0
        %2550 = vmatpush1.bf16.msra.mxu0 0
        %2551 = vmatprep.subr.bf16.mxu0 0
        %2552 = vmatpush1.bf16.msra.mxu0 0
        %2553 = vmatprep.mubr.bf16.mxu0 0
        %2554 = vmatmul.mubr.bf16.gmra.mrb[0].mxu0 %v2342
        %v2555 = vpop.f32.mrb[0].mxu0
        %v2556 = vadd.f32 %v2472, %v2555
        %v2557 = vpop.f32.mrb[0].mxu0
        %v2558 = vpop.f32.mrb[0].mxu0
        %v2559 = vpop.f32.mrb[0].mxu0
        %2560 = vdwg.mxu0
        %v2561 = vld [vmem:[#allocation2 + $0x300] sm:$0xf]
        %v2562 = vld [vmem:[#allocation2 + $0x304] sm:$0xf]
        %v2563 = vld [vmem:[#allocation2 + $0x308] sm:$0xf]
        %v2564 = vld [vmem:[#allocation2 + $0x30c] sm:$0xf]
        %v2565 = vld [vmem:[#allocation2 + $0x310] sm:$0xf]
        %v2566 = vld [vmem:[#allocation2 + $0x314] sm:$0xf]
        %v2567 = vld [vmem:[#allocation2 + $0x318] sm:$0xf]
        %v2568 = vld [vmem:[#allocation2 + $0x31c] sm:$0xf]
        %v2569 = vld [vmem:[#allocation2 + $0x320] sm:$0xf]
        %v2570 = vld [vmem:[#allocation2 + $0x324] sm:$0xf]
        %v2571 = vld [vmem:[#allocation2 + $0x328] sm:$0xf]
        %v2572 = vld [vmem:[#allocation2 + $0x32c] sm:$0xf]
        %v2573 = vld [vmem:[#allocation2 + $0x330] sm:$0xf]
        %v2574 = vld [vmem:[#allocation2 + $0x334] sm:$0xf]
        %v2575 = vld [vmem:[#allocation2 + $0x338] sm:$0xf]
        %v2576 = vld [vmem:[#allocation2 + $0x33c] sm:$0xf]
        %v2577 = vld [vmem:[%s2 + $0xa] sm:$0x1]
        %v2578 = vlaneseq
        %v2579 = vshrl.u32 %v2578, 7
        %v2580 = vsub.s32 0, %v2579
        %v2581 = vrot.slane %v2577, %v2580
        %v2598 = vunpack.c.l.b16 %v2561
        %v2599 = vunpack.c.l.b16 %v2562
        %v2600 = vunpack.c.l.b16 %v2563
        %v2601 = vunpack.c.l.b16 %v2564
        %v2602 = vunpack.c.l.b16 %v2565
        %v2603 = vunpack.c.l.b16 %v2566
        %v2604 = vunpack.c.l.b16 %v2567
        %v2605 = vunpack.c.l.b16 %v2568
        %v2606 = vunpack.c.l.b16 %v2569
        %v2607 = vunpack.c.l.b16 %v2570
        %v2608 = vunpack.c.l.b16 %v2571
        %v2609 = vunpack.c.l.b16 %v2572
        %v2610 = vunpack.c.l.b16 %v2573
        %v2611 = vunpack.c.l.b16 %v2574
        %v2612 = vunpack.c.l.b16 %v2575
        %v2613 = vunpack.c.l.b16 %v2576
        %v2614 = vpack.c.b16 %v2599, %v2598
        %v2615 = vpack.c.b16 %v2601, %v2600
        %v2616 = vpack.c.b16 %v2603, %v2602
        %v2617 = vpack.c.b16 %v2605, %v2604
        %v2618 = vpack.c.b16 %v2607, %v2606
        %v2619 = vpack.c.b16 %v2609, %v2608
        %v2620 = vpack.c.b16 %v2611, %v2610
        %v2621 = vpack.c.b16 %v2613, %v2612
        %2630 = vmatprep.subr.bf16.mxu0 0
        %2631 = vmatpush1.bf16.msra.mxu0 %v2614
        %2632 = vmatprep.subr.bf16.mxu0 0
        %2633 = vmatpush1.bf16.msra.mxu0 %v2615
        %2634 = vmatprep.subr.bf16.mxu0 0
        %2635 = vmatpush1.bf16.msra.mxu0 %v2616
        %2636 = vmatprep.subr.bf16.mxu0 0
        %2637 = vmatpush1.bf16.msra.mxu0 %v2617
        %2638 = vmatprep.subr.bf16.mxu0 0
        %2639 = vmatpush1.bf16.msra.mxu0 %v2618
        %2640 = vmatprep.subr.bf16.mxu0 0
        %2641 = vmatpush1.bf16.msra.mxu0 %v2619
        %2642 = vmatprep.subr.bf16.mxu0 0
        %2643 = vmatpush1.bf16.msra.mxu0 %v2620
        %2644 = vmatprep.subr.bf16.mxu0 0
        %2645 = vmatpush1.bf16.msra.mxu0 %v2621
        %2646 = vmatprep.subr.bf16.mxu0 0
        %2647 = vmatpush1.bf16.msra.mxu0 0
        %2648 = vmatprep.subr.bf16.mxu0 0
        %2649 = vmatpush1.bf16.msra.mxu0 0
        %2650 = vmatprep.subr.bf16.mxu0 0
        %2651 = vmatpush1.bf16.msra.mxu0 0
        %2652 = vmatprep.subr.bf16.mxu0 0
        %2653 = vmatpush1.bf16.msra.mxu0 0
        %2654 = vmatprep.subr.bf16.mxu0 0
        %2655 = vmatpush1.bf16.msra.mxu0 0
        %2656 = vmatprep.subr.bf16.mxu0 0
        %2657 = vmatpush1.bf16.msra.mxu0 0
        %2658 = vmatprep.subr.bf16.mxu0 0
        %2659 = vmatpush1.bf16.msra.mxu0 0
        %2660 = vmatprep.subr.bf16.mxu0 0
        %2661 = vmatpush1.bf16.msra.mxu0 0
        %2662 = vmatprep.mubr.bf16.mxu0 0
        %2663 = vmatmul.mubr.bf16.gmra.mrb[0].mxu0 %v2342
        %v2664 = vpop.f32.mrb[0].mxu0
        %v2665 = vadd.f32 %v2581, %v2664
        %v2666 = vpop.f32.mrb[0].mxu0
        %v2667 = vpop.f32.mrb[0].mxu0
        %v2668 = vpop.f32.mrb[0].mxu0
        %2669 = vdwg.mxu0
        %v2670 = vpack.c.bf16 %v2447, %v2447
        %2672 = vrot.lane.b32.xlu0 %v2670, 96
        %v2673 = vpop.permute.xlu0 %2672
        %2674 = vrot.lane.b32.xlu0 %v2670, 64
        %v2675 = vpop.permute.xlu0 %2674
        %2676 = vrot.lane.b32.xlu0 %v2670, 32
        %v2677 = vpop.permute.xlu0 %2676
        %v2678 = vpack.c.bf16 %v2556, %v2556
        %2680 = vrot.lane.b32.xlu0 %v2678, 96
        %v2681 = vpop.permute.xlu0 %2680
        %2682 = vrot.lane.b32.xlu0 %v2678, 64
        %v2683 = vpop.permute.xlu0 %2682
        %2684 = vrot.lane.b32.xlu0 %v2678, 32
        %v2685 = vpop.permute.xlu0 %2684
        %v2686 = vpack.c.bf16 %v2665, %v2665
        %2688 = vrot.lane.b32.xlu0 %v2686, 96
        %v2689 = vpop.permute.xlu0 %2688
        %2690 = vrot.lane.b32.xlu0 %v2686, 64
        %v2691 = vpop.permute.xlu0 %2690
        %2692 = vrot.lane.b32.xlu0 %v2686, 32
        %v2693 = vpop.permute.xlu0 %2692
        %v2695 = vsel %vm579, %v2670, 0
        %v2698 = vsel %vm579, %v2678, 0
        %2700 = vmatprep.subr.bf16.mxu0 0
        %2701 = vmatpush1.bf16.xpose.msra.mxu0 %v2698
        %2702 = vmatprep.subr.bf16.mxu0 0
        %2703 = vmatpush1.bf16.xpose.msra.mxu0 0
        %2704 = vmatprep.subr.bf16.mxu0 0
        %2705 = vmatpush1.bf16.xpose.msra.mxu0 0
        %2706 = vmatprep.subr.bf16.mxu0 0
        %2707 = vmatpush1.bf16.xpose.msra.mxu0 0
        %2708 = vmatprep.subr.bf16.mxu0 0
        %2709 = vmatpush1.bf16.xpose.msra.mxu0 0
        %2710 = vmatprep.subr.bf16.mxu0 0
        %2711 = vmatpush1.bf16.xpose.msra.mxu0 0
        %2712 = vmatprep.subr.bf16.mxu0 0
        %2713 = vmatpush1.bf16.xpose.msra.mxu0 0
        %2714 = vmatprep.subr.bf16.mxu0 0
        %2715 = vmatpush1.bf16.xpose.msra.mxu0 0
        %2716 = vmatprep.subr.bf16.mxu0 0
        %2717 = vmatpush1.bf16.xpose.msra.mxu0 0
        %2718 = vmatprep.subr.bf16.mxu0 0
        %2719 = vmatpush1.bf16.xpose.msra.mxu0 0
        %2720 = vmatprep.subr.bf16.mxu0 0
        %2721 = vmatpush1.bf16.xpose.msra.mxu0 0
        %2722 = vmatprep.subr.bf16.mxu0 0
        %2723 = vmatpush1.bf16.xpose.msra.mxu0 0
        %2724 = vmatprep.subr.bf16.mxu0 0
        %2725 = vmatpush1.bf16.xpose.msra.mxu0 0
        %2726 = vmatprep.subr.bf16.mxu0 0
        %2727 = vmatpush1.bf16.xpose.msra.mxu0 0
        %2728 = vmatprep.subr.bf16.mxu0 0
        %2729 = vmatpush1.bf16.xpose.msra.mxu0 0
        %2730 = vmatprep.subr.bf16.mxu0 0
        %2731 = vmatpush1.bf16.xpose.msra.mxu0 0
        %2732 = vmatprep.mubr.bf16.mxu0 0
        %2733 = vmatmul.mubr.bf16.gmra.mrb[0].mxu0 %v2695
        %v2734 = vpop.f32.mrb[0].mxu0
        %v2735 = vadd.f32 0.0, %v2734
        %v2736 = vpop.f32.mrb[0].mxu0
        %v2737 = vpop.f32.mrb[0].mxu0
        %v2738 = vpop.f32.mrb[0].mxu0
        %2739 = vdwg.mxu0
        %v2741 = vsel %vm579, %v2673, 0
        %v2744 = vsel %vm579, %v2681, 0
        %2746 = vmatprep.subr.bf16.mxu0 0
        %2747 = vmatpush1.bf16.xpose.msra.mxu0 %v2744
        %2748 = vmatprep.subr.bf16.mxu0 0
        %2749 = vmatpush1.bf16.xpose.msra.mxu0 0
        %2750 = vmatprep.subr.bf16.mxu0 0
        %2751 = vmatpush1.bf16.xpose.msra.mxu0 0
        %2752 = vmatprep.subr.bf16.mxu0 0
        %2753 = vmatpush1.bf16.xpose.msra.mxu0 0
        %2754 = vmatprep.subr.bf16.mxu0 0
        %2755 = vmatpush1.bf16.xpose.msra.mxu0 0
        %2756 = vmatprep.subr.bf16.mxu0 0
        %2757 = vmatpush1.bf16.xpose.msra.mxu0 0
        %2758 = vmatprep.subr.bf16.mxu0 0
        %2759 = vmatpush1.bf16.xpose.msra.mxu0 0
        %2760 = vmatprep.subr.bf16.mxu0 0
        %2761 = vmatpush1.bf16.xpose.msra.mxu0 0
        %2762 = vmatprep.subr.bf16.mxu0 0
        %2763 = vmatpush1.bf16.xpose.msra.mxu0 0
        %2764 = vmatprep.subr.bf16.mxu0 0
        %2765 = vmatpush1.bf16.xpose.msra.mxu0 0
        %2766 = vmatprep.subr.bf16.mxu0 0
        %2767 = vmatpush1.bf16.xpose.msra.mxu0 0
        %2768 = vmatprep.subr.bf16.mxu0 0
        %2769 = vmatpush1.bf16.xpose.msra.mxu0 0
        %2770 = vmatprep.subr.bf16.mxu0 0
        %2771 = vmatpush1.bf16.xpose.msra.mxu0 0
        %2772 = vmatprep.subr.bf16.mxu0 0
        %2773 = vmatpush1.bf16.xpose.msra.mxu0 0
        %2774 = vmatprep.subr.bf16.mxu0 0
        %2775 = vmatpush1.bf16.xpose.msra.mxu0 0
        %2776 = vmatprep.subr.bf16.mxu0 0
        %2777 = vmatpush1.bf16.xpose.msra.mxu0 0
        %2778 = vmatprep.mubr.bf16.mxu0 0
        %2779 = vmatmul.mubr.bf16.gmra.mrb[0].mxu0 %v2741
        %v2780 = vpop.f32.mrb[0].mxu0
        %v2781 = vadd.f32 0.0, %v2780
        %v2782 = vpop.f32.mrb[0].mxu0
        %v2783 = vpop.f32.mrb[0].mxu0
        %v2784 = vpop.f32.mrb[0].mxu0
        %2785 = vdwg.mxu0
        %v2787 = vsel %vm579, %v2675, 0
        %v2790 = vsel %vm579, %v2683, 0
        %2792 = vmatprep.subr.bf16.mxu0 0
        %2793 = vmatpush1.bf16.xpose.msra.mxu0 %v2790
        %2794 = vmatprep.subr.bf16.mxu0 0
        %2795 = vmatpush1.bf16.xpose.msra.mxu0 0
        %2796 = vmatprep.subr.bf16.mxu0 0
        %2797 = vmatpush1.bf16.xpose.msra.mxu0 0
        %2798 = vmatprep.subr.bf16.mxu0 0
        %2799 = vmatpush1.bf16.xpose.msra.mxu0 0
        %2800 = vmatprep.subr.bf16.mxu0 0
        %2801 = vmatpush1.bf16.xpose.msra.mxu0 0
        %2802 = vmatprep.subr.bf16.mxu0 0
        %2803 = vmatpush1.bf16.xpose.msra.mxu0 0
        %2804 = vmatprep.subr.bf16.mxu0 0
        %2805 = vmatpush1.bf16.xpose.msra.mxu0 0
        %2806 = vmatprep.subr.bf16.mxu0 0
        %2807 = vmatpush1.bf16.xpose.msra.mxu0 0
        %2808 = vmatprep.subr.bf16.mxu0 0
        %2809 = vmatpush1.bf16.xpose.msra.mxu0 0
        %2810 = vmatprep.subr.bf16.mxu0 0
        %2811 = vmatpush1.bf16.xpose.msra.mxu0 0
        %2812 = vmatprep.subr.bf16.mxu0 0
        %2813 = vmatpush1.bf16.xpose.msra.mxu0 0
        %2814 = vmatprep.subr.bf16.mxu0 0
        %2815 = vmatpush1.bf16.xpose.msra.mxu0 0
        %2816 = vmatprep.subr.bf16.mxu0 0
        %2817 = vmatpush1.bf16.xpose.msra.mxu0 0
        %2818 = vmatprep.subr.bf16.mxu0 0
        %2819 = vmatpush1.bf16.xpose.msra.mxu0 0
        %2820 = vmatprep.subr.bf16.mxu0 0
        %2821 = vmatpush1.bf16.xpose.msra.mxu0 0
        %2822 = vmatprep.subr.bf16.mxu0 0
        %2823 = vmatpush1.bf16.xpose.msra.mxu0 0
        %2824 = vmatprep.mubr.bf16.mxu0 0
        %2825 = vmatmul.mubr.bf16.gmra.mrb[0].mxu0 %v2787
        %v2826 = vpop.f32.mrb[0].mxu0
        %v2827 = vadd.f32 0.0, %v2826
        %v2828 = vpop.f32.mrb[0].mxu0
        %v2829 = vpop.f32.mrb[0].mxu0
        %v2830 = vpop.f32.mrb[0].mxu0
        %2831 = vdwg.mxu0
        %v2833 = vsel %vm579, %v2677, 0
        %v2836 = vsel %vm579, %v2685, 0
        %2838 = vmatprep.subr.bf16.mxu0 0
        %2839 = vmatpush1.bf16.xpose.msra.mxu0 %v2836
        %2840 = vmatprep.subr.bf16.mxu0 0
        %2841 = vmatpush1.bf16.xpose.msra.mxu0 0
        %2842 = vmatprep.subr.bf16.mxu0 0
        %2843 = vmatpush1.bf16.xpose.msra.mxu0 0
        %2844 = vmatprep.subr.bf16.mxu0 0
        %2845 = vmatpush1.bf16.xpose.msra.mxu0 0
        %2846 = vmatprep.subr.bf16.mxu0 0
        %2847 = vmatpush1.bf16.xpose.msra.mxu0 0
        %2848 = vmatprep.subr.bf16.mxu0 0
        %2849 = vmatpush1.bf16.xpose.msra.mxu0 0
        %2850 = vmatprep.subr.bf16.mxu0 0
        %2851 = vmatpush1.bf16.xpose.msra.mxu0 0
        %2852 = vmatprep.subr.bf16.mxu0 0
        %2853 = vmatpush1.bf16.xpose.msra.mxu0 0
        %2854 = vmatprep.subr.bf16.mxu0 0
        %2855 = vmatpush1.bf16.xpose.msra.mxu0 0
        %2856 = vmatprep.subr.bf16.mxu0 0
        %2857 = vmatpush1.bf16.xpose.msra.mxu0 0
        %2858 = vmatprep.subr.bf16.mxu0 0
        %2859 = vmatpush1.bf16.xpose.msra.mxu0 0
        %2860 = vmatprep.subr.bf16.mxu0 0
        %2861 = vmatpush1.bf16.xpose.msra.mxu0 0
        %2862 = vmatprep.subr.bf16.mxu0 0
        %2863 = vmatpush1.bf16.xpose.msra.mxu0 0
        %2864 = vmatprep.subr.bf16.mxu0 0
        %2865 = vmatpush1.bf16.xpose.msra.mxu0 0
        %2866 = vmatprep.subr.bf16.mxu0 0
        %2867 = vmatpush1.bf16.xpose.msra.mxu0 0
        %2868 = vmatprep.subr.bf16.mxu0 0
        %2869 = vmatpush1.bf16.xpose.msra.mxu0 0
        %2870 = vmatprep.mubr.bf16.mxu0 0
        %2871 = vmatmul.mubr.bf16.gmra.mrb[0].mxu0 %v2833
        %v2872 = vpop.f32.mrb[0].mxu0
        %v2873 = vadd.f32 0.0, %v2872
        %v2874 = vpop.f32.mrb[0].mxu0
        %v2875 = vpop.f32.mrb[0].mxu0
        %v2876 = vpop.f32.mrb[0].mxu0
        %2877 = vdwg.mxu0
        %v2878 = vsel %vm765, %v2735, -1e+09
        %v2879 = vsel %vm765, %v2781, -1e+09
        %v2880 = vsel %vm765, %v2827, -1e+09
        %v2881 = vsel %vm765, %v2873, -1e+09
        %v2882 = vsel %vm770, %v2878, -inf
        %2883 = vmax.xlane.f32.xlu0 %v2882
        %v2884 = vpop.xlane.xlu0 %2883
        %v2885 = vsel %vm770, %v2879, -inf
        %2886 = vmax.xlane.f32.xlu0 %v2885
        %v2887 = vpop.xlane.xlu0 %2886
        %v2888 = vsel %vm770, %v2880, -inf
        %2889 = vmax.xlane.f32.xlu0 %v2888
        %v2890 = vpop.xlane.xlu0 %2889
        %v2891 = vsel %vm770, %v2881, -inf
        %2892 = vmax.xlane.f32.xlu0 %v2891
        %v2893 = vpop.xlane.xlu0 %2892
        %v2894 = vsub.f32 %v2878, %v2884
        %v2895 = vsub.f32 %v2879, %v2887
        %v2896 = vsub.f32 %v2880, %v2890
        %v2897 = vsub.f32 %v2881, %v2893
        %v2898 = vmul.f32 %v2894, 1.442695
        %v2899 = vpow.pop %v2898
        %v2900 = vmul.f32 %v2895, 1.442695
        %v2901 = vpow.pop %v2900
        %v2902 = vmul.f32 %v2896, 1.442695
        %v2903 = vpow.pop %v2902
        %v2904 = vmul.f32 %v2897, 1.442695
        %v2905 = vpow.pop %v2904
        %v2906 = vsel %vm770, %v2899, 0.0
        %2907 = vadd.xlane.f32.xlu0 %v2906
        %v2908 = vpop.xlane.xlu0 %2907
        %v2909 = vsel %vm770, %v2901, 0.0
        %2910 = vadd.xlane.f32.xlu0 %v2909
        %v2911 = vpop.xlane.xlu0 %2910
        %v2912 = vsel %vm770, %v2903, 0.0
        %2913 = vadd.xlane.f32.xlu0 %v2912
        %v2914 = vpop.xlane.xlu0 %2913
        %v2915 = vsel %vm770, %v2905, 0.0
        %2916 = vadd.xlane.f32.xlu0 %v2915
        %v2917 = vpop.xlane.xlu0 %2916
        %v2918 = vrcp.pop %v2908
        %v2919 = vrcp.pop %v2911
        %v2920 = vrcp.pop %v2914
        %v2921 = vrcp.pop %v2917
        %v2922 = vmul.f32 %v2899, %v2918
        %v2923 = vmul.f32 %v2901, %v2919
        %v2924 = vmul.f32 %v2903, %v2920
        %v2925 = vmul.f32 %v2905, %v2921
        %v2926 = vpack.c.bf16 %v2922, %v2922
        %v2927 = vpack.c.bf16 %v2923, %v2923
        %v2928 = vpack.c.bf16 %v2924, %v2924
        %v2929 = vpack.c.bf16 %v2925, %v2925
        %v2931 = vsel %vm770, %v2926, 0
        %v2934 = vsel %vm822, %v2686, 0
        %2936 = vmatprep.subr.bf16.mxu0 0
        %2937 = vmatpush1.bf16.msra.mxu0 %v2934
        %2938 = vmatprep.subr.bf16.mxu0 0
        %2939 = vmatpush1.bf16.msra.mxu0 0
        %2940 = vmatprep.subr.bf16.mxu0 0
        %2941 = vmatpush1.bf16.msra.mxu0 0
        %2942 = vmatprep.subr.bf16.mxu0 0
        %2943 = vmatpush1.bf16.msra.mxu0 0
        %2944 = vmatprep.subr.bf16.mxu0 0
        %2945 = vmatpush1.bf16.msra.mxu0 0
        %2946 = vmatprep.subr.bf16.mxu0 0
        %2947 = vmatpush1.bf16.msra.mxu0 0
        %2948 = vmatprep.subr.bf16.mxu0 0
        %2949 = vmatpush1.bf16.msra.mxu0 0
        %2950 = vmatprep.subr.bf16.mxu0 0
        %2951 = vmatpush1.bf16.msra.mxu0 0
        %2952 = vmatprep.subr.bf16.mxu0 0
        %2953 = vmatpush1.bf16.msra.mxu0 0
        %2954 = vmatprep.subr.bf16.mxu0 0
        %2955 = vmatpush1.bf16.msra.mxu0 0
        %2956 = vmatprep.subr.bf16.mxu0 0
        %2957 = vmatpush1.bf16.msra.mxu0 0
        %2958 = vmatprep.subr.bf16.mxu0 0
        %2959 = vmatpush1.bf16.msra.mxu0 0
        %2960 = vmatprep.subr.bf16.mxu0 0
        %2961 = vmatpush1.bf16.msra.mxu0 0
        %2962 = vmatprep.subr.bf16.mxu0 0
        %2963 = vmatpush1.bf16.msra.mxu0 0
        %2964 = vmatprep.subr.bf16.mxu0 0
        %2965 = vmatpush1.bf16.msra.mxu0 0
        %2966 = vmatprep.subr.bf16.mxu0 0
        %2967 = vmatpush1.bf16.msra.mxu0 0
        %2968 = vmatprep.mubr.bf16.mxu0 0
        %2969 = vmatmul.mubr.bf16.gmra.mrb[0].mxu0 %v2931
        %v2970 = vpop.f32.mrb[0].mxu0
        %v2971 = vadd.f32 0.0, %v2970
        %v2972 = vpop.f32.mrb[0].mxu0
        %v2973 = vpop.f32.mrb[0].mxu0
        %v2974 = vpop.f32.mrb[0].mxu0
        %2975 = vdwg.mxu0
        %v2977 = vsel %vm770, %v2927, 0
        %v2980 = vsel %vm822, %v2689, 0
        %2982 = vmatprep.subr.bf16.mxu0 0
        %2983 = vmatpush1.bf16.msra.mxu0 %v2980
        %2984 = vmatprep.subr.bf16.mxu0 0
        %2985 = vmatpush1.bf16.msra.mxu0 0
        %2986 = vmatprep.subr.bf16.mxu0 0
        %2987 = vmatpush1.bf16.msra.mxu0 0
        %2988 = vmatprep.subr.bf16.mxu0 0
        %2989 = vmatpush1.bf16.msra.mxu0 0
        %2990 = vmatprep.subr.bf16.mxu0 0
        %2991 = vmatpush1.bf16.msra.mxu0 0
        %2992 = vmatprep.subr.bf16.mxu0 0
        %2993 = vmatpush1.bf16.msra.mxu0 0
        %2994 = vmatprep.subr.bf16.mxu0 0
        %2995 = vmatpush1.bf16.msra.mxu0 0
        %2996 = vmatprep.subr.bf16.mxu0 0
        %2997 = vmatpush1.bf16.msra.mxu0 0
        %2998 = vmatprep.subr.bf16.mxu0 0
        %2999 = vmatpush1.bf16.msra.mxu0 0
        %3000 = vmatprep.subr.bf16.mxu0 0
        %3001 = vmatpush1.bf16.msra.mxu0 0
        %3002 = vmatprep.subr.bf16.mxu0 0
        %3003 = vmatpush1.bf16.msra.mxu0 0
        %3004 = vmatprep.subr.bf16.mxu0 0
        %3005 = vmatpush1.bf16.msra.mxu0 0
        %3006 = vmatprep.subr.bf16.mxu0 0
        %3007 = vmatpush1.bf16.msra.mxu0 0
        %3008 = vmatprep.subr.bf16.mxu0 0
        %3009 = vmatpush1.bf16.msra.mxu0 0
        %3010 = vmatprep.subr.bf16.mxu0 0
        %3011 = vmatpush1.bf16.msra.mxu0 0
        %3012 = vmatprep.subr.bf16.mxu0 0
        %3013 = vmatpush1.bf16.msra.mxu0 0
        %3014 = vmatprep.mubr.bf16.mxu0 0
        %3015 = vmatmul.mubr.bf16.gmra.mrb[0].mxu0 %v2977
        %v3016 = vpop.f32.mrb[0].mxu0
        %v3017 = vadd.f32 0.0, %v3016
        %v3018 = vpop.f32.mrb[0].mxu0
        %v3019 = vpop.f32.mrb[0].mxu0
        %v3020 = vpop.f32.mrb[0].mxu0
        %3021 = vdwg.mxu0
        %v3023 = vsel %vm770, %v2928, 0
        %v3026 = vsel %vm822, %v2691, 0
        %3028 = vmatprep.subr.bf16.mxu0 0
        %3029 = vmatpush1.bf16.msra.mxu0 %v3026
        %3030 = vmatprep.subr.bf16.mxu0 0
        %3031 = vmatpush1.bf16.msra.mxu0 0
        %3032 = vmatprep.subr.bf16.mxu0 0
        %3033 = vmatpush1.bf16.msra.mxu0 0
        %3034 = vmatprep.subr.bf16.mxu0 0
        %3035 = vmatpush1.bf16.msra.mxu0 0
        %3036 = vmatprep.subr.bf16.mxu0 0
        %3037 = vmatpush1.bf16.msra.mxu0 0
        %3038 = vmatprep.subr.bf16.mxu0 0
        %3039 = vmatpush1.bf16.msra.mxu0 0
        %3040 = vmatprep.subr.bf16.mxu0 0
        %3041 = vmatpush1.bf16.msra.mxu0 0
        %3042 = vmatprep.subr.bf16.mxu0 0
        %3043 = vmatpush1.bf16.msra.mxu0 0
        %3044 = vmatprep.subr.bf16.mxu0 0
        %3045 = vmatpush1.bf16.msra.mxu0 0
        %3046 = vmatprep.subr.bf16.mxu0 0
        %3047 = vmatpush1.bf16.msra.mxu0 0
        %3048 = vmatprep.subr.bf16.mxu0 0
        %3049 = vmatpush1.bf16.msra.mxu0 0
        %3050 = vmatprep.subr.bf16.mxu0 0
        %3051 = vmatpush1.bf16.msra.mxu0 0
        %3052 = vmatprep.subr.bf16.mxu0 0
        %3053 = vmatpush1.bf16.msra.mxu0 0
        %3054 = vmatprep.subr.bf16.mxu0 0
        %3055 = vmatpush1.bf16.msra.mxu0 0
        %3056 = vmatprep.subr.bf16.mxu0 0
        %3057 = vmatpush1.bf16.msra.mxu0 0
        %3058 = vmatprep.subr.bf16.mxu0 0
        %3059 = vmatpush1.bf16.msra.mxu0 0
        %3060 = vmatprep.mubr.bf16.mxu0 0
        %3061 = vmatmul.mubr.bf16.gmra.mrb[0].mxu0 %v3023
        %v3062 = vpop.f32.mrb[0].mxu0
        %v3063 = vadd.f32 0.0, %v3062
        %v3064 = vpop.f32.mrb[0].mxu0
        %v3065 = vpop.f32.mrb[0].mxu0
        %v3066 = vpop.f32.mrb[0].mxu0
        %3067 = vdwg.mxu0
        %v3069 = vsel %vm770, %v2929, 0
        %v3072 = vsel %vm822, %v2693, 0
        %3074 = vmatprep.subr.bf16.mxu0 0
        %3075 = vmatpush1.bf16.msra.mxu0 %v3072
        %3076 = vmatprep.subr.bf16.mxu0 0
        %3077 = vmatpush1.bf16.msra.mxu0 0
        %3078 = vmatprep.subr.bf16.mxu0 0
        %3079 = vmatpush1.bf16.msra.mxu0 0
        %3080 = vmatprep.subr.bf16.mxu0 0
        %3081 = vmatpush1.bf16.msra.mxu0 0
        %3082 = vmatprep.subr.bf16.mxu0 0
        %3083 = vmatpush1.bf16.msra.mxu0 0
        %3084 = vmatprep.subr.bf16.mxu0 0
        %3085 = vmatpush1.bf16.msra.mxu0 0
        %3086 = vmatprep.subr.bf16.mxu0 0
        %3087 = vmatpush1.bf16.msra.mxu0 0
        %3088 = vmatprep.subr.bf16.mxu0 0
        %3089 = vmatpush1.bf16.msra.mxu0 0
        %3090 = vmatprep.subr.bf16.mxu0 0
        %3091 = vmatpush1.bf16.msra.mxu0 0
        %3092 = vmatprep.subr.bf16.mxu0 0
        %3093 = vmatpush1.bf16.msra.mxu0 0
        %3094 = vmatprep.subr.bf16.mxu0 0
        %3095 = vmatpush1.bf16.msra.mxu0 0
        %3096 = vmatprep.subr.bf16.mxu0 0
        %3097 = vmatpush1.bf16.msra.mxu0 0
        %3098 = vmatprep.subr.bf16.mxu0 0
        %3099 = vmatpush1.bf16.msra.mxu0 0
        %3100 = vmatprep.subr.bf16.mxu0 0
        %3101 = vmatpush1.bf16.msra.mxu0 0
        %3102 = vmatprep.subr.bf16.mxu0 0
        %3103 = vmatpush1.bf16.msra.mxu0 0
        %3104 = vmatprep.subr.bf16.mxu0 0
        %3105 = vmatpush1.bf16.msra.mxu0 0
        %3106 = vmatprep.mubr.bf16.mxu0 0
        %3107 = vmatmul.mubr.bf16.gmra.mrb[0].mxu0 %v3069
        %v3108 = vpop.f32.mrb[0].mxu0
        %v3109 = vadd.f32 0.0, %v3108
        %v3110 = vpop.f32.mrb[0].mxu0
        %v3111 = vpop.f32.mrb[0].mxu0
        %v3112 = vpop.f32.mrb[0].mxu0
        %3113 = vdwg.mxu0
        %3115 = vrot.lane.b32.xlu0 %v3017, 32
        %v3116 = vpop.permute.xlu0 %3115
        %3119 = vrot.lane.b32.xlu0 %v3063, 64
        %v3120 = vpop.permute.xlu0 %3119
        %3123 = vrot.lane.b32.xlu0 %v3109, 96
        %v3124 = vpop.permute.xlu0 %3123
        %v3126 = vsel %vm579, %v2971, %v3116
        %v3127 = vsel %vm1017, %v3126, %v3120
        %v3128 = vsel %vm1019, %v3127, %v3124
        %v3129 = vpack.c.bf16 %v3128, %v3128
        %v3130 = vld [vmem:[#allocation2 + $0x340] sm:$0xf]
        %v3131 = vld [vmem:[#allocation2 + $0x344] sm:$0xf]
        %v3132 = vld [vmem:[#allocation2 + $0x348] sm:$0xf]
        %v3133 = vld [vmem:[#allocation2 + $0x34c] sm:$0xf]
        %v3134 = vld [vmem:[#allocation2 + $0x350] sm:$0xf]
        %v3135 = vld [vmem:[#allocation2 + $0x354] sm:$0xf]
        %v3136 = vld [vmem:[#allocation2 + $0x358] sm:$0xf]
        %v3137 = vld [vmem:[#allocation2 + $0x35c] sm:$0xf]
        %v3138 = vld [vmem:[#allocation2 + $0x360] sm:$0xf]
        %v3139 = vld [vmem:[#allocation2 + $0x364] sm:$0xf]
        %v3140 = vld [vmem:[#allocation2 + $0x368] sm:$0xf]
        %v3141 = vld [vmem:[#allocation2 + $0x36c] sm:$0xf]
        %v3142 = vld [vmem:[#allocation2 + $0x370] sm:$0xf]
        %v3143 = vld [vmem:[#allocation2 + $0x374] sm:$0xf]
        %v3144 = vld [vmem:[#allocation2 + $0x378] sm:$0xf]
        %v3145 = vld [vmem:[#allocation2 + $0x37c] sm:$0xf]
        %v3146 = vld [vmem:[%s2 + $0xe] sm:$0x1]
        %v3147 = vlaneseq
        %v3148 = vshrl.u32 %v3147, 7
        %v3149 = vsub.s32 0, %v3148
        %v3150 = vrot.slane %v3146, %v3149
        %v3167 = vunpack.c.l.b16 %v3130
        %v3168 = vunpack.c.l.b16 %v3131
        %v3169 = vunpack.c.l.b16 %v3132
        %v3170 = vunpack.c.l.b16 %v3133
        %v3171 = vunpack.c.l.b16 %v3134
        %v3172 = vunpack.c.l.b16 %v3135
        %v3173 = vunpack.c.l.b16 %v3136
        %v3174 = vunpack.c.l.b16 %v3137
        %v3175 = vunpack.c.l.b16 %v3138
        %v3176 = vunpack.c.l.b16 %v3139
        %v3177 = vunpack.c.l.b16 %v3140
        %v3178 = vunpack.c.l.b16 %v3141
        %v3179 = vunpack.c.l.b16 %v3142
        %v3180 = vunpack.c.l.b16 %v3143
        %v3181 = vunpack.c.l.b16 %v3144
        %v3182 = vunpack.c.l.b16 %v3145
        %v3183 = vpack.c.b16 %v3168, %v3167
        %v3184 = vpack.c.b16 %v3170, %v3169
        %v3185 = vpack.c.b16 %v3172, %v3171
        %v3186 = vpack.c.b16 %v3174, %v3173
        %v3187 = vpack.c.b16 %v3176, %v3175
        %v3188 = vpack.c.b16 %v3178, %v3177
        %v3189 = vpack.c.b16 %v3180, %v3179
        %v3190 = vpack.c.b16 %v3182, %v3181
        %3199 = vmatprep.subr.bf16.mxu0 0
        %3200 = vmatpush1.bf16.msra.mxu0 %v3183
        %3201 = vmatprep.subr.bf16.mxu0 0
        %3202 = vmatpush1.bf16.msra.mxu0 %v3184
        %3203 = vmatprep.subr.bf16.mxu0 0
        %3204 = vmatpush1.bf16.msra.mxu0 %v3185
        %3205 = vmatprep.subr.bf16.mxu0 0
        %3206 = vmatpush1.bf16.msra.mxu0 %v3186
        %3207 = vmatprep.subr.bf16.mxu0 0
        %3208 = vmatpush1.bf16.msra.mxu0 %v3187
        %3209 = vmatprep.subr.bf16.mxu0 0
        %3210 = vmatpush1.bf16.msra.mxu0 %v3188
        %3211 = vmatprep.subr.bf16.mxu0 0
        %3212 = vmatpush1.bf16.msra.mxu0 %v3189
        %3213 = vmatprep.subr.bf16.mxu0 0
        %3214 = vmatpush1.bf16.msra.mxu0 %v3190
        %3215 = vmatprep.subr.bf16.mxu0 0
        %3216 = vmatpush1.bf16.msra.mxu0 0
        %3217 = vmatprep.subr.bf16.mxu0 0
        %3218 = vmatpush1.bf16.msra.mxu0 0
        %3219 = vmatprep.subr.bf16.mxu0 0
        %3220 = vmatpush1.bf16.msra.mxu0 0
        %3221 = vmatprep.subr.bf16.mxu0 0
        %3222 = vmatpush1.bf16.msra.mxu0 0
        %3223 = vmatprep.subr.bf16.mxu0 0
        %3224 = vmatpush1.bf16.msra.mxu0 0
        %3225 = vmatprep.subr.bf16.mxu0 0
        %3226 = vmatpush1.bf16.msra.mxu0 0
        %3227 = vmatprep.subr.bf16.mxu0 0
        %3228 = vmatpush1.bf16.msra.mxu0 0
        %3229 = vmatprep.subr.bf16.mxu0 0
        %3230 = vmatpush1.bf16.msra.mxu0 0
        %3231 = vmatprep.mubr.bf16.mxu0 0
        %3232 = vmatmul.mubr.bf16.gmra.mrb[0].mxu0 %v3129
        %v3233 = vpop.f32.mrb[0].mxu0
        %v3234 = vadd.f32 %v3150, %v3233
        %v3235 = vpop.f32.mrb[0].mxu0
        %v3236 = vpop.f32.mrb[0].mxu0
        %v3237 = vpop.f32.mrb[0].mxu0
        %3238 = vdwg.mxu0
        %v3239 = vadd.f32 %v2310, %v3234
        %v3240 = vld [vmem:[%s2 + $0x18] sm:$0x1]
        %v3241 = vld [vmem:[%s2 + $0x1e] sm:$0x1]
        %3242 = vadd.xlane.f32.xlu0 %v3239
        %v3243 = vpop.xlane.xlu0 %3242
        %v3244 = vmul.f32 %v3243, 0.03125
        %v3245 = vsub.f32 %v3239, %v3244
        %v3246 = vsel %vm201, %v3245, 0.0
        %v3247 = vmul.f32 %v3246, %v3246
        %3248 = vadd.xlane.f32.xlu0 %v3247
        %v3249 = vpop.xlane.xlu0 %3248
        %v3250 = vmul.f32 %v3249, 0.032258064
        %v3251 = vlaneseq
        %v3252 = vshrl.u32 %v3251, 7
        %v3253 = vsub.s32 0, %v3252
        %v3254 = vrot.slane %v3240, %v3253
        %v3255 = vmul.f32 %v3254, %v3246
        %v3256 = vrsqrt.pop %v3250
        %v3257 = vmul.f32 %v3250, %v3256
        %vm3258 = vcmp.eq.f32.partialorder %v3250, inf
        %v3259 = vsel %vm3258, %v3250, %v3257
        %vm3260 = vcmp.eq.f32.partialorder %v3250, 0.0
        %v3261 = vand.u32 %v3250, 2147483648
        %v3262 = vsel %vm3260, %v3261, %v3259
        %v3263 = vadd.f32 %v3262, 1e-06
        %v3264 = vrcp.pop %v3263
        %v3265 = vmul.f32 %v3255, %v3264
        %v3266 = vlaneseq
        %v3267 = vshrl.u32 %v3266, 7
        %v3268 = vsub.s32 0, %v3267
        %v3269 = vrot.slane %v3241, %v3268
        %v3270 = vadd.f32 %v3265, %v3269
        %v3271 = vpack.c.bf16 %v3270, %v3270
        %v3272 = vld [vmem:[#allocation2 + $0x380] sm:$0xf]
        %v3273 = vld [vmem:[#allocation2 + $0x384] sm:$0xf]
        %v3274 = vld [vmem:[#allocation2 + $0x388] sm:$0xf]
        %v3275 = vld [vmem:[#allocation2 + $0x38c] sm:$0xf]
        %v3276 = vld [vmem:[#allocation2 + $0x390] sm:$0xf]
        %v3277 = vld [vmem:[#allocation2 + $0x394] sm:$0xf]
        %v3278 = vld [vmem:[#allocation2 + $0x398] sm:$0xf]
        %v3279 = vld [vmem:[#allocation2 + $0x39c] sm:$0xf]
        %v3280 = vld [vmem:[#allocation2 + $0x3a0] sm:$0xf]
        %v3281 = vld [vmem:[#allocation2 + $0x3a4] sm:$0xf]
        %v3282 = vld [vmem:[#allocation2 + $0x3a8] sm:$0xf]
        %v3283 = vld [vmem:[#allocation2 + $0x3ac] sm:$0xf]
        %v3284 = vld [vmem:[#allocation2 + $0x3b0] sm:$0xf]
        %v3285 = vld [vmem:[#allocation2 + $0x3b4] sm:$0xf]
        %v3286 = vld [vmem:[#allocation2 + $0x3b8] sm:$0xf]
        %v3287 = vld [vmem:[#allocation2 + $0x3bc] sm:$0xf]
        %v3288 = vld [vmem:[%s2 + $0x3] sm:$0x1]
        %v3289 = vlaneseq
        %v3290 = vshrl.u32 %v3289, 7
        %v3291 = vsub.s32 0, %v3290
        %v3292 = vrot.slane %v3288, %v3291
        %v3309 = vunpack.c.l.b16 %v3272
        %v3310 = vunpack.c.l.b16 %v3273
        %v3311 = vunpack.c.l.b16 %v3274
        %v3312 = vunpack.c.l.b16 %v3275
        %v3313 = vunpack.c.l.b16 %v3276
        %v3314 = vunpack.c.l.b16 %v3277
        %v3315 = vunpack.c.l.b16 %v3278
        %v3316 = vunpack.c.l.b16 %v3279
        %v3317 = vunpack.c.l.b16 %v3280
        %v3318 = vunpack.c.l.b16 %v3281
        %v3319 = vunpack.c.l.b16 %v3282
        %v3320 = vunpack.c.l.b16 %v3283
        %v3321 = vunpack.c.l.b16 %v3284
        %v3322 = vunpack.c.l.b16 %v3285
        %v3323 = vunpack.c.l.b16 %v3286
        %v3324 = vunpack.c.l.b16 %v3287
        %v3325 = vpack.c.b16 %v3310, %v3309
        %v3326 = vpack.c.b16 %v3312, %v3311
        %v3327 = vpack.c.b16 %v3314, %v3313
        %v3328 = vpack.c.b16 %v3316, %v3315
        %v3329 = vpack.c.b16 %v3318, %v3317
        %v3330 = vpack.c.b16 %v3320, %v3319
        %v3331 = vpack.c.b16 %v3322, %v3321
        %v3332 = vpack.c.b16 %v3324, %v3323
        %3341 = vmatprep.subr.bf16.mxu0 0
        %3342 = vmatpush1.bf16.msra.mxu0 %v3325
        %3343 = vmatprep.subr.bf16.mxu0 0
        %3344 = vmatpush1.bf16.msra.mxu0 %v3326
        %3345 = vmatprep.subr.bf16.mxu0 0
        %3346 = vmatpush1.bf16.msra.mxu0 %v3327
        %3347 = vmatprep.subr.bf16.mxu0 0
        %3348 = vmatpush1.bf16.msra.mxu0 %v3328
        %3349 = vmatprep.subr.bf16.mxu0 0
        %3350 = vmatpush1.bf16.msra.mxu0 %v3329
        %3351 = vmatprep.subr.bf16.mxu0 0
        %3352 = vmatpush1.bf16.msra.mxu0 %v3330
        %3353 = vmatprep.subr.bf16.mxu0 0
        %3354 = vmatpush1.bf16.msra.mxu0 %v3331
        %3355 = vmatprep.subr.bf16.mxu0 0
        %3356 = vmatpush1.bf16.msra.mxu0 %v3332
        %3357 = vmatprep.subr.bf16.mxu0 0
        %3358 = vmatpush1.bf16.msra.mxu0 0
        %3359 = vmatprep.subr.bf16.mxu0 0
        %3360 = vmatpush1.bf16.msra.mxu0 0
        %3361 = vmatprep.subr.bf16.mxu0 0
        %3362 = vmatpush1.bf16.msra.mxu0 0
        %3363 = vmatprep.subr.bf16.mxu0 0
        %3364 = vmatpush1.bf16.msra.mxu0 0
        %3365 = vmatprep.subr.bf16.mxu0 0
        %3366 = vmatpush1.bf16.msra.mxu0 0
        %3367 = vmatprep.subr.bf16.mxu0 0
        %3368 = vmatpush1.bf16.msra.mxu0 0
        %3369 = vmatprep.subr.bf16.mxu0 0
        %3370 = vmatpush1.bf16.msra.mxu0 0
        %3371 = vmatprep.subr.bf16.mxu0 0
        %3372 = vmatpush1.bf16.msra.mxu0 0
        %3373 = vmatprep.mubr.bf16.mxu0 0
        %3374 = vmatmul.mubr.bf16.gmra.mrb[0].mxu0 %v3271
        %v3375 = vpop.f32.mrb[0].mxu0
        %v3376 = vadd.f32 %v3292, %v3375
        %v3377 = vpop.f32.mrb[0].mxu0
        %v3378 = vpop.f32.mrb[0].mxu0
        %v3379 = vpop.f32.mrb[0].mxu0
        %3380 = vdwg.mxu0
        %v3381 = vld [vmem:[#allocation2 + $0x3c0] sm:$0xf]
        %v3382 = vld [vmem:[#allocation2 + $0x3c4] sm:$0xf]
        %v3383 = vld [vmem:[#allocation2 + $0x3c8] sm:$0xf]
        %v3384 = vld [vmem:[#allocation2 + $0x3cc] sm:$0xf]
        %v3385 = vld [vmem:[#allocation2 + $0x3d0] sm:$0xf]
        %v3386 = vld [vmem:[#allocation2 + $0x3d4] sm:$0xf]
        %v3387 = vld [vmem:[#allocation2 + $0x3d8] sm:$0xf]
        %v3388 = vld [vmem:[#allocation2 + $0x3dc] sm:$0xf]
        %v3389 = vld [vmem:[#allocation2 + $0x3e0] sm:$0xf]
        %v3390 = vld [vmem:[#allocation2 + $0x3e4] sm:$0xf]
        %v3391 = vld [vmem:[#allocation2 + $0x3e8] sm:$0xf]
        %v3392 = vld [vmem:[#allocation2 + $0x3ec] sm:$0xf]
        %v3393 = vld [vmem:[#allocation2 + $0x3f0] sm:$0xf]
        %v3394 = vld [vmem:[#allocation2 + $0x3f4] sm:$0xf]
        %v3395 = vld [vmem:[#allocation2 + $0x3f8] sm:$0xf]
        %v3396 = vld [vmem:[#allocation2 + $0x3fc] sm:$0xf]
        %v3397 = vld [vmem:[%s2 + $0x7] sm:$0x1]
        %v3398 = vlaneseq
        %v3399 = vshrl.u32 %v3398, 7
        %v3400 = vsub.s32 0, %v3399
        %v3401 = vrot.slane %v3397, %v3400
        %v3418 = vunpack.c.l.b16 %v3381
        %v3419 = vunpack.c.l.b16 %v3382
        %v3420 = vunpack.c.l.b16 %v3383
        %v3421 = vunpack.c.l.b16 %v3384
        %v3422 = vunpack.c.l.b16 %v3385
        %v3423 = vunpack.c.l.b16 %v3386
        %v3424 = vunpack.c.l.b16 %v3387
        %v3425 = vunpack.c.l.b16 %v3388
        %v3426 = vunpack.c.l.b16 %v3389
        %v3427 = vunpack.c.l.b16 %v3390
        %v3428 = vunpack.c.l.b16 %v3391
        %v3429 = vunpack.c.l.b16 %v3392
        %v3430 = vunpack.c.l.b16 %v3393
        %v3431 = vunpack.c.l.b16 %v3394
        %v3432 = vunpack.c.l.b16 %v3395
        %v3433 = vunpack.c.l.b16 %v3396
        %v3434 = vpack.c.b16 %v3419, %v3418
        %v3435 = vpack.c.b16 %v3421, %v3420
        %v3436 = vpack.c.b16 %v3423, %v3422
        %v3437 = vpack.c.b16 %v3425, %v3424
        %v3438 = vpack.c.b16 %v3427, %v3426
        %v3439 = vpack.c.b16 %v3429, %v3428
        %v3440 = vpack.c.b16 %v3431, %v3430
        %v3441 = vpack.c.b16 %v3433, %v3432
        %3450 = vmatprep.subr.bf16.mxu0 0
        %3451 = vmatpush1.bf16.msra.mxu0 %v3434
        %3452 = vmatprep.subr.bf16.mxu0 0
        %3453 = vmatpush1.bf16.msra.mxu0 %v3435
        %3454 = vmatprep.subr.bf16.mxu0 0
        %3455 = vmatpush1.bf16.msra.mxu0 %v3436
        %3456 = vmatprep.subr.bf16.mxu0 0
        %3457 = vmatpush1.bf16.msra.mxu0 %v3437
        %3458 = vmatprep.subr.bf16.mxu0 0
        %3459 = vmatpush1.bf16.msra.mxu0 %v3438
        %3460 = vmatprep.subr.bf16.mxu0 0
        %3461 = vmatpush1.bf16.msra.mxu0 %v3439
        %3462 = vmatprep.subr.bf16.mxu0 0
        %3463 = vmatpush1.bf16.msra.mxu0 %v3440
        %3464 = vmatprep.subr.bf16.mxu0 0
        %3465 = vmatpush1.bf16.msra.mxu0 %v3441
        %3466 = vmatprep.subr.bf16.mxu0 0
        %3467 = vmatpush1.bf16.msra.mxu0 0
        %3468 = vmatprep.subr.bf16.mxu0 0
        %3469 = vmatpush1.bf16.msra.mxu0 0
        %3470 = vmatprep.subr.bf16.mxu0 0
        %3471 = vmatpush1.bf16.msra.mxu0 0
        %3472 = vmatprep.subr.bf16.mxu0 0
        %3473 = vmatpush1.bf16.msra.mxu0 0
        %3474 = vmatprep.subr.bf16.mxu0 0
        %3475 = vmatpush1.bf16.msra.mxu0 0
        %3476 = vmatprep.subr.bf16.mxu0 0
        %3477 = vmatpush1.bf16.msra.mxu0 0
        %3478 = vmatprep.subr.bf16.mxu0 0
        %3479 = vmatpush1.bf16.msra.mxu0 0
        %3480 = vmatprep.subr.bf16.mxu0 0
        %3481 = vmatpush1.bf16.msra.mxu0 0
        %3482 = vmatprep.mubr.bf16.mxu0 0
        %3483 = vmatmul.mubr.bf16.gmra.mrb[0].mxu0 %v187
        %v3484 = vpop.f32.mrb[0].mxu0
        %v3485 = vadd.f32 %v3401, %v3484
        %v3486 = vpop.f32.mrb[0].mxu0
        %v3487 = vpop.f32.mrb[0].mxu0
        %v3488 = vpop.f32.mrb[0].mxu0
        %3489 = vdwg.mxu0
        %v3490 = vld [vmem:[#allocation2 + $0x400] sm:$0xf]
        %v3491 = vld [vmem:[#allocation2 + $0x404] sm:$0xf]
        %v3492 = vld [vmem:[#allocation2 + $0x408] sm:$0xf]
        %v3493 = vld [vmem:[#allocation2 + $0x40c] sm:$0xf]
        %v3494 = vld [vmem:[#allocation2 + $0x410] sm:$0xf]
        %v3495 = vld [vmem:[#allocation2 + $0x414] sm:$0xf]
        %v3496 = vld [vmem:[#allocation2 + $0x418] sm:$0xf]
        %v3497 = vld [vmem:[#allocation2 + $0x41c] sm:$0xf]
        %v3498 = vld [vmem:[#allocation2 + $0x420] sm:$0xf]
        %v3499 = vld [vmem:[#allocation2 + $0x424] sm:$0xf]
        %v3500 = vld [vmem:[#allocation2 + $0x428] sm:$0xf]
        %v3501 = vld [vmem:[#allocation2 + $0x42c] sm:$0xf]
        %v3502 = vld [vmem:[#allocation2 + $0x430] sm:$0xf]
        %v3503 = vld [vmem:[#allocation2 + $0x434] sm:$0xf]
        %v3504 = vld [vmem:[#allocation2 + $0x438] sm:$0xf]
        %v3505 = vld [vmem:[#allocation2 + $0x43c] sm:$0xf]
        %v3506 = vld [vmem:[%s2 + $0xb] sm:$0x1]
        %v3507 = vlaneseq
        %v3508 = vshrl.u32 %v3507, 7
        %v3509 = vsub.s32 0, %v3508
        %v3510 = vrot.slane %v3506, %v3509
        %v3527 = vunpack.c.l.b16 %v3490
        %v3528 = vunpack.c.l.b16 %v3491
        %v3529 = vunpack.c.l.b16 %v3492
        %v3530 = vunpack.c.l.b16 %v3493
        %v3531 = vunpack.c.l.b16 %v3494
        %v3532 = vunpack.c.l.b16 %v3495
        %v3533 = vunpack.c.l.b16 %v3496
        %v3534 = vunpack.c.l.b16 %v3497
        %v3535 = vunpack.c.l.b16 %v3498
        %v3536 = vunpack.c.l.b16 %v3499
        %v3537 = vunpack.c.l.b16 %v3500
        %v3538 = vunpack.c.l.b16 %v3501
        %v3539 = vunpack.c.l.b16 %v3502
        %v3540 = vunpack.c.l.b16 %v3503
        %v3541 = vunpack.c.l.b16 %v3504
        %v3542 = vunpack.c.l.b16 %v3505
        %v3543 = vpack.c.b16 %v3528, %v3527
        %v3544 = vpack.c.b16 %v3530, %v3529
        %v3545 = vpack.c.b16 %v3532, %v3531
        %v3546 = vpack.c.b16 %v3534, %v3533
        %v3547 = vpack.c.b16 %v3536, %v3535
        %v3548 = vpack.c.b16 %v3538, %v3537
        %v3549 = vpack.c.b16 %v3540, %v3539
        %v3550 = vpack.c.b16 %v3542, %v3541
        %3559 = vmatprep.subr.bf16.mxu0 0
        %3560 = vmatpush1.bf16.msra.mxu0 %v3543
        %3561 = vmatprep.subr.bf16.mxu0 0
        %3562 = vmatpush1.bf16.msra.mxu0 %v3544
        %3563 = vmatprep.subr.bf16.mxu0 0
        %3564 = vmatpush1.bf16.msra.mxu0 %v3545
        %3565 = vmatprep.subr.bf16.mxu0 0
        %3566 = vmatpush1.bf16.msra.mxu0 %v3546
        %3567 = vmatprep.subr.bf16.mxu0 0
        %3568 = vmatpush1.bf16.msra.mxu0 %v3547
        %3569 = vmatprep.subr.bf16.mxu0 0
        %3570 = vmatpush1.bf16.msra.mxu0 %v3548
        %3571 = vmatprep.subr.bf16.mxu0 0
        %3572 = vmatpush1.bf16.msra.mxu0 %v3549
        %3573 = vmatprep.subr.bf16.mxu0 0
        %3574 = vmatpush1.bf16.msra.mxu0 %v3550
        %3575 = vmatprep.subr.bf16.mxu0 0
        %3576 = vmatpush1.bf16.msra.mxu0 0
        %3577 = vmatprep.subr.bf16.mxu0 0
        %3578 = vmatpush1.bf16.msra.mxu0 0
        %3579 = vmatprep.subr.bf16.mxu0 0
        %3580 = vmatpush1.bf16.msra.mxu0 0
        %3581 = vmatprep.subr.bf16.mxu0 0
        %3582 = vmatpush1.bf16.msra.mxu0 0
        %3583 = vmatprep.subr.bf16.mxu0 0
        %3584 = vmatpush1.bf16.msra.mxu0 0
        %3585 = vmatprep.subr.bf16.mxu0 0
        %3586 = vmatpush1.bf16.msra.mxu0 0
        %3587 = vmatprep.subr.bf16.mxu0 0
        %3588 = vmatpush1.bf16.msra.mxu0 0
        %3589 = vmatprep.subr.bf16.mxu0 0
        %3590 = vmatpush1.bf16.msra.mxu0 0
        %3591 = vmatprep.mubr.bf16.mxu0 0
        %3592 = vmatmul.mubr.bf16.gmra.mrb[0].mxu0 %v187
        %v3593 = vpop.f32.mrb[0].mxu0
        %v3594 = vadd.f32 %v3510, %v3593
        %v3595 = vpop.f32.mrb[0].mxu0
        %v3596 = vpop.f32.mrb[0].mxu0
        %v3597 = vpop.f32.mrb[0].mxu0
        %3598 = vdwg.mxu0
        %v3599 = vpack.c.bf16 %v3376, %v3376
        %3601 = vrot.lane.b32.xlu0 %v3599, 96
        %v3602 = vpop.permute.xlu0 %3601
        %3603 = vrot.lane.b32.xlu0 %v3599, 64
        %v3604 = vpop.permute.xlu0 %3603
        %3605 = vrot.lane.b32.xlu0 %v3599, 32
        %v3606 = vpop.permute.xlu0 %3605
        %v3607 = vpack.c.bf16 %v3485, %v3485
        %3609 = vrot.lane.b32.xlu0 %v3607, 96
        %v3610 = vpop.permute.xlu0 %3609
        %3611 = vrot.lane.b32.xlu0 %v3607, 64
        %v3612 = vpop.permute.xlu0 %3611
        %3613 = vrot.lane.b32.xlu0 %v3607, 32
        %v3614 = vpop.permute.xlu0 %3613
        %v3615 = vpack.c.bf16 %v3594, %v3594
        %3617 = vrot.lane.b32.xlu0 %v3615, 96
        %v3618 = vpop.permute.xlu0 %3617
        %3619 = vrot.lane.b32.xlu0 %v3615, 64
        %v3620 = vpop.permute.xlu0 %3619
        %3621 = vrot.lane.b32.xlu0 %v3615, 32
        %v3622 = vpop.permute.xlu0 %3621
        %v3624 = vsel %vm579, %v3599, 0
        %v3627 = vsel %vm579, %v3607, 0
        %3629 = vmatprep.subr.bf16.mxu0 0
        %3630 = vmatpush1.bf16.xpose.msra.mxu0 %v3627
        %3631 = vmatprep.subr.bf16.mxu0 0
        %3632 = vmatpush1.bf16.xpose.msra.mxu0 0
        %3633 = vmatprep.subr.bf16.mxu0 0
        %3634 = vmatpush1.bf16.xpose.msra.mxu0 0
        %3635 = vmatprep.subr.bf16.mxu0 0
        %3636 = vmatpush1.bf16.xpose.msra.mxu0 0
        %3637 = vmatprep.subr.bf16.mxu0 0
        %3638 = vmatpush1.bf16.xpose.msra.mxu0 0
        %3639 = vmatprep.subr.bf16.mxu0 0
        %3640 = vmatpush1.bf16.xpose.msra.mxu0 0
        %3641 = vmatprep.subr.bf16.mxu0 0
        %3642 = vmatpush1.bf16.xpose.msra.mxu0 0
        %3643 = vmatprep.subr.bf16.mxu0 0
        %3644 = vmatpush1.bf16.xpose.msra.mxu0 0
        %3645 = vmatprep.subr.bf16.mxu0 0
        %3646 = vmatpush1.bf16.xpose.msra.mxu0 0
        %3647 = vmatprep.subr.bf16.mxu0 0
        %3648 = vmatpush1.bf16.xpose.msra.mxu0 0
        %3649 = vmatprep.subr.bf16.mxu0 0
        %3650 = vmatpush1.bf16.xpose.msra.mxu0 0
        %3651 = vmatprep.subr.bf16.mxu0 0
        %3652 = vmatpush1.bf16.xpose.msra.mxu0 0
        %3653 = vmatprep.subr.bf16.mxu0 0
        %3654 = vmatpush1.bf16.xpose.msra.mxu0 0
        %3655 = vmatprep.subr.bf16.mxu0 0
        %3656 = vmatpush1.bf16.xpose.msra.mxu0 0
        %3657 = vmatprep.subr.bf16.mxu0 0
        %3658 = vmatpush1.bf16.xpose.msra.mxu0 0
        %3659 = vmatprep.subr.bf16.mxu0 0
        %3660 = vmatpush1.bf16.xpose.msra.mxu0 0
        %3661 = vmatprep.mubr.bf16.mxu0 0
        %3662 = vmatmul.mubr.bf16.gmra.mrb[0].mxu0 %v3624
        %v3663 = vpop.f32.mrb[0].mxu0
        %v3664 = vadd.f32 0.0, %v3663
        %v3665 = vpop.f32.mrb[0].mxu0
        %v3666 = vpop.f32.mrb[0].mxu0
        %v3667 = vpop.f32.mrb[0].mxu0
        %3668 = vdwg.mxu0
        %v3670 = vsel %vm579, %v3602, 0
        %v3673 = vsel %vm579, %v3610, 0
        %3675 = vmatprep.subr.bf16.mxu0 0
        %3676 = vmatpush1.bf16.xpose.msra.mxu0 %v3673
        %3677 = vmatprep.subr.bf16.mxu0 0
        %3678 = vmatpush1.bf16.xpose.msra.mxu0 0
        %3679 = vmatprep.subr.bf16.mxu0 0
        %3680 = vmatpush1.bf16.xpose.msra.mxu0 0
        %3681 = vmatprep.subr.bf16.mxu0 0
        %3682 = vmatpush1.bf16.xpose.msra.mxu0 0
        %3683 = vmatprep.subr.bf16.mxu0 0
        %3684 = vmatpush1.bf16.xpose.msra.mxu0 0
        %3685 = vmatprep.subr.bf16.mxu0 0
        %3686 = vmatpush1.bf16.xpose.msra.mxu0 0
        %3687 = vmatprep.subr.bf16.mxu0 0
        %3688 = vmatpush1.bf16.xpose.msra.mxu0 0
        %3689 = vmatprep.subr.bf16.mxu0 0
        %3690 = vmatpush1.bf16.xpose.msra.mxu0 0
        %3691 = vmatprep.subr.bf16.mxu0 0
        %3692 = vmatpush1.bf16.xpose.msra.mxu0 0
        %3693 = vmatprep.subr.bf16.mxu0 0
        %3694 = vmatpush1.bf16.xpose.msra.mxu0 0
        %3695 = vmatprep.subr.bf16.mxu0 0
        %3696 = vmatpush1.bf16.xpose.msra.mxu0 0
        %3697 = vmatprep.subr.bf16.mxu0 0
        %3698 = vmatpush1.bf16.xpose.msra.mxu0 0
        %3699 = vmatprep.subr.bf16.mxu0 0
        %3700 = vmatpush1.bf16.xpose.msra.mxu0 0
        %3701 = vmatprep.subr.bf16.mxu0 0
        %3702 = vmatpush1.bf16.xpose.msra.mxu0 0
        %3703 = vmatprep.subr.bf16.mxu0 0
        %3704 = vmatpush1.bf16.xpose.msra.mxu0 0
        %3705 = vmatprep.subr.bf16.mxu0 0
        %3706 = vmatpush1.bf16.xpose.msra.mxu0 0
        %3707 = vmatprep.mubr.bf16.mxu0 0
        %3708 = vmatmul.mubr.bf16.gmra.mrb[0].mxu0 %v3670
        %v3709 = vpop.f32.mrb[0].mxu0
        %v3710 = vadd.f32 0.0, %v3709
        %v3711 = vpop.f32.mrb[0].mxu0
        %v3712 = vpop.f32.mrb[0].mxu0
        %v3713 = vpop.f32.mrb[0].mxu0
        %3714 = vdwg.mxu0
        %v3716 = vsel %vm579, %v3604, 0
        %v3719 = vsel %vm579, %v3612, 0
        %3721 = vmatprep.subr.bf16.mxu0 0
        %3722 = vmatpush1.bf16.xpose.msra.mxu0 %v3719
        %3723 = vmatprep.subr.bf16.mxu0 0
        %3724 = vmatpush1.bf16.xpose.msra.mxu0 0
        %3725 = vmatprep.subr.bf16.mxu0 0
        %3726 = vmatpush1.bf16.xpose.msra.mxu0 0
        %3727 = vmatprep.subr.bf16.mxu0 0
        %3728 = vmatpush1.bf16.xpose.msra.mxu0 0
        %3729 = vmatprep.subr.bf16.mxu0 0
        %3730 = vmatpush1.bf16.xpose.msra.mxu0 0
        %3731 = vmatprep.subr.bf16.mxu0 0
        %3732 = vmatpush1.bf16.xpose.msra.mxu0 0
        %3733 = vmatprep.subr.bf16.mxu0 0
        %3734 = vmatpush1.bf16.xpose.msra.mxu0 0
        %3735 = vmatprep.subr.bf16.mxu0 0
        %3736 = vmatpush1.bf16.xpose.msra.mxu0 0
        %3737 = vmatprep.subr.bf16.mxu0 0
        %3738 = vmatpush1.bf16.xpose.msra.mxu0 0
        %3739 = vmatprep.subr.bf16.mxu0 0
        %3740 = vmatpush1.bf16.xpose.msra.mxu0 0
        %3741 = vmatprep.subr.bf16.mxu0 0
        %3742 = vmatpush1.bf16.xpose.msra.mxu0 0
        %3743 = vmatprep.subr.bf16.mxu0 0
        %3744 = vmatpush1.bf16.xpose.msra.mxu0 0
        %3745 = vmatprep.subr.bf16.mxu0 0
        %3746 = vmatpush1.bf16.xpose.msra.mxu0 0
        %3747 = vmatprep.subr.bf16.mxu0 0
        %3748 = vmatpush1.bf16.xpose.msra.mxu0 0
        %3749 = vmatprep.subr.bf16.mxu0 0
        %3750 = vmatpush1.bf16.xpose.msra.mxu0 0
        %3751 = vmatprep.subr.bf16.mxu0 0
        %3752 = vmatpush1.bf16.xpose.msra.mxu0 0
        %3753 = vmatprep.mubr.bf16.mxu0 0
        %3754 = vmatmul.mubr.bf16.gmra.mrb[0].mxu0 %v3716
        %v3755 = vpop.f32.mrb[0].mxu0
        %v3756 = vadd.f32 0.0, %v3755
        %v3757 = vpop.f32.mrb[0].mxu0
        %v3758 = vpop.f32.mrb[0].mxu0
        %v3759 = vpop.f32.mrb[0].mxu0
        %3760 = vdwg.mxu0
        %v3762 = vsel %vm579, %v3606, 0
        %v3765 = vsel %vm579, %v3614, 0
        %3767 = vmatprep.subr.bf16.mxu0 0
        %3768 = vmatpush1.bf16.xpose.msra.mxu0 %v3765
        %3769 = vmatprep.subr.bf16.mxu0 0
        %3770 = vmatpush1.bf16.xpose.msra.mxu0 0
        %3771 = vmatprep.subr.bf16.mxu0 0
        %3772 = vmatpush1.bf16.xpose.msra.mxu0 0
        %3773 = vmatprep.subr.bf16.mxu0 0
        %3774 = vmatpush1.bf16.xpose.msra.mxu0 0
        %3775 = vmatprep.subr.bf16.mxu0 0
        %3776 = vmatpush1.bf16.xpose.msra.mxu0 0
        %3777 = vmatprep.subr.bf16.mxu0 0
        %3778 = vmatpush1.bf16.xpose.msra.mxu0 0
        %3779 = vmatprep.subr.bf16.mxu0 0
        %3780 = vmatpush1.bf16.xpose.msra.mxu0 0
        %3781 = vmatprep.subr.bf16.mxu0 0
        %3782 = vmatpush1.bf16.xpose.msra.mxu0 0
        %3783 = vmatprep.subr.bf16.mxu0 0
        %3784 = vmatpush1.bf16.xpose.msra.mxu0 0
        %3785 = vmatprep.subr.bf16.mxu0 0
        %3786 = vmatpush1.bf16.xpose.msra.mxu0 0
        %3787 = vmatprep.subr.bf16.mxu0 0
        %3788 = vmatpush1.bf16.xpose.msra.mxu0 0
        %3789 = vmatprep.subr.bf16.mxu0 0
        %3790 = vmatpush1.bf16.xpose.msra.mxu0 0
        %3791 = vmatprep.subr.bf16.mxu0 0
        %3792 = vmatpush1.bf16.xpose.msra.mxu0 0
        %3793 = vmatprep.subr.bf16.mxu0 0
        %3794 = vmatpush1.bf16.xpose.msra.mxu0 0
        %3795 = vmatprep.subr.bf16.mxu0 0
        %3796 = vmatpush1.bf16.xpose.msra.mxu0 0
        %3797 = vmatprep.subr.bf16.mxu0 0
        %3798 = vmatpush1.bf16.xpose.msra.mxu0 0
        %3799 = vmatprep.mubr.bf16.mxu0 0
        %3800 = vmatmul.mubr.bf16.gmra.mrb[0].mxu0 %v3762
        %v3801 = vpop.f32.mrb[0].mxu0
        %v3802 = vadd.f32 0.0, %v3801
        %v3803 = vpop.f32.mrb[0].mxu0
        %v3804 = vpop.f32.mrb[0].mxu0
        %v3805 = vpop.f32.mrb[0].mxu0
        %3806 = vdwg.mxu0
        %v3807 = vsel %vm770, %v3664, -inf
        %3808 = vmax.xlane.f32.xlu0 %v3807
        %v3809 = vpop.xlane.xlu0 %3808
        %v3810 = vsel %vm770, %v3710, -inf
        %3811 = vmax.xlane.f32.xlu0 %v3810
        %v3812 = vpop.xlane.xlu0 %3811
        %v3813 = vsel %vm770, %v3756, -inf
        %3814 = vmax.xlane.f32.xlu0 %v3813
        %v3815 = vpop.xlane.xlu0 %3814
        %v3816 = vsel %vm770, %v3802, -inf
        %3817 = vmax.xlane.f32.xlu0 %v3816
        %v3818 = vpop.xlane.xlu0 %3817
        %v3819 = vsub.f32 %v3664, %v3809
        %v3820 = vsub.f32 %v3710, %v3812
        %v3821 = vsub.f32 %v3756, %v3815
        %v3822 = vsub.f32 %v3802, %v3818
        %v3823 = vmul.f32 %v3819, 1.442695
        %v3824 = vpow.pop %v3823
        %v3825 = vmul.f32 %v3820, 1.442695
        %v3826 = vpow.pop %v3825
        %v3827 = vmul.f32 %v3821, 1.442695
        %v3828 = vpow.pop %v3827
        %v3829 = vmul.f32 %v3822, 1.442695
        %v3830 = vpow.pop %v3829
        %v3831 = vsel %vm770, %v3824, 0.0
        %3832 = vadd.xlane.f32.xlu0 %v3831
        %v3833 = vpop.xlane.xlu0 %3832
        %v3834 = vsel %vm770, %v3826, 0.0
        %3835 = vadd.xlane.f32.xlu0 %v3834
        %v3836 = vpop.xlane.xlu0 %3835
        %v3837 = vsel %vm770, %v3828, 0.0
        %3838 = vadd.xlane.f32.xlu0 %v3837
        %v3839 = vpop.xlane.xlu0 %3838
        %v3840 = vsel %vm770, %v3830, 0.0
        %3841 = vadd.xlane.f32.xlu0 %v3840
        %v3842 = vpop.xlane.xlu0 %3841
        %v3843 = vrcp.pop %v3833
        %v3844 = vrcp.pop %v3836
        %v3845 = vrcp.pop %v3839
        %v3846 = vrcp.pop %v3842
        %v3847 = vmul.f32 %v3824, %v3843
        %v3848 = vmul.f32 %v3826, %v3844
        %v3849 = vmul.f32 %v3828, %v3845
        %v3850 = vmul.f32 %v3830, %v3846
        %v3851 = vpack.c.bf16 %v3847, %v3847
        %v3852 = vpack.c.bf16 %v3848, %v3848
        %v3853 = vpack.c.bf16 %v3849, %v3849
        %v3854 = vpack.c.bf16 %v3850, %v3850
        %v3856 = vsel %vm770, %v3851, 0
        %v3859 = vsel %vm822, %v3615, 0
        %3861 = vmatprep.subr.bf16.mxu0 0
        %3862 = vmatpush1.bf16.msra.mxu0 %v3859
        %3863 = vmatprep.subr.bf16.mxu0 0
        %3864 = vmatpush1.bf16.msra.mxu0 0
        %3865 = vmatprep.subr.bf16.mxu0 0
        %3866 = vmatpush1.bf16.msra.mxu0 0
        %3867 = vmatprep.subr.bf16.mxu0 0
        %3868 = vmatpush1.bf16.msra.mxu0 0
        %3869 = vmatprep.subr.bf16.mxu0 0
        %3870 = vmatpush1.bf16.msra.mxu0 0
        %3871 = vmatprep.subr.bf16.mxu0 0
        %3872 = vmatpush1.bf16.msra.mxu0 0
        %3873 = vmatprep.subr.bf16.mxu0 0
        %3874 = vmatpush1.bf16.msra.mxu0 0
        %3875 = vmatprep.subr.bf16.mxu0 0
        %3876 = vmatpush1.bf16.msra.mxu0 0
        %3877 = vmatprep.subr.bf16.mxu0 0
        %3878 = vmatpush1.bf16.msra.mxu0 0
        %3879 = vmatprep.subr.bf16.mxu0 0
        %3880 = vmatpush1.bf16.msra.mxu0 0
        %3881 = vmatprep.subr.bf16.mxu0 0
        %3882 = vmatpush1.bf16.msra.mxu0 0
        %3883 = vmatprep.subr.bf16.mxu0 0
        %3884 = vmatpush1.bf16.msra.mxu0 0
        %3885 = vmatprep.subr.bf16.mxu0 0
        %3886 = vmatpush1.bf16.msra.mxu0 0
        %3887 = vmatprep.subr.bf16.mxu0 0
        %3888 = vmatpush1.bf16.msra.mxu0 0
        %3889 = vmatprep.subr.bf16.mxu0 0
        %3890 = vmatpush1.bf16.msra.mxu0 0
        %3891 = vmatprep.subr.bf16.mxu0 0
        %3892 = vmatpush1.bf16.msra.mxu0 0
        %3893 = vmatprep.mubr.bf16.mxu0 0
        %3894 = vmatmul.mubr.bf16.gmra.mrb[0].mxu0 %v3856
        %v3895 = vpop.f32.mrb[0].mxu0
        %v3896 = vadd.f32 0.0, %v3895
        %v3897 = vpop.f32.mrb[0].mxu0
        %v3898 = vpop.f32.mrb[0].mxu0
        %v3899 = vpop.f32.mrb[0].mxu0
        %3900 = vdwg.mxu0
        %v3902 = vsel %vm770, %v3852, 0
        %v3905 = vsel %vm822, %v3618, 0
        %3907 = vmatprep.subr.bf16.mxu0 0
        %3908 = vmatpush1.bf16.msra.mxu0 %v3905
        %3909 = vmatprep.subr.bf16.mxu0 0
        %3910 = vmatpush1.bf16.msra.mxu0 0
        %3911 = vmatprep.subr.bf16.mxu0 0
        %3912 = vmatpush1.bf16.msra.mxu0 0
        %3913 = vmatprep.subr.bf16.mxu0 0
        %3914 = vmatpush1.bf16.msra.mxu0 0
        %3915 = vmatprep.subr.bf16.mxu0 0
        %3916 = vmatpush1.bf16.msra.mxu0 0
        %3917 = vmatprep.subr.bf16.mxu0 0
        %3918 = vmatpush1.bf16.msra.mxu0 0
        %3919 = vmatprep.subr.bf16.mxu0 0
        %3920 = vmatpush1.bf16.msra.mxu0 0
        %3921 = vmatprep.subr.bf16.mxu0 0
        %3922 = vmatpush1.bf16.msra.mxu0 0
        %3923 = vmatprep.subr.bf16.mxu0 0
        %3924 = vmatpush1.bf16.msra.mxu0 0
        %3925 = vmatprep.subr.bf16.mxu0 0
        %3926 = vmatpush1.bf16.msra.mxu0 0
        %3927 = vmatprep.subr.bf16.mxu0 0
        %3928 = vmatpush1.bf16.msra.mxu0 0
        %3929 = vmatprep.subr.bf16.mxu0 0
        %3930 = vmatpush1.bf16.msra.mxu0 0
        %3931 = vmatprep.subr.bf16.mxu0 0
        %3932 = vmatpush1.bf16.msra.mxu0 0
        %3933 = vmatprep.subr.bf16.mxu0 0
        %3934 = vmatpush1.bf16.msra.mxu0 0
        %3935 = vmatprep.subr.bf16.mxu0 0
        %3936 = vmatpush1.bf16.msra.mxu0 0
        %3937 = vmatprep.subr.bf16.mxu0 0
        %3938 = vmatpush1.bf16.msra.mxu0 0
        %3939 = vmatprep.mubr.bf16.mxu0 0
        %3940 = vmatmul.mubr.bf16.gmra.mrb[0].mxu0 %v3902
        %v3941 = vpop.f32.mrb[0].mxu0
        %v3942 = vadd.f32 0.0, %v3941
        %v3943 = vpop.f32.mrb[0].mxu0
        %v3944 = vpop.f32.mrb[0].mxu0
        %v3945 = vpop.f32.mrb[0].mxu0
        %3946 = vdwg.mxu0
        %v3948 = vsel %vm770, %v3853, 0
        %v3951 = vsel %vm822, %v3620, 0
        %3953 = vmatprep.subr.bf16.mxu0 0
        %3954 = vmatpush1.bf16.msra.mxu0 %v3951
        %3955 = vmatprep.subr.bf16.mxu0 0
        %3956 = vmatpush1.bf16.msra.mxu0 0
        %3957 = vmatprep.subr.bf16.mxu0 0
        %3958 = vmatpush1.bf16.msra.mxu0 0
        %3959 = vmatprep.subr.bf16.mxu0 0
        %3960 = vmatpush1.bf16.msra.mxu0 0
        %3961 = vmatprep.subr.bf16.mxu0 0
        %3962 = vmatpush1.bf16.msra.mxu0 0
        %3963 = vmatprep.subr.bf16.mxu0 0
        %3964 = vmatpush1.bf16.msra.mxu0 0
        %3965 = vmatprep.subr.bf16.mxu0 0
        %3966 = vmatpush1.bf16.msra.mxu0 0
        %3967 = vmatprep.subr.bf16.mxu0 0
        %3968 = vmatpush1.bf16.msra.mxu0 0
        %3969 = vmatprep.subr.bf16.mxu0 0
        %3970 = vmatpush1.bf16.msra.mxu0 0
        %3971 = vmatprep.subr.bf16.mxu0 0
        %3972 = vmatpush1.bf16.msra.mxu0 0
        %3973 = vmatprep.subr.bf16.mxu0 0
        %3974 = vmatpush1.bf16.msra.mxu0 0
        %3975 = vmatprep.subr.bf16.mxu0 0
        %3976 = vmatpush1.bf16.msra.mxu0 0
        %3977 = vmatprep.subr.bf16.mxu0 0
        %3978 = vmatpush1.bf16.msra.mxu0 0
        %3979 = vmatprep.subr.bf16.mxu0 0
        %3980 = vmatpush1.bf16.msra.mxu0 0
        %3981 = vmatprep.subr.bf16.mxu0 0
        %3982 = vmatpush1.bf16.msra.mxu0 0
        %3983 = vmatprep.subr.bf16.mxu0 0
        %3984 = vmatpush1.bf16.msra.mxu0 0
        %3985 = vmatprep.mubr.bf16.mxu0 0
        %3986 = vmatmul.mubr.bf16.gmra.mrb[0].mxu0 %v3948
        %v3987 = vpop.f32.mrb[0].mxu0
        %v3988 = vadd.f32 0.0, %v3987
        %v3989 = vpop.f32.mrb[0].mxu0
        %v3990 = vpop.f32.mrb[0].mxu0
        %v3991 = vpop.f32.mrb[0].mxu0
        %3992 = vdwg.mxu0
        %v3994 = vsel %vm770, %v3854, 0
        %v3997 = vsel %vm822, %v3622, 0
        %3999 = vmatprep.subr.bf16.mxu0 0
        %4000 = vmatpush1.bf16.msra.mxu0 %v3997
        %4001 = vmatprep.subr.bf16.mxu0 0
        %4002 = vmatpush1.bf16.msra.mxu0 0
        %4003 = vmatprep.subr.bf16.mxu0 0
        %4004 = vmatpush1.bf16.msra.mxu0 0
        %4005 = vmatprep.subr.bf16.mxu0 0
        %4006 = vmatpush1.bf16.msra.mxu0 0
        %4007 = vmatprep.subr.bf16.mxu0 0
        %4008 = vmatpush1.bf16.msra.mxu0 0
        %4009 = vmatprep.subr.bf16.mxu0 0
        %4010 = vmatpush1.bf16.msra.mxu0 0
        %4011 = vmatprep.subr.bf16.mxu0 0
        %4012 = vmatpush1.bf16.msra.mxu0 0
        %4013 = vmatprep.subr.bf16.mxu0 0
        %4014 = vmatpush1.bf16.msra.mxu0 0
        %4015 = vmatprep.subr.bf16.mxu0 0
        %4016 = vmatpush1.bf16.msra.mxu0 0
        %4017 = vmatprep.subr.bf16.mxu0 0
        %4018 = vmatpush1.bf16.msra.mxu0 0
        %4019 = vmatprep.subr.bf16.mxu0 0
        %4020 = vmatpush1.bf16.msra.mxu0 0
        %4021 = vmatprep.subr.bf16.mxu0 0
        %4022 = vmatpush1.bf16.msra.mxu0 0
        %4023 = vmatprep.subr.bf16.mxu0 0
        %4024 = vmatpush1.bf16.msra.mxu0 0
        %4025 = vmatprep.subr.bf16.mxu0 0
        %4026 = vmatpush1.bf16.msra.mxu0 0
        %4027 = vmatprep.subr.bf16.mxu0 0
        %4028 = vmatpush1.bf16.msra.mxu0 0
        %4029 = vmatprep.subr.bf16.mxu0 0
        %4030 = vmatpush1.bf16.msra.mxu0 0
        %4031 = vmatprep.mubr.bf16.mxu0 0
        %4032 = vmatmul.mubr.bf16.gmra.mrb[0].mxu0 %v3994
        %v4033 = vpop.f32.mrb[0].mxu0
        %v4034 = vadd.f32 0.0, %v4033
        %v4035 = vpop.f32.mrb[0].mxu0
        %v4036 = vpop.f32.mrb[0].mxu0
        %v4037 = vpop.f32.mrb[0].mxu0
        %4038 = vdwg.mxu0
        %4040 = vrot.lane.b32.xlu0 %v3942, 32
        %v4041 = vpop.permute.xlu0 %4040
        %4044 = vrot.lane.b32.xlu0 %v3988, 64
        %v4045 = vpop.permute.xlu0 %4044
        %4048 = vrot.lane.b32.xlu0 %v4034, 96
        %v4049 = vpop.permute.xlu0 %4048
        %v4051 = vsel %vm579, %v3896, %v4041
        %v4052 = vsel %vm1017, %v4051, %v4045
        %v4053 = vsel %vm1019, %v4052, %v4049
        %v4054 = vpack.c.bf16 %v4053, %v4053
        %v4055 = vld [vmem:[#allocation2 + $0x440] sm:$0xf]
        %v4056 = vld [vmem:[#allocation2 + $0x444] sm:$0xf]
        %v4057 = vld [vmem:[#allocation2 + $0x448] sm:$0xf]
        %v4058 = vld [vmem:[#allocation2 + $0x44c] sm:$0xf]
        %v4059 = vld [vmem:[#allocation2 + $0x450] sm:$0xf]
        %v4060 = vld [vmem:[#allocation2 + $0x454] sm:$0xf]
        %v4061 = vld [vmem:[#allocation2 + $0x458] sm:$0xf]
        %v4062 = vld [vmem:[#allocation2 + $0x45c] sm:$0xf]
        %v4063 = vld [vmem:[#allocation2 + $0x460] sm:$0xf]
        %v4064 = vld [vmem:[#allocation2 + $0x464] sm:$0xf]
        %v4065 = vld [vmem:[#allocation2 + $0x468] sm:$0xf]
        %v4066 = vld [vmem:[#allocation2 + $0x46c] sm:$0xf]
        %v4067 = vld [vmem:[#allocation2 + $0x470] sm:$0xf]
        %v4068 = vld [vmem:[#allocation2 + $0x474] sm:$0xf]
        %v4069 = vld [vmem:[#allocation2 + $0x478] sm:$0xf]
        %v4070 = vld [vmem:[#allocation2 + $0x47c] sm:$0xf]
        %v4071 = vld [vmem:[%s2 + $0xf] sm:$0x1]
        %v4072 = vlaneseq
        %v4073 = vshrl.u32 %v4072, 7
        %v4074 = vsub.s32 0, %v4073
        %v4075 = vrot.slane %v4071, %v4074
        %v4092 = vunpack.c.l.b16 %v4055
        %v4093 = vunpack.c.l.b16 %v4056
        %v4094 = vunpack.c.l.b16 %v4057
        %v4095 = vunpack.c.l.b16 %v4058
        %v4096 = vunpack.c.l.b16 %v4059
        %v4097 = vunpack.c.l.b16 %v4060
        %v4098 = vunpack.c.l.b16 %v4061
        %v4099 = vunpack.c.l.b16 %v4062
        %v4100 = vunpack.c.l.b16 %v4063
        %v4101 = vunpack.c.l.b16 %v4064
        %v4102 = vunpack.c.l.b16 %v4065
        %v4103 = vunpack.c.l.b16 %v4066
        %v4104 = vunpack.c.l.b16 %v4067
        %v4105 = vunpack.c.l.b16 %v4068
        %v4106 = vunpack.c.l.b16 %v4069
        %v4107 = vunpack.c.l.b16 %v4070
        %v4108 = vpack.c.b16 %v4093, %v4092
        %v4109 = vpack.c.b16 %v4095, %v4094
        %v4110 = vpack.c.b16 %v4097, %v4096
        %v4111 = vpack.c.b16 %v4099, %v4098
        %v4112 = vpack.c.b16 %v4101, %v4100
        %v4113 = vpack.c.b16 %v4103, %v4102
        %v4114 = vpack.c.b16 %v4105, %v4104
        %v4115 = vpack.c.b16 %v4107, %v4106
        %4124 = vmatprep.subr.bf16.mxu0 0
        %4125 = vmatpush1.bf16.msra.mxu0 %v4108
        %4126 = vmatprep.subr.bf16.mxu0 0
        %4127 = vmatpush1.bf16.msra.mxu0 %v4109
        %4128 = vmatprep.subr.bf16.mxu0 0
        %4129 = vmatpush1.bf16.msra.mxu0 %v4110
        %4130 = vmatprep.subr.bf16.mxu0 0
        %4131 = vmatpush1.bf16.msra.mxu0 %v4111
        %4132 = vmatprep.subr.bf16.mxu0 0
        %4133 = vmatpush1.bf16.msra.mxu0 %v4112
        %4134 = vmatprep.subr.bf16.mxu0 0
        %4135 = vmatpush1.bf16.msra.mxu0 %v4113
        %4136 = vmatprep.subr.bf16.mxu0 0
        %4137 = vmatpush1.bf16.msra.mxu0 %v4114
        %4138 = vmatprep.subr.bf16.mxu0 0
        %4139 = vmatpush1.bf16.msra.mxu0 %v4115
        %4140 = vmatprep.subr.bf16.mxu0 0
        %4141 = vmatpush1.bf16.msra.mxu0 0
        %4142 = vmatprep.subr.bf16.mxu0 0
        %4143 = vmatpush1.bf16.msra.mxu0 0
        %4144 = vmatprep.subr.bf16.mxu0 0
        %4145 = vmatpush1.bf16.msra.mxu0 0
        %4146 = vmatprep.subr.bf16.mxu0 0
        %4147 = vmatpush1.bf16.msra.mxu0 0
        %4148 = vmatprep.subr.bf16.mxu0 0
        %4149 = vmatpush1.bf16.msra.mxu0 0
        %4150 = vmatprep.subr.bf16.mxu0 0
        %4151 = vmatpush1.bf16.msra.mxu0 0
        %4152 = vmatprep.subr.bf16.mxu0 0
        %4153 = vmatpush1.bf16.msra.mxu0 0
        %4154 = vmatprep.subr.bf16.mxu0 0
        %4155 = vmatpush1.bf16.msra.mxu0 0
        %4156 = vmatprep.mubr.bf16.mxu0 0
        %4157 = vmatmul.mubr.bf16.gmra.mrb[0].mxu0 %v4054
        %v4158 = vpop.f32.mrb[0].mxu0
        %v4159 = vadd.f32 %v4075, %v4158
        %v4160 = vpop.f32.mrb[0].mxu0
        %v4161 = vpop.f32.mrb[0].mxu0
        %v4162 = vpop.f32.mrb[0].mxu0
        %4163 = vdwg.mxu0
        %v4164 = vadd.f32 %v3239, %v4159
        %v4165 = vld [vmem:[%s2 + $0x19] sm:$0x1]
        %v4166 = vld [vmem:[%s2 + $0x1f] sm:$0x1]
        %4167 = vadd.xlane.f32.xlu0 %v4164
        %v4168 = vpop.xlane.xlu0 %4167
        %v4169 = vmul.f32 %v4168, 0.03125
        %v4170 = vsub.f32 %v4164, %v4169
        %v4171 = vsel %vm201, %v4170, 0.0
        %v4172 = vmul.f32 %v4171, %v4171
        %4173 = vadd.xlane.f32.xlu0 %v4172
        %v4174 = vpop.xlane.xlu0 %4173
        %v4175 = vmul.f32 %v4174, 0.032258064
        %v4176 = vlaneseq
        %v4177 = vshrl.u32 %v4176, 7
        %v4178 = vsub.s32 0, %v4177
        %v4179 = vrot.slane %v4165, %v4178
        %v4180 = vmul.f32 %v4179, %v4171
        %v4181 = vrsqrt.pop %v4175
        %v4182 = vmul.f32 %v4175, %v4181
        %vm4183 = vcmp.eq.f32.partialorder %v4175, inf
        %v4184 = vsel %vm4183, %v4175, %v4182
        %vm4185 = vcmp.eq.f32.partialorder %v4175, 0.0
        %v4186 = vand.u32 %v4175, 2147483648
        %v4187 = vsel %vm4185, %v4186, %v4184
        %v4188 = vadd.f32 %v4187, 1e-06
        %v4189 = vrcp.pop %v4188
        %v4190 = vmul.f32 %v4180, %v4189
        %v4191 = vlaneseq
        %v4192 = vshrl.u32 %v4191, 7
        %v4193 = vsub.s32 0, %v4192
        %v4194 = vrot.slane %v4166, %v4193
        %v4195 = vadd.f32 %v4190, %v4194
        %v4196 = vpack.c.bf16 %v4195, %v4195
        %v4197 = vld [vmem:[#allocation2 + $0x480] sm:$0xf]
        %v4198 = vld [vmem:[#allocation2 + $0x484] sm:$0xf]
        %v4199 = vld [vmem:[#allocation2 + $0x488] sm:$0xf]
        %v4200 = vld [vmem:[#allocation2 + $0x48c] sm:$0xf]
        %v4201 = vld [vmem:[#allocation2 + $0x490] sm:$0xf]
        %v4202 = vld [vmem:[#allocation2 + $0x494] sm:$0xf]
        %v4203 = vld [vmem:[#allocation2 + $0x498] sm:$0xf]
        %v4204 = vld [vmem:[#allocation2 + $0x49c] sm:$0xf]
        %v4205 = vld [vmem:[#allocation2 + $0x4a0] sm:$0xf]
        %v4206 = vld [vmem:[#allocation2 + $0x4a4] sm:$0xf]
        %v4207 = vld [vmem:[#allocation2 + $0x4a8] sm:$0xf]
        %v4208 = vld [vmem:[#allocation2 + $0x4ac] sm:$0xf]
        %v4209 = vld [vmem:[#allocation2 + $0x4b0] sm:$0xf]
        %v4210 = vld [vmem:[#allocation2 + $0x4b4] sm:$0xf]
        %v4211 = vld [vmem:[#allocation2 + $0x4b8] sm:$0xf]
        %v4212 = vld [vmem:[#allocation2 + $0x4bc] sm:$0xf]
        %v4213 = vld [vmem:[%s2 + $0x11] sm:$0x1]
        %v4214 = vlaneseq
        %v4215 = vshrl.u32 %v4214, 7
        %v4216 = vsub.s32 0, %v4215
        %v4217 = vrot.slane %v4213, %v4216
        %v4234 = vunpack.c.l.b16 %v4197
        %v4235 = vunpack.c.l.b16 %v4198
        %v4236 = vunpack.c.l.b16 %v4199
        %v4237 = vunpack.c.l.b16 %v4200
        %v4238 = vunpack.c.l.b16 %v4201
        %v4239 = vunpack.c.l.b16 %v4202
        %v4240 = vunpack.c.l.b16 %v4203
        %v4241 = vunpack.c.l.b16 %v4204
        %v4242 = vunpack.c.l.b16 %v4205
        %v4243 = vunpack.c.l.b16 %v4206
        %v4244 = vunpack.c.l.b16 %v4207
        %v4245 = vunpack.c.l.b16 %v4208
        %v4246 = vunpack.c.l.b16 %v4209
        %v4247 = vunpack.c.l.b16 %v4210
        %v4248 = vunpack.c.l.b16 %v4211
        %v4249 = vunpack.c.l.b16 %v4212
        %v4250 = vpack.c.b16 %v4235, %v4234
        %v4251 = vpack.c.b16 %v4237, %v4236
        %v4252 = vpack.c.b16 %v4239, %v4238
        %v4253 = vpack.c.b16 %v4241, %v4240
        %v4254 = vpack.c.b16 %v4243, %v4242
        %v4255 = vpack.c.b16 %v4245, %v4244
        %v4256 = vpack.c.b16 %v4247, %v4246
        %v4257 = vpack.c.b16 %v4249, %v4248
        %4266 = vmatprep.subr.bf16.mxu0 0
        %4267 = vmatpush1.bf16.msra.mxu0 %v4250
        %4268 = vmatprep.subr.bf16.mxu0 0
        %4269 = vmatpush1.bf16.msra.mxu0 %v4251
        %4270 = vmatprep.subr.bf16.mxu0 0
        %4271 = vmatpush1.bf16.msra.mxu0 %v4252
        %4272 = vmatprep.subr.bf16.mxu0 0
        %4273 = vmatpush1.bf16.msra.mxu0 %v4253
        %4274 = vmatprep.subr.bf16.mxu0 0
        %4275 = vmatpush1.bf16.msra.mxu0 %v4254
        %4276 = vmatprep.subr.bf16.mxu0 0
        %4277 = vmatpush1.bf16.msra.mxu0 %v4255
        %4278 = vmatprep.subr.bf16.mxu0 0
        %4279 = vmatpush1.bf16.msra.mxu0 %v4256
        %4280 = vmatprep.subr.bf16.mxu0 0
        %4281 = vmatpush1.bf16.msra.mxu0 %v4257
        %4282 = vmatprep.subr.bf16.mxu0 0
        %4283 = vmatpush1.bf16.msra.mxu0 0
        %4284 = vmatprep.subr.bf16.mxu0 0
        %4285 = vmatpush1.bf16.msra.mxu0 0
        %4286 = vmatprep.subr.bf16.mxu0 0
        %4287 = vmatpush1.bf16.msra.mxu0 0
        %4288 = vmatprep.subr.bf16.mxu0 0
        %4289 = vmatpush1.bf16.msra.mxu0 0
        %4290 = vmatprep.subr.bf16.mxu0 0
        %4291 = vmatpush1.bf16.msra.mxu0 0
        %4292 = vmatprep.subr.bf16.mxu0 0
        %4293 = vmatpush1.bf16.msra.mxu0 0
        %4294 = vmatprep.subr.bf16.mxu0 0
        %4295 = vmatpush1.bf16.msra.mxu0 0
        %4296 = vmatprep.subr.bf16.mxu0 0
        %4297 = vmatpush1.bf16.msra.mxu0 0
        %4298 = vmatprep.mubr.bf16.mxu0 0
        %4299 = vmatmul.mubr.bf16.gmra.mrb[0].mxu0 %v4196
        %v4300 = vpop.f32.mrb[0].mxu0
        %v4301 = vadd.f32 %v4217, %v4300
        %v4302 = vpop.f32.mrb[0].mxu0
        %v4303 = vpop.f32.mrb[0].mxu0
        %v4304 = vpop.f32.mrb[0].mxu0
        %4305 = vdwg.mxu0
        %v4306 = vmax.f32 %v4301, 0.0
        %v4307 = vpack.c.bf16 %v4306, %v4306
        %v4308 = vld [vmem:[#allocation2 + $0x4c0] sm:$0xf]
        %v4309 = vld [vmem:[#allocation2 + $0x4c4] sm:$0xf]
        %v4310 = vld [vmem:[#allocation2 + $0x4c8] sm:$0xf]
        %v4311 = vld [vmem:[#allocation2 + $0x4cc] sm:$0xf]
        %v4312 = vld [vmem:[#allocation2 + $0x4d0] sm:$0xf]
        %v4313 = vld [vmem:[#allocation2 + $0x4d4] sm:$0xf]
        %v4314 = vld [vmem:[#allocation2 + $0x4d8] sm:$0xf]
        %v4315 = vld [vmem:[#allocation2 + $0x4dc] sm:$0xf]
        %v4316 = vld [vmem:[#allocation2 + $0x4e0] sm:$0xf]
        %v4317 = vld [vmem:[#allocation2 + $0x4e4] sm:$0xf]
        %v4318 = vld [vmem:[#allocation2 + $0x4e8] sm:$0xf]
        %v4319 = vld [vmem:[#allocation2 + $0x4ec] sm:$0xf]
        %v4320 = vld [vmem:[#allocation2 + $0x4f0] sm:$0xf]
        %v4321 = vld [vmem:[#allocation2 + $0x4f4] sm:$0xf]
        %v4322 = vld [vmem:[#allocation2 + $0x4f8] sm:$0xf]
        %v4323 = vld [vmem:[#allocation2 + $0x4fc] sm:$0xf]
        %v4340 = vunpack.c.l.b16 %v4308
        %v4341 = vunpack.c.l.b16 %v4309
        %v4342 = vunpack.c.l.b16 %v4310
        %v4343 = vunpack.c.l.b16 %v4311
        %v4344 = vunpack.c.l.b16 %v4312
        %v4345 = vunpack.c.l.b16 %v4313
        %v4346 = vunpack.c.l.b16 %v4314
        %v4347 = vunpack.c.l.b16 %v4315
        %v4348 = vunpack.c.l.b16 %v4316
        %v4349 = vunpack.c.l.b16 %v4317
        %v4350 = vunpack.c.l.b16 %v4318
        %v4351 = vunpack.c.l.b16 %v4319
        %v4352 = vunpack.c.l.b16 %v4320
        %v4353 = vunpack.c.l.b16 %v4321
        %v4354 = vunpack.c.l.b16 %v4322
        %v4355 = vunpack.c.l.b16 %v4323
        %v4356 = vpack.c.b16 %v4341, %v4340
        %v4357 = vpack.c.b16 %v4343, %v4342
        %v4358 = vpack.c.b16 %v4345, %v4344
        %v4359 = vpack.c.b16 %v4347, %v4346
        %v4360 = vpack.c.b16 %v4349, %v4348
        %v4361 = vpack.c.b16 %v4351, %v4350
        %v4362 = vpack.c.b16 %v4353, %v4352
        %v4363 = vpack.c.b16 %v4355, %v4354
        %4372 = vmatprep.subr.bf16.mxu0 0
        %4373 = vmatpush1.bf16.msra.mxu0 %v4356
        %4374 = vmatprep.subr.bf16.mxu0 0
        %4375 = vmatpush1.bf16.msra.mxu0 %v4357
        %4376 = vmatprep.subr.bf16.mxu0 0
        %4377 = vmatpush1.bf16.msra.mxu0 %v4358
        %4378 = vmatprep.subr.bf16.mxu0 0
        %4379 = vmatpush1.bf16.msra.mxu0 %v4359
        %4380 = vmatprep.subr.bf16.mxu0 0
        %4381 = vmatpush1.bf16.msra.mxu0 %v4360
        %4382 = vmatprep.subr.bf16.mxu0 0
        %4383 = vmatpush1.bf16.msra.mxu0 %v4361
        %4384 = vmatprep.subr.bf16.mxu0 0
        %4385 = vmatpush1.bf16.msra.mxu0 %v4362
        %4386 = vmatprep.subr.bf16.mxu0 0
        %4387 = vmatpush1.bf16.msra.mxu0 %v4363
        %4388 = vmatprep.subr.bf16.mxu0 0
        %4389 = vmatpush1.bf16.msra.mxu0 0
        %4390 = vmatprep.subr.bf16.mxu0 0
        %4391 = vmatpush1.bf16.msra.mxu0 0
        %4392 = vmatprep.subr.bf16.mxu0 0
        %4393 = vmatpush1.bf16.msra.mxu0 0
        %4394 = vmatprep.subr.bf16.mxu0 0
        %4395 = vmatpush1.bf16.msra.mxu0 0
        %4396 = vmatprep.subr.bf16.mxu0 0
        %4397 = vmatpush1.bf16.msra.mxu0 0
        %4398 = vmatprep.subr.bf16.mxu0 0
        %4399 = vmatpush1.bf16.msra.mxu0 0
        %4400 = vmatprep.subr.bf16.mxu0 0
        %4401 = vmatpush1.bf16.msra.mxu0 0
        %4402 = vmatprep.subr.bf16.mxu0 0
        %4403 = vmatpush1.bf16.msra.mxu0 0
        %4404 = vmatprep.mubr.bf16.mxu0 0
        %4405 = vmatmul.mubr.bf16.gmra.mrb[0].mxu0 %v4307
        %v4406 = vpop.f32.mrb[0].mxu0
        %v4407 = vadd.f32 0.0, %v4406
        %v4408 = vpop.f32.mrb[0].mxu0
        %v4409 = vpop.f32.mrb[0].mxu0
        %v4410 = vpop.f32.mrb[0].mxu0
        %4411 = vdwg.mxu0
        %v4412 = vadd.f32 %v4164, %v4407
        %v4413 = vld [vmem:[%s2 + $0x13] sm:$0x1]
        %v4414 = vlaneseq
        %v4415 = vshrl.u32 %v4414, 7
        %v4416 = vsub.s32 0, %v4415
        %v4417 = vrot.slane %v4413, %v4416
        %v4418 = vadd.f32 %v4412, %v4417
        %v4419 = vld [vmem:[%s2 + $0x20] sm:$0x1]
        %v4420 = vld [vmem:[%s2 + $0x21] sm:$0x1]
        %4421 = vadd.xlane.f32.xlu0 %v4418
        %v4422 = vpop.xlane.xlu0 %4421
        %v4423 = vmul.f32 %v4422, 0.03125
        %v4424 = vsub.f32 %v4418, %v4423
        %v4425 = vsel %vm201, %v4424, 0.0
        %v4426 = vmul.f32 %v4425, %v4425
        %4427 = vadd.xlane.f32.xlu0 %v4426
        %v4428 = vpop.xlane.xlu0 %4427
        %v4429 = vmul.f32 %v4428, 0.032258064
        %v4430 = vlaneseq
        %v4431 = vshrl.u32 %v4430, 7
        %v4432 = vsub.s32 0, %v4431
        %v4433 = vrot.slane %v4419, %v4432
        %v4434 = vmul.f32 %v4433, %v4425
        %v4435 = vrsqrt.pop %v4429
        %v4436 = vmul.f32 %v4429, %v4435
        %vm4437 = vcmp.eq.f32.partialorder %v4429, inf
        %v4438 = vsel %vm4437, %v4429, %v4436
        %vm4439 = vcmp.eq.f32.partialorder %v4429, 0.0
        %v4440 = vand.u32 %v4429, 2147483648
        %v4441 = vsel %vm4439, %v4440, %v4438
        %v4442 = vadd.f32 %v4441, 1e-06
        %v4443 = vrcp.pop %v4442
        %v4444 = vmul.f32 %v4434, %v4443
        %v4445 = vlaneseq
        %v4446 = vshrl.u32 %v4445, 7
        %v4447 = vsub.s32 0, %v4446
        %v4448 = vrot.slane %v4420, %v4447
        %v4449 = vadd.f32 %v4444, %v4448
        %4450 = vst [vmem:[%s178] sm:$0xff] %v4449
        %s4451 = sand.u32 %s94, 1
        %s4452 = scalar_lea.sflag [#allocation4], %s4451
        %s4453 = sand.u32 %s94, 1
        %s4454 = smul.addr %s4453, 8
        %s4455 = scalar_lea.vmem [#allocation5], %s4454
        // Predicated region
        $region37: #{decoder_pallas.1} parent=31 // pred_check
          %p4456 = pneg %p104
        $region38: #{decoder_pallas.1} parent=31 // pred_check_branch
          %4458 = sbr.rel (%p4456) target = $region40
        $region39: #{decoder_pallas.1} parent=31 // pred_region
          %s4460 = ssub.s32 128, 128
          %4461 = vsyncadd %s4452, %s4460
          %s4462 = smul.addr %s18, 128
          %s4463 = scalar_lea.hbm %s3, %s4462
          %s4465 = sshll.u32 %s4455, 4
          %s4466 = int_to_ptr.vmem [resolvable:$true] %s4465
          %4468 = dma.vmem_to_hbm [thread:$0]  %s4466, 128, %s4463, %s4452
        $region40: #{decoder_pallas.1} parent=31 // pred_fallthru
          _
      $region32: #{decoder_pallas.1} parent=5 // pred_fallthru
        _
      %p4469 = scmp.le.s32.totalorder 2, %s13
      // Predicated region
      $region41: #{decoder_pallas.1} parent=5 // pred_check
        %p4470 = pneg %p4469
      $region42: #{decoder_pallas.1} parent=5 // pred_check_branch
        %4472 = sbr.rel (%p4470) target = $region44
      $region43: #{decoder_pallas.1} parent=5 // pred_region
        %s4473 = ssub.s32 %s13, 2
        // Predicated region
        $region45: #{decoder_pallas.1} parent=43 // pred_check
          %p4474 = pneg %p110
        $region46: #{decoder_pallas.1} parent=43 // pred_check_branch
          %4476 = sbr.rel (%p4474) target = $region48
        $region47: #{decoder_pallas.1} parent=43 // pred_region
          %s4477 = sand.u32 %s95, 1
          %s4478 = scalar_lea.sflag [#allocation4], %s4477
          %s4479 = sand.u32 %s95, 1
          %s4480 = smul.addr %s4479, 8
          %s4481 = scalar_lea.vmem [#allocation5], %s4480
          %4482 = dma.done %s4478, 128
        $region48: #{decoder_pallas.1} parent=43 // pred_fallthru
          _
      $region44: #{decoder_pallas.1} parent=5 // pred_fallthru
        _
    $region6: #{decoder_pallas.1} parent=1 // loop_footer
      %s17 = sadd.s32 1, %s13
    $region7: #{decoder_pallas.1} parent=1 // loop_footer_branch
      %12 = sbr.rel target = $region3
    $region8: #{decoder_pallas.1} parent=1 // loop_exit
      _
    %4483 = vsyncpa [#allocation3], 1
    %s4484 = scalar_lea.sflag [#allocation3], 1
    %4485 = vsyncpa %s4484, 1
    %4486 = vsyncpa [#allocation4], 1
    %s4487 = scalar_lea.sflag [#allocation4], 1
    %4488 = vsyncpa %s4487, 1

</llo_original>
